<compile_context>
chip_gen: v5e
topology: v5e:2x2
jax: 0.10.0
libtpu: 0.0.40
codegen_flags: <defaults>
</compile_context>

<pallas_src>
import functools

import jax
import jax.numpy as jnp
from jax import lax
from jax.experimental import pallas as pl
from jax.experimental.pallas import tpu as pltpu


def _direct_blocks_kernel(xp_ref, w01_ref, w13_ref, wse1_ref, wse2_ref,
                          out_ref, pad2_ref, col_ref):
    # xp_ref  : (Nb, H+2, W+2, Cp)  spatially + channel padded input block
    # out_ref : (Nb, H,   W,   Cp)  packed output (real data in lanes [0, C))
    # pad2_ref: VMEM bf16 (Nb, H+2, W+2, Cp)  staging for relu(conv0/2) result
    # col_ref : VMEM bf16 (Nb*H*W, 9*Cp)      shared im2col slab (both convs)
    Nb, Hp2, Wp2, Cp = xp_ref.shape
    H, W = Hp2 - 2, Wp2 - 2
    M = Nb * H * W
    f32 = jnp.float32
    bf16 = jnp.bfloat16

    def fill_cols(src_ref):
        # im2col: nine shifted (M, Cp) patches -> contiguous 128-lane-aligned
        # column blocks of the shared bf16 slab (unmasked full-lane stores).
        k = 0
        for dy in range(3):
            for dx in range(3):
                col_ref[:, k * Cp:(k + 1) * Cp] = (
                    src_ref[:, dy:dy + H, dx:dx + W, :]
                    .reshape(M, Cp).astype(bf16))
                k += 1

    # ---- conv0 / conv2 on x (branches fused along Cout), then ReLU ---------
    fill_cols(xp_ref)
    y1 = jnp.dot(col_ref[...], w01_ref[...], preferred_element_type=f32)
    y1 = jnp.maximum(y1, 0.0)

    # ---- stage ReLU output (bf16) into padded scratch; zero ONLY the border
    # (per-step zeroing is megacore-safe; do NOT gate it behind program_id==0)
    # TODO(synk): on v5e the staging roundtrip + sublane-offset interior store
    # can bind the single vst slot; building conv1/3 columns directly from y1
    # with border masks would remove it.
    pad2_ref[:, 0:1, :, :] = jnp.zeros((Nb, 1, Wp2, Cp), bf16)
    pad2_ref[:, H + 1:H + 2, :, :] = jnp.zeros((Nb, 1, Wp2, Cp), bf16)
    pad2_ref[:, :, 0:1, :] = jnp.zeros((Nb, Hp2, 1, Cp), bf16)
    pad2_ref[:, :, W + 1:W + 2, :] = jnp.zeros((Nb, Hp2, 1, Cp), bf16)
    pad2_ref[:, 1:H + 1, 1:W + 1, :] = y1.reshape(Nb, H, W, Cp).astype(bf16)

    # ---- conv1 / conv3 (block-diagonal weight keeps branches independent) --
    fill_cols(pad2_ref)
    y2 = jnp.dot(col_ref[...], w13_ref[...], preferred_element_type=f32)

    # ---- squeeze-and-excite, both branches fused (block-diag fc weights) ---
    y3 = y2.reshape(Nb, H * W, Cp)
    pooled = jnp.mean(y3, axis=1)                                 # (Nb, Cp)
    h = jnp.dot(pooled.astype(bf16), wse1_ref[...], preferred_element_type=f32)
    h = jnp.maximum(h, 0.0)
    z = jnp.dot(h.astype(bf16), wse2_ref[...], preferred_element_type=f32)
    s = 1.0 / (1.0 + jnp.exp(-z))             # sigmoid via EUP exp + recip
    scaled = (y3 * s[:, None, :]).reshape(M, Cp)   # [ a_se | 0 | b_se | 0 ]

    # ---- a*x + b ------------------------------------------------------------
    # Re-read x (center window) only now, so nothing from the first im2col
    # fill stays live across conv2/SE.  Branch b sits at lane offset Cp/2, so
    # a half-width XLU roll (direction-agnostic) drops b_se onto lanes [0, C).
    # Lanes >= C of `out` are junk; the wrapper slices [..., :C].
    x2d = xp_ref[:, 1:H + 1, 1:W + 1, :].reshape(M, Cp).astype(f32)
    b_sh = pltpu.roll(scaled, Cp // 2, axis=1)
    out = scaled * x2d + b_sh
    out_ref[...] = out.reshape(Nb, H, W, Cp).astype(out_ref.dtype)


def direct_blocks(x, w0, w1, w2, w3, wa1, wa2, wb1, wb2):
    N, H, W, C = x.shape
    HID = wa1.shape[1]
    f32, bf16 = jnp.float32, jnp.bfloat16

    # packed lane-dense channel axis: branch a at lane 0, branch b at Cp//2
    Cp = max(128, ((2 * C + 127) // 128) * 128)
    BOFF = Cp // 2
    assert 2 * C <= Cp and C <= BOFF and HID <= BOFF

    # ---- weight packing (bf16 operands; f32 accumulation in-kernel) --------
    def pack_conv(wa_, wb_, in_a, in_b):
        w = jnp.zeros((3, 3, Cp, Cp), f32)
        w = w.at[:, :, in_a:in_a + C, 0:C].set(wa_.astype(f32))
        w = w.at[:, :, in_b:in_b + C, BOFF:BOFF + C].set(wb_.astype(f32))
        return w.reshape(9 * Cp, Cp).astype(bf16)   # matches im2col ordering

    w01 = pack_conv(w0, w2, 0, 0)       # both branches read x from lanes [0,C)
    w13 = pack_conv(w1, w3, 0, BOFF)    # block-diagonal: a -> a, b -> b

    wse1 = jnp.zeros((Cp, Cp), f32)
    wse1 = wse1.at[0:C, 0:HID].set(wa1.astype(f32))
    wse1 = wse1.at[BOFF:BOFF + C, BOFF:BOFF + HID].set(wb1.astype(f32))
    wse2 = jnp.zeros((Cp, Cp), f32)
    wse2 = wse2.at[0:HID, 0:C].set(wa2.astype(f32))
    wse2 = wse2.at[BOFF:BOFF + HID, BOFF:BOFF + C].set(wb2.astype(f32))
    wse1, wse2 = wse1.astype(bf16), wse2.astype(bf16)

    # spatially + channel padded input (border zeros arrive via DMA)
    # TODO(synk): on v5e, DMA the raw C-channel input and widen in-kernel to
    # cut the input HBM read ~Cp/C x (kept lane-dense here for simplicity).
    xp = jnp.pad(x, ((0, 0), (1, 1), (1, 1), (0, Cp - C)))

    # ---- batch blocking: amortize grid overhead, raise matmul M ------------
    hw = H * W
    in_b = xp.dtype.itemsize
    out_b = x.dtype.itemsize
    per_img = (hw * 9 * Cp * 2                        # bf16 im2col slab
               + (H + 2) * (W + 2) * Cp * 2           # bf16 staging scratch
               + 2 * (H + 2) * (W + 2) * Cp * in_b    # double-buffered input
               + 2 * hw * Cp * out_b                  # double-buffered output
               + 6 * hw * Cp * 4)                     # f32 intermediates
    budget = 40 << 20                 # stay well under v7x's 64 MiB per core
    nb = max(1, min(N, budget // per_img, max(1, 2048 // hw)))
    while nb > 1 and N % nb:
        nb -= 1
    # TODO(synk): for very large H*W even nb=1 can overflow v7x VMEM; row-tile
    # the im2col slab / conv matmuls along M in that regime.

    weight_bytes = (2 * 9 * Cp * Cp + 2 * Cp * Cp) * 2          # bf16 weights
    vmem_limit = int(min(max(nb * per_img + 2 * weight_bytes + (16 << 20),
                             32 << 20),
                         100 << 20))

    out_padded = pl.pallas_call(
        _direct_blocks_kernel,
        out_shape=jax.ShapeDtypeStruct((N, H, W, Cp), x.dtype),
        grid=(N // nb,),
        in_specs=[
            pl.BlockSpec((nb, H + 2, W + 2, Cp), lambda n: (n, 0, 0, 0)),
            # constant-index weights: fetched once, never re-DMA'd across grid
            # TODO(synk): pipeline_mode=pl.Buffered(1) would also drop their
            # second pipeline buffer (~0.6 MiB); kept conservative here.
            pl.BlockSpec((9 * Cp, Cp), lambda n: (0, 0)),
            pl.BlockSpec((9 * Cp, Cp), lambda n: (0, 0)),
            pl.BlockSpec((Cp, Cp), lambda n: (0, 0)),
            pl.BlockSpec((Cp, Cp), lambda n: (0, 0)),
        ],
        out_specs=pl.BlockSpec((nb, H, W, Cp), lambda n: (n, 0, 0, 0)),
        scratch_shapes=[
            pltpu.VMEM((nb, H + 2, W + 2, Cp), jnp.bfloat16),  # relu staging
            pltpu.VMEM((nb * H * W, 9 * Cp), jnp.bfloat16),    # im2col slab
        ],
        compiler_params=pltpu.CompilerParams(
            dimension_semantics=("parallel",),        # v7x: both TCs get work
            vmem_limit_bytes=vmem_limit),
    )(xp, w01, w13, wse1, wse2)

    return out_padded[..., :C]


# ----- pure-JAX reference for correctness checking -----
def _conv3x3_ref(x, w):
    return lax.conv_general_dilated(
        x, w, window_strides=(1, 1), padding='SAME',
        dimension_numbers=('NHWC', 'HWIO', 'NHWC'))


def _se_ref(y, w1, w2):
    pooled = jnp.mean(y, axis=(1, 2))
    h = jnp.maximum(pooled @ w1, 0.0)
    s = jax.nn.sigmoid(h @ w2)
    return y * s[:, None, None, :]


def _direct_blocks_ref(x, w0, w1, w2, w3, wa1, wa2, wb1, wb2):
    a = _conv3x3_ref(x, w0)
    a = jnp.maximum(a, 0.0)
    a = _conv3x3_ref(a, w1)
    a = _se_ref(a, wa1, wa2)
    b = _conv3x3_ref(x, w2)
    b = jnp.maximum(b, 0.0)
    b = _conv3x3_ref(b, w3)
    b = _se_ref(b, wb1, wb2)
    return a * x + b


if __name__ == "__main__":
    # shapes consistent with the module: dim=32, SE reduction=16 -> hidden=2
    N, H, W, C = 2, 8, 8, 32
    HID = max(1, C // 16)

    key = jax.random.PRNGKey(0)
    ks = jax.random.split(key, 9)
    x = jax.random.normal(ks[0], (N, H, W, C), jnp.float32)
    # conv weights in HWIO, small deterministic init
    w0 = jax.random.normal(ks[1], (3, 3, C, C), jnp.float32) * 0.05
    w1 = jax.random.normal(ks[2], (3, 3, C, C), jnp.float32) * 0.05
    w2 = jax.random.normal(ks[3], (3, 3, C, C), jnp.float32) * 0.05
    w3 = jax.random.normal(ks[4], (3, 3, C, C), jnp.float32) * 0.05
    # SE fc weights stored as (in, out)
    wa1 = jax.random.normal(ks[5], (C, HID), jnp.float32) * 0.2
    wa2 = jax.random.normal(ks[6], (HID, C), jnp.float32) * 0.2
    wb1 = jax.random.normal(ks[7], (C, HID), jnp.float32) * 0.2
    wb2 = jax.random.normal(ks[8], (HID, C), jnp.float32) * 0.2

    out = direct_blocks(x, w0, w1, w2, w3, wa1, wa2, wb1, wb2)
    out = jax.block_until_ready(out)

    ref = _direct_blocks_ref(x, w0, w1, w2, w3, wa1, wa2, wb1, wb2)
    ref = jax.block_until_ready(ref)

    # bf16 matmul operands (f32 accumulation) -> looser tolerance than pure f32
    if not jnp.allclose(out, ref, atol=3e-2, rtol=3e-2):
        max_err = float(jnp.max(jnp.abs(out - ref)))
        raise AssertionError(f"mismatch vs reference, max abs err = {max_err}")

    print("KERNEL_OK")
</pallas_src>

<mosaic_0001>
module attributes {stable_mosaic.version = 11 : i64} {
  func.func @_direct_blocks_kernel(%arg0: i32, %arg1: memref<2x10x10x128xf32, #tpu.memory_space<vmem>>, %arg2: memref<1152x128xbf16, #tpu.memory_space<vmem>>, %arg3: memref<1152x128xbf16, #tpu.memory_space<vmem>>, %arg4: memref<128x128xbf16, #tpu.memory_space<vmem>>, %arg5: memref<128x128xbf16, #tpu.memory_space<vmem>>, %arg6: memref<2x8x8x128xf32, #tpu.memory_space<vmem>>, %arg7: memref<2x10x10x128xbf16, #tpu.memory_space<vmem>>, %arg8: memref<128x1152xbf16, #tpu.memory_space<vmem>>) attributes {dimension_semantics = [#tpu.dimension_semantics<parallel>], iteration_bounds = array<i64: 1>, scalar_prefetch = 0 : i64, scratch_operands = 2 : i64, tpu.core_type = #tpu.core_type<tc>, window_params = [{transform_indices = @transform_0, window_bounds = array<i64: 2, 10, 10, 128>}, {pipeline_mode = #tpu.pipeline_mode<synchronous>, transform_indices = @transform_1, window_bounds = array<i64: 1152, 128>}, {pipeline_mode = #tpu.pipeline_mode<synchronous>, transform_indices = @transform_2, window_bounds = array<i64: 1152, 128>}, {pipeline_mode = #tpu.pipeline_mode<synchronous>, transform_indices = @transform_3, window_bounds = array<i64: 128, 128>}, {pipeline_mode = #tpu.pipeline_mode<synchronous>, transform_indices = @transform_4, window_bounds = array<i64: 128, 128>}, {transform_indices = @transform_5, window_bounds = array<i64: 2, 8, 8, 128>}]} {
    %c0 = arith.constant 0 : index
    %c0_0 = arith.constant 0 : index
    %c0_1 = arith.constant 0 : index
    %c0_2 = arith.constant 0 : index
    %0 = vector.load %arg1[%c0, %c0_0, %c0_1, %c0_2] : memref<2x10x10x128xf32, #tpu.memory_space<vmem>>, vector<2x8x8x128xf32>
    %1 = vector.shape_cast %0 : vector<2x8x8x128xf32> to vector<128x128xf32>
    %2 = arith.truncf %1 : vector<128x128xf32> to vector<128x128xbf16>
    %c0_3 = arith.constant 0 : index
    %c0_4 = arith.constant 0 : index
    %3 = vector.load %arg8[%c0_3, %c0_4] : memref<128x1152xbf16, #tpu.memory_space<vmem>>, vector<128x128xbf16>
    tpu.vector_store %arg8[%c0_3, %c0_4], %2 {strides = array<i32>} : memref<128x1152xbf16, #tpu.memory_space<vmem>>, vector<128x128xbf16>,
    %c0_5 = arith.constant 0 : index
    %c0_6 = arith.constant 0 : index
    %c1 = arith.constant 1 : index
    %c0_7 = arith.constant 0 : index
    %4 = vector.load %arg1[%c0_5, %c0_6, %c1, %c0_7] : memref<2x10x10x128xf32, #tpu.memory_space<vmem>>, vector<2x8x8x128xf32>
    %5 = vector.shape_cast %4 : vector<2x8x8x128xf32> to vector<128x128xf32>
    %6 = arith.truncf %5 : vector<128x128xf32> to vector<128x128xbf16>
    %c0_8 = arith.constant 0 : index
    %c128 = arith.constant 128 : index
    %7 = vector.load %arg8[%c0_8, %c128] : memref<128x1152xbf16, #tpu.memory_space<vmem>>, vector<128x128xbf16>
    tpu.vector_store %arg8[%c0_8, %c128], %6 {strides = array<i32>} : memref<128x1152xbf16, #tpu.memory_space<vmem>>, vector<128x128xbf16>,
    %c0_9 = arith.constant 0 : index
    %c0_10 = arith.constant 0 : index
    %c2 = arith.constant 2 : index
    %c0_11 = arith.constant 0 : index
    %8 = vector.load %arg1[%c0_9, %c0_10, %c2, %c0_11] : memref<2x10x10x128xf32, #tpu.memory_space<vmem>>, vector<2x8x8x128xf32>
    %9 = vector.shape_cast %8 : vector<2x8x8x128xf32> to vector<128x128xf32>
    %10 = arith.truncf %9 : vector<128x128xf32> to vector<128x128xbf16>
    %c0_12 = arith.constant 0 : index
    %c256 = arith.constant 256 : index
    %11 = vector.load %arg8[%c0_12, %c256] : memref<128x1152xbf16, #tpu.memory_space<vmem>>, vector<128x128xbf16>
    tpu.vector_store %arg8[%c0_12, %c256], %10 {strides = array<i32>} : memref<128x1152xbf16, #tpu.memory_space<vmem>>, vector<128x128xbf16>,
    %c0_13 = arith.constant 0 : index
    %c1_14 = arith.constant 1 : index
    %c0_15 = arith.constant 0 : index
    %c0_16 = arith.constant 0 : index
    %12 = vector.load %arg1[%c0_13, %c1_14, %c0_15, %c0_16] : memref<2x10x10x128xf32, #tpu.memory_space<vmem>>, vector<2x8x8x128xf32>
    %13 = vector.shape_cast %12 : vector<2x8x8x128xf32> to vector<128x128xf32>
    %14 = arith.truncf %13 : vector<128x128xf32> to vector<128x128xbf16>
    %c0_17 = arith.constant 0 : index
    %c384 = arith.constant 384 : index
    %15 = vector.load %arg8[%c0_17, %c384] : memref<128x1152xbf16, #tpu.memory_space<vmem>>, vector<128x128xbf16>
    tpu.vector_store %arg8[%c0_17, %c384], %14 {strides = array<i32>} : memref<128x1152xbf16, #tpu.memory_space<vmem>>, vector<128x128xbf16>,
    %c0_18 = arith.constant 0 : index
    %c1_19 = arith.constant 1 : index
    %c1_20 = arith.constant 1 : index
    %c0_21 = arith.constant 0 : index
    %16 = vector.load %arg1[%c0_18, %c1_19, %c1_20, %c0_21] : memref<2x10x10x128xf32, #tpu.memory_space<vmem>>, vector<2x8x8x128xf32>
    %17 = vector.shape_cast %16 : vector<2x8x8x128xf32> to vector<128x128xf32>
    %18 = arith.truncf %17 : vector<128x128xf32> to vector<128x128xbf16>
    %c0_22 = arith.constant 0 : index
    %c512 = arith.constant 512 : index
    %19 = vector.load %arg8[%c0_22, %c512] : memref<128x1152xbf16, #tpu.memory_space<vmem>>, vector<128x128xbf16>
    tpu.vector_store %arg8[%c0_22, %c512], %18 {strides = array<i32>} : memref<128x1152xbf16, #tpu.memory_space<vmem>>, vector<128x128xbf16>,
    %c0_23 = arith.constant 0 : index
    %c1_24 = arith.constant 1 : index
    %c2_25 = arith.constant 2 : index
    %c0_26 = arith.constant 0 : index
    %20 = vector.load %arg1[%c0_23, %c1_24, %c2_25, %c0_26] : memref<2x10x10x128xf32, #tpu.memory_space<vmem>>, vector<2x8x8x128xf32>
    %21 = vector.shape_cast %20 : vector<2x8x8x128xf32> to vector<128x128xf32>
    %22 = arith.truncf %21 : vector<128x128xf32> to vector<128x128xbf16>
    %c0_27 = arith.constant 0 : index
    %c640 = arith.constant 640 : index
    %23 = vector.load %arg8[%c0_27, %c640] : memref<128x1152xbf16, #tpu.memory_space<vmem>>, vector<128x128xbf16>
    tpu.vector_store %arg8[%c0_27, %c640], %22 {strides = array<i32>} : memref<128x1152xbf16, #tpu.memory_space<vmem>>, vector<128x128xbf16>,
    %c0_28 = arith.constant 0 : index
    %c2_29 = arith.constant 2 : index
    %c0_30 = arith.constant 0 : index
    %c0_31 = arith.constant 0 : index
    %24 = vector.load %arg1[%c0_28, %c2_29, %c0_30, %c0_31] : memref<2x10x10x128xf32, #tpu.memory_space<vmem>>, vector<2x8x8x128xf32>
    %25 = vector.shape_cast %24 : vector<2x8x8x128xf32> to vector<128x128xf32>
    %26 = arith.truncf %25 : vector<128x128xf32> to vector<128x128xbf16>
    %c0_32 = arith.constant 0 : index
    %c768 = arith.constant 768 : index
    %27 = vector.load %arg8[%c0_32, %c768] : memref<128x1152xbf16, #tpu.memory_space<vmem>>, vector<128x128xbf16>
    tpu.vector_store %arg8[%c0_32, %c768], %26 {strides = array<i32>} : memref<128x1152xbf16, #tpu.memory_space<vmem>>, vector<128x128xbf16>,
    %c0_33 = arith.constant 0 : index
    %c2_34 = arith.constant 2 : index
    %c1_35 = arith.constant 1 : index
    %c0_36 = arith.constant 0 : index
    %28 = vector.load %arg1[%c0_33, %c2_34, %c1_35, %c0_36] : memref<2x10x10x128xf32, #tpu.memory_space<vmem>>, vector<2x8x8x128xf32>
    %29 = vector.shape_cast %28 : vector<2x8x8x128xf32> to vector<128x128xf32>
    %30 = arith.truncf %29 : vector<128x128xf32> to vector<128x128xbf16>
    %c0_37 = arith.constant 0 : index
    %c896 = arith.constant 896 : index
    %31 = vector.load %arg8[%c0_37, %c896] : memref<128x1152xbf16, #tpu.memory_space<vmem>>, vector<128x128xbf16>
    tpu.vector_store %arg8[%c0_37, %c896], %30 {strides = array<i32>} : memref<128x1152xbf16, #tpu.memory_space<vmem>>, vector<128x128xbf16>,
    %c0_38 = arith.constant 0 : index
    %c2_39 = arith.constant 2 : index
    %c2_40 = arith.constant 2 : index
    %c0_41 = arith.constant 0 : index
    %32 = vector.load %arg1[%c0_38, %c2_39, %c2_40, %c0_41] : memref<2x10x10x128xf32, #tpu.memory_space<vmem>>, vector<2x8x8x128xf32>
    %33 = vector.shape_cast %32 : vector<2x8x8x128xf32> to vector<128x128xf32>
    %34 = arith.truncf %33 : vector<128x128xf32> to vector<128x128xbf16>
    %c0_42 = arith.constant 0 : index
    %c1024 = arith.constant 1024 : index
    %35 = vector.load %arg8[%c0_42, %c1024] : memref<128x1152xbf16, #tpu.memory_space<vmem>>, vector<128x128xbf16>
    tpu.vector_store %arg8[%c0_42, %c1024], %34 {strides = array<i32>} : memref<128x1152xbf16, #tpu.memory_space<vmem>>, vector<128x128xbf16>,
    %c0_43 = arith.constant 0 : index
    %c0_44 = arith.constant 0 : index
    %36 = vector.load %arg8[%c0_43, %c0_44] : memref<128x1152xbf16, #tpu.memory_space<vmem>>, vector<128x1152xbf16>
    %c0_45 = arith.constant 0 : index
    %c0_46 = arith.constant 0 : index
    %37 = vector.load %arg2[%c0_45, %c0_46] : memref<1152x128xbf16, #tpu.memory_space<vmem>>, vector<1152x128xbf16>
    %cst = arith.constant dense<0.000000e+00> : vector<128x128xf32>
    %38 = tpu.matmul %36, %37, %cst {dimension_numbers = #tpu.dot_dimension_numbers<[1], [0], [0], [1], [0, 0, 1, 1], [], []>} : vector<128x1152xbf16>, vector<1152x128xbf16>, vector<128x128xf32> -> vector<128x128xf32>
    %cst_47 = arith.constant 0.000000e+00 : f32
    %39 = vector.broadcast %cst_47 : f32 to vector<128x128xf32>
    %40 = arith.maximumf %38, %39 : vector<128x128xf32>
    %cst_48 = arith.constant 0.000000e+00 : bf16
    %41 = vector.broadcast %cst_48 : bf16 to vector<2x1x10x128xbf16>
    %c0_49 = arith.constant 0 : index
    %c0_50 = arith.constant 0 : index
    %c0_51 = arith.constant 0 : index
    %c0_52 = arith.constant 0 : index
    %42 = vector.load %arg7[%c0_49, %c0_50, %c0_51, %c0_52] : memref<2x10x10x128xbf16, #tpu.memory_space<vmem>>, vector<2x1x10x128xbf16>
    tpu.vector_store %arg7[%c0_49, %c0_50, %c0_51, %c0_52], %41 {strides = array<i32>} : memref<2x10x10x128xbf16, #tpu.memory_space<vmem>>, vector<2x1x10x128xbf16>,
    %cst_53 = arith.constant 0.000000e+00 : bf16
    %43 = vector.broadcast %cst_53 : bf16 to vector<2x1x10x128xbf16>
    %c0_54 = arith.constant 0 : index
    %c9 = arith.constant 9 : index
    %c0_55 = arith.constant 0 : index
    %c0_56 = arith.constant 0 : index
    %44 = vector.load %arg7[%c0_54, %c9, %c0_55, %c0_56] : memref<2x10x10x128xbf16, #tpu.memory_space<vmem>>, vector<2x1x10x128xbf16>
    tpu.vector_store %arg7[%c0_54, %c9, %c0_55, %c0_56], %43 {strides = array<i32>} : memref<2x10x10x128xbf16, #tpu.memory_space<vmem>>, vector<2x1x10x128xbf16>,
    %cst_57 = arith.constant 0.000000e+00 : bf16
    %45 = vector.broadcast %cst_57 : bf16 to vector<2x10x1x128xbf16>
    %c0_58 = arith.constant 0 : index
    %c0_59 = arith.constant 0 : index
    %c0_60 = arith.constant 0 : index
    %c0_61 = arith.constant 0 : index
    %46 = vector.load %arg7[%c0_58, %c0_59, %c0_60, %c0_61] : memref<2x10x10x128xbf16, #tpu.memory_space<vmem>>, vector<2x10x1x128xbf16>
    tpu.vector_store %arg7[%c0_58, %c0_59, %c0_60, %c0_61], %45 {strides = array<i32>} : memref<2x10x10x128xbf16, #tpu.memory_space<vmem>>, vector<2x10x1x128xbf16>,
    %cst_62 = arith.constant 0.000000e+00 : bf16
    %47 = vector.broadcast %cst_62 : bf16 to vector<2x10x1x128xbf16>
    %c0_63 = arith.constant 0 : index
    %c0_64 = arith.constant 0 : index
    %c9_65 = arith.constant 9 : index
    %c0_66 = arith.constant 0 : index
    %48 = vector.load %arg7[%c0_63, %c0_64, %c9_65, %c0_66] : memref<2x10x10x128xbf16, #tpu.memory_space<vmem>>, vector<2x10x1x128xbf16>
    tpu.vector_store %arg7[%c0_63, %c0_64, %c9_65, %c0_66], %47 {strides = array<i32>} : memref<2x10x10x128xbf16, #tpu.memory_space<vmem>>, vector<2x10x1x128xbf16>,
    %49 = vector.shape_cast %40 : vector<128x128xf32> to vector<2x8x8x128xf32>
    %50 = arith.truncf %49 : vector<2x8x8x128xf32> to vector<2x8x8x128xbf16>
    %c0_67 = arith.constant 0 : index
    %c1_68 = arith.constant 1 : index
    %c1_69 = arith.constant 1 : index
    %c0_70 = arith.constant 0 : index
    %51 = vector.load %arg7[%c0_67, %c1_68, %c1_69, %c0_70] : memref<2x10x10x128xbf16, #tpu.memory_space<vmem>>, vector<2x8x8x128xbf16>
    tpu.vector_store %arg7[%c0_67, %c1_68, %c1_69, %c0_70], %50 {strides = array<i32>} : memref<2x10x10x128xbf16, #tpu.memory_space<vmem>>, vector<2x8x8x128xbf16>,
    %c0_71 = arith.constant 0 : index
    %c0_72 = arith.constant 0 : index
    %c0_73 = arith.constant 0 : index
    %c0_74 = arith.constant 0 : index
    %52 = vector.load %arg7[%c0_71, %c0_72, %c0_73, %c0_74] : memref<2x10x10x128xbf16, #tpu.memory_space<vmem>>, vector<2x8x8x128xbf16>
    %53 = vector.shape_cast %52 : vector<2x8x8x128xbf16> to vector<128x128xbf16>
    %c0_75 = arith.constant 0 : index
    %c0_76 = arith.constant 0 : index
    %54 = vector.load %arg8[%c0_75, %c0_76] : memref<128x1152xbf16, #tpu.memory_space<vmem>>, vector<128x128xbf16>
    tpu.vector_store %arg8[%c0_75, %c0_76], %53 {strides = array<i32>} : memref<128x1152xbf16, #tpu.memory_space<vmem>>, vector<128x128xbf16>,
    %c0_77 = arith.constant 0 : index
    %c0_78 = arith.constant 0 : index
    %c1_79 = arith.constant 1 : index
    %c0_80 = arith.constant 0 : index
    %55 = vector.load %arg7[%c0_77, %c0_78, %c1_79, %c0_80] : memref<2x10x10x128xbf16, #tpu.memory_space<vmem>>, vector<2x8x8x128xbf16>
    %56 = vector.shape_cast %55 : vector<2x8x8x128xbf16> to vector<128x128xbf16>
    %c0_81 = arith.constant 0 : index
    %c128_82 = arith.constant 128 : index
    %57 = vector.load %arg8[%c0_81, %c128_82] : memref<128x1152xbf16, #tpu.memory_space<vmem>>, vector<128x128xbf16>
    tpu.vector_store %arg8[%c0_81, %c128_82], %56 {strides = array<i32>} : memref<128x1152xbf16, #tpu.memory_space<vmem>>, vector<128x128xbf16>,
    %c0_83 = arith.constant 0 : index
    %c0_84 = arith.constant 0 : index
    %c2_85 = arith.constant 2 : index
    %c0_86 = arith.constant 0 : index
    %58 = vector.load %arg7[%c0_83, %c0_84, %c2_85, %c0_86] : memref<2x10x10x128xbf16, #tpu.memory_space<vmem>>, vector<2x8x8x128xbf16>
    %59 = vector.shape_cast %58 : vector<2x8x8x128xbf16> to vector<128x128xbf16>
    %c0_87 = arith.constant 0 : index
    %c256_88 = arith.constant 256 : index
    %60 = vector.load %arg8[%c0_87, %c256_88] : memref<128x1152xbf16, #tpu.memory_space<vmem>>, vector<128x128xbf16>
    tpu.vector_store %arg8[%c0_87, %c256_88], %59 {strides = array<i32>} : memref<128x1152xbf16, #tpu.memory_space<vmem>>, vector<128x128xbf16>,
    %c0_89 = arith.constant 0 : index
    %c1_90 = arith.constant 1 : index
    %c0_91 = arith.constant 0 : index
    %c0_92 = arith.constant 0 : index
    %61 = vector.load %arg7[%c0_89, %c1_90, %c0_91, %c0_92] : memref<2x10x10x128xbf16, #tpu.memory_space<vmem>>, vector<2x8x8x128xbf16>
    %62 = vector.shape_cast %61 : vector<2x8x8x128xbf16> to vector<128x128xbf16>
    %c0_93 = arith.constant 0 : index
    %c384_94 = arith.constant 384 : index
    %63 = vector.load %arg8[%c0_93, %c384_94] : memref<128x1152xbf16, #tpu.memory_space<vmem>>, vector<128x128xbf16>
    tpu.vector_store %arg8[%c0_93, %c384_94], %62 {strides = array<i32>} : memref<128x1152xbf16, #tpu.memory_space<vmem>>, vector<128x128xbf16>,
    %c0_95 = arith.constant 0 : index
    %c1_96 = arith.constant 1 : index
    %c1_97 = arith.constant 1 : index
    %c0_98 = arith.constant 0 : index
    %64 = vector.load %arg7[%c0_95, %c1_96, %c1_97, %c0_98] : memref<2x10x10x128xbf16, #tpu.memory_space<vmem>>, vector<2x8x8x128xbf16>
    %65 = vector.shape_cast %64 : vector<2x8x8x128xbf16> to vector<128x128xbf16>
    %c0_99 = arith.constant 0 : index
    %c512_100 = arith.constant 512 : index
    %66 = vector.load %arg8[%c0_99, %c512_100] : memref<128x1152xbf16, #tpu.memory_space<vmem>>, vector<128x128xbf16>
    tpu.vector_store %arg8[%c0_99, %c512_100], %65 {strides = array<i32>} : memref<128x1152xbf16, #tpu.memory_space<vmem>>, vector<128x128xbf16>,
    %c0_101 = arith.constant 0 : index
    %c1_102 = arith.constant 1 : index
    %c2_103 = arith.constant 2 : index
    %c0_104 = arith.constant 0 : index
    %67 = vector.load %arg7[%c0_101, %c1_102, %c2_103, %c0_104] : memref<2x10x10x128xbf16, #tpu.memory_space<vmem>>, vector<2x8x8x128xbf16>
    %68 = vector.shape_cast %67 : vector<2x8x8x128xbf16> to vector<128x128xbf16>
    %c0_105 = arith.constant 0 : index
    %c640_106 = arith.constant 640 : index
    %69 = vector.load %arg8[%c0_105, %c640_106] : memref<128x1152xbf16, #tpu.memory_space<vmem>>, vector<128x128xbf16>
    tpu.vector_store %arg8[%c0_105, %c640_106], %68 {strides = array<i32>} : memref<128x1152xbf16, #tpu.memory_space<vmem>>, vector<128x128xbf16>,
    %c0_107 = arith.constant 0 : index
    %c2_108 = arith.constant 2 : index
    %c0_109 = arith.constant 0 : index
    %c0_110 = arith.constant 0 : index
    %70 = vector.load %arg7[%c0_107, %c2_108, %c0_109, %c0_110] : memref<2x10x10x128xbf16, #tpu.memory_space<vmem>>, vector<2x8x8x128xbf16>
    %71 = vector.shape_cast %70 : vector<2x8x8x128xbf16> to vector<128x128xbf16>
    %c0_111 = arith.constant 0 : index
    %c768_112 = arith.constant 768 : index
    %72 = vector.load %arg8[%c0_111, %c768_112] : memref<128x1152xbf16, #tpu.memory_space<vmem>>, vector<128x128xbf16>
    tpu.vector_store %arg8[%c0_111, %c768_112], %71 {strides = array<i32>} : memref<128x1152xbf16, #tpu.memory_space<vmem>>, vector<128x128xbf16>,
    %c0_113 = arith.constant 0 : index
    %c2_114 = arith.constant 2 : index
    %c1_115 = arith.constant 1 : index
    %c0_116 = arith.constant 0 : index
    %73 = vector.load %arg7[%c0_113, %c2_114, %c1_115, %c0_116] : memref<2x10x10x128xbf16, #tpu.memory_space<vmem>>, vector<2x8x8x128xbf16>
    %74 = vector.shape_cast %73 : vector<2x8x8x128xbf16> to vector<128x128xbf16>
    %c0_117 = arith.constant 0 : index
    %c896_118 = arith.constant 896 : index
    %75 = vector.load %arg8[%c0_117, %c896_118] : memref<128x1152xbf16, #tpu.memory_space<vmem>>, vector<128x128xbf16>
    tpu.vector_store %arg8[%c0_117, %c896_118], %74 {strides = array<i32>} : memref<128x1152xbf16, #tpu.memory_space<vmem>>, vector<128x128xbf16>,
    %c0_119 = arith.constant 0 : index
    %c2_120 = arith.constant 2 : index
    %c2_121 = arith.constant 2 : index
    %c0_122 = arith.constant 0 : index
    %76 = vector.load %arg7[%c0_119, %c2_120, %c2_121, %c0_122] : memref<2x10x10x128xbf16, #tpu.memory_space<vmem>>, vector<2x8x8x128xbf16>
    %77 = vector.shape_cast %76 : vector<2x8x8x128xbf16> to vector<128x128xbf16>
    %c0_123 = arith.constant 0 : index
    %c1024_124 = arith.constant 1024 : index
    %78 = vector.load %arg8[%c0_123, %c1024_124] : memref<128x1152xbf16, #tpu.memory_space<vmem>>, vector<128x128xbf16>
    tpu.vector_store %arg8[%c0_123, %c1024_124], %77 {strides = array<i32>} : memref<128x1152xbf16, #tpu.memory_space<vmem>>, vector<128x128xbf16>,
    %c0_125 = arith.constant 0 : index
    %c0_126 = arith.constant 0 : index
    %79 = vector.load %arg8[%c0_125, %c0_126] : memref<128x1152xbf16, #tpu.memory_space<vmem>>, vector<128x1152xbf16>
    %c0_127 = arith.constant 0 : index
    %c0_128 = arith.constant 0 : index
    %80 = vector.load %arg3[%c0_127, %c0_128] : memref<1152x128xbf16, #tpu.memory_space<vmem>>, vector<1152x128xbf16>
    %cst_129 = arith.constant dense<0.000000e+00> : vector<128x128xf32>
    %81 = tpu.matmul %79, %80, %cst_129 {dimension_numbers = #tpu.dot_dimension_numbers<[1], [0], [0], [1], [0, 0, 1, 1], [], []>} : vector<128x1152xbf16>, vector<1152x128xbf16>, vector<128x128xf32> -> vector<128x128xf32>
    %82 = vector.shape_cast %81 : vector<128x128xf32> to vector<2x64x128xf32>
    %cst_130 = arith.constant dense<0.000000e+00> : vector<2x128xf32>
    %83 = vector.multi_reduction <add>, %82, %cst_130 [1] : vector<2x64x128xf32> to vector<2x128xf32>
    %cst_131 = arith.constant 6.400000e+01 : f32
    %84 = vector.broadcast %cst_131 : f32 to vector<2x128xf32>
    %85 = arith.divf %83, %84 : vector<2x128xf32>
    %86 = arith.truncf %85 : vector<2x128xf32> to vector<2x128xbf16>
    %c0_132 = arith.constant 0 : index
    %c0_133 = arith.constant 0 : index
    %87 = vector.load %arg4[%c0_132, %c0_133] : memref<128x128xbf16, #tpu.memory_space<vmem>>, vector<128x128xbf16>
    %cst_134 = arith.constant dense<0.000000e+00> : vector<2x128xf32>
    %88 = tpu.matmul %86, %87, %cst_134 {dimension_numbers = #tpu.dot_dimension_numbers<[1], [0], [0], [1], [0, 0, 1, 1], [], []>} : vector<2x128xbf16>, vector<128x128xbf16>, vector<2x128xf32> -> vector<2x128xf32>
    %cst_135 = arith.constant 0.000000e+00 : f32
    %89 = vector.broadcast %cst_135 : f32 to vector<2x128xf32>
    %90 = arith.maximumf %88, %89 : vector<2x128xf32>
    %91 = arith.truncf %90 : vector<2x128xf32> to vector<2x128xbf16>
    %c0_136 = arith.constant 0 : index
    %c0_137 = arith.constant 0 : index
    %92 = vector.load %arg5[%c0_136, %c0_137] : memref<128x128xbf16, #tpu.memory_space<vmem>>, vector<128x128xbf16>
    %cst_138 = arith.constant dense<0.000000e+00> : vector<2x128xf32>
    %93 = tpu.matmul %91, %92, %cst_138 {dimension_numbers = #tpu.dot_dimension_numbers<[1], [0], [0], [1], [0, 0, 1, 1], [], []>} : vector<2x128xbf16>, vector<128x128xbf16>, vector<2x128xf32> -> vector<2x128xf32>
    %cst_139 = arith.constant 0.000000e+00 : f32
    %94 = vector.broadcast %cst_139 : f32 to vector<2x128xf32>
    %95 = arith.subf %94, %93 : vector<2x128xf32>
    %96 = math.exp %95 : vector<2x128xf32>
    %cst_140 = arith.constant 1.000000e+00 : f32
    %97 = vector.broadcast %cst_140 : f32 to vector<2x128xf32>
    %98 = arith.addf %97, %96 : vector<2x128xf32>
    %cst_141 = arith.constant 1.000000e+00 : f32
    %99 = vector.broadcast %cst_141 : f32 to vector<2x128xf32>
    %100 = arith.divf %99, %98 : vector<2x128xf32>
    %101 = vector.shape_cast %100 : vector<2x128xf32> to vector<2x1x128xf32>
    %102 = vector.broadcast %101 : vector<2x1x128xf32> to vector<2x64x128xf32>
    %103 = arith.mulf %82, %102 : vector<2x64x128xf32>
    %104 = vector.shape_cast %103 : vector<2x64x128xf32> to vector<128x128xf32>
    %c0_142 = arith.constant 0 : index
    %c1_143 = arith.constant 1 : index
    %c1_144 = arith.constant 1 : index
    %c0_145 = arith.constant 0 : index
    %105 = vector.load %arg1[%c0_142, %c1_143, %c1_144, %c0_145] : memref<2x10x10x128xf32, #tpu.memory_space<vmem>>, vector<2x8x8x128xf32>
    %106 = vector.shape_cast %105 : vector<2x8x8x128xf32> to vector<128x128xf32>
    %c64_i32 = arith.constant 64 : i32
    %107 = tpu.dynamic_rotate %104 by %c64_i32 dim 1 : vector<128x128xf32>, i32 -> vector<128x128xf32>
    %108 = arith.mulf %104, %106 : vector<128x128xf32>
    %109 = arith.addf %108, %107 : vector<128x128xf32>
    %110 = vector.shape_cast %109 : vector<128x128xf32> to vector<2x8x8x128xf32>
    %c0_146 = arith.constant 0 : index
    %c0_147 = arith.constant 0 : index
    %c0_148 = arith.constant 0 : index
    %c0_149 = arith.constant 0 : index
    %111 = vector.load %arg6[%c0_146, %c0_147, %c0_148, %c0_149] : memref<2x8x8x128xf32, #tpu.memory_space<vmem>>, vector<2x8x8x128xf32>
    tpu.vector_store %arg6[%c0_146, %c0_147, %c0_148, %c0_149], %110 {strides = array<i32>} : memref<2x8x8x128xf32, #tpu.memory_space<vmem>>, vector<2x8x8x128xf32>,
    return
  }
  func.func @transform_0(%arg0: i32) -> (i32, i32, i32, i32) {
    %c0_i32 = arith.constant 0 : i32
    %c0_i32_0 = arith.constant 0 : i32
    %c0_i32_1 = arith.constant 0 : i32
    %c0_i32_2 = arith.constant 0 : i32
    return %arg0, %c0_i32, %c0_i32_0, %c0_i32_1 : i32, i32, i32, i32
  }
  func.func @transform_1(%arg0: i32) -> (i32, i32) {
    %c0_i32 = arith.constant 0 : i32
    %c0_i32_0 = arith.constant 0 : i32
    %c0_i32_1 = arith.constant 0 : i32
    return %c0_i32, %c0_i32_0 : i32, i32
  }
  func.func @transform_2(%arg0: i32) -> (i32, i32) {
    %c0_i32 = arith.constant 0 : i32
    %c0_i32_0 = arith.constant 0 : i32
    %c0_i32_1 = arith.constant 0 : i32
    return %c0_i32, %c0_i32_0 : i32, i32
  }
  func.func @transform_3(%arg0: i32) -> (i32, i32) {
    %c0_i32 = arith.constant 0 : i32
    %c0_i32_0 = arith.constant 0 : i32
    %c0_i32_1 = arith.constant 0 : i32
    return %c0_i32, %c0_i32_0 : i32, i32
  }
  func.func @transform_4(%arg0: i32) -> (i32, i32) {
    %c0_i32 = arith.constant 0 : i32
    %c0_i32_0 = arith.constant 0 : i32
    %c0_i32_1 = arith.constant 0 : i32
    return %c0_i32, %c0_i32_0 : i32, i32
  }
  func.func @transform_5(%arg0: i32) -> (i32, i32, i32, i32) {
    %c0_i32 = arith.constant 0 : i32
    %c0_i32_0 = arith.constant 0 : i32
    %c0_i32_1 = arith.constant 0 : i32
    %c0_i32_2 = arith.constant 0 : i32
    return %arg0, %c0_i32, %c0_i32_0, %c0_i32_1 : i32, i32, i32, i32
  }
}

</mosaic_0001>

<llo_original>
// kernel: tpu_custom_call.1
$region0: #{tpu_custom_call.1}
  #allocation0 [shape = 'u32[]', space=smem, size = 0x4, offset = 0x4, fixed_abs, tag = 'smem constant byte address 0x4 - core index']
  #allocation1 [shape = 'u32[72,128]{1,0:T(1,128)}', space=vmem, size = 0x9000, scoped, tag = 'internal scratch']
  #allocation2 [shape = 'bf16[2,10,10,128]{3,2,1,0:T(8,128)(2,1)}', space=vmem, size = 0x14000, scoped, tag = 'scratch operand']
  #allocation3 [shape = 'bf16[128,1152]{1,0:T(8,128)(2,1)}', space=vmem, size = 0x48000, scoped, tag = 'scratch operand']
  %s0 = inlined_call_operand.vmem [shape: f32[2,10,10,128], index: 0, kind: input, shape index: {}]
  %s1 = inlined_call_operand.hbm [shape: bf16[1152,128], index: 1, kind: input, shape index: {}]
  %s2 = inlined_call_operand.hbm [shape: bf16[1152,128], index: 2, kind: input, shape index: {}]
  %s3 = inlined_call_operand.vmem [shape: bf16[128,128], index: 3, kind: input, shape index: {}]
  %s4 = inlined_call_operand.vmem [shape: bf16[128,128], index: 4, kind: input, shape index: {}]
  %s5 = inlined_call_operand.hbm [shape: f32[2,8,8,128], index: 5, kind: output, shape index: {}]
  %s6 = sld [smem:[#allocation0]]
  $region38: #{tpu_custom_call.1} parent=0
    _
  %s8 = ssub.s32 1, %s6
  %s9 = scalar_select 0, %s8, %s6
  $region1: #{tpu_custom_call.1} parent=0
    #allocation4 [shape = 'u8[294912]{0}', space=vmem, size = 0x48000, scoped, tag = 'input window, operand 1, single buffered']
    #allocation5 [shape = 's32[1]{0}', space=sflag, size = 0x4, scoped, tag = 'scoped memory for tpu_custom_call.1']
    #allocation6 [shape = 's32[1]{0}', space=sflag, size = 0x4, scoped, tag = 'scoped memory for tpu_custom_call.1']
    #allocation7 [shape = 'u8[294912]{0}', space=vmem, size = 0x48000, scoped, tag = 'input window, operand 2, single buffered']
    #allocation8 [shape = 's32[1]{0}', space=sflag, size = 0x4, scoped, tag = 'scoped memory for tpu_custom_call.1']
    #allocation9 [shape = 'u8[65536]{0}', space=vmem, size = 0x10000, scoped, tag = 'output window, operand 0, single buffered']
    %10 = vsyncpa [#allocation5], 0
    %11 = vsyncpa [#allocation8], 0
    %12 = vsyncpa [#allocation6], 0
    // Predicated region
    $region2: #{tpu_custom_call.1} parent=1 // pred_check
      _
    $region3: #{tpu_custom_call.1} parent=1 // pred_check_branch
      %14 = sbr.rel (0) target = $region5
    $region4: #{tpu_custom_call.1} parent=1 // pred_region
      _
    $region5: #{tpu_custom_call.1} parent=1 // pred_fallthru
      _
    // Predicated region
    $region6: #{tpu_custom_call.1} parent=1 // pred_check
      _
    $region7: #{tpu_custom_call.1} parent=1 // pred_check_branch
      %16 = sbr.rel (0) target = $region9
    $region8: #{tpu_custom_call.1} parent=1 // pred_region
      %18 = vsyncadd [#allocation5], 0
      %s19 = sshll.u32 %s1, 4
      %s20 = int_to_ptr.hbm [resolvable:$true] %s19
      %s21 = sshll.u32 [#allocation4], 4
      %s22 = int_to_ptr.vmem [resolvable:$true] %s21
      %27 = dma.hbm_to_vmem [thread:$0]  %s20, 9216, %s22, [#allocation5], 64, 64, 4
    $region9: #{tpu_custom_call.1} parent=1 // pred_fallthru
      _
    // Predicated region
    $region10: #{tpu_custom_call.1} parent=1 // pred_check
      _
    $region11: #{tpu_custom_call.1} parent=1 // pred_check_branch
      %29 = sbr.rel (0) target = $region13
    $region12: #{tpu_custom_call.1} parent=1 // pred_region
      %31 = vsyncadd [#allocation8], 0
      %s32 = sshll.u32 %s2, 4
      %s33 = int_to_ptr.hbm [resolvable:$true] %s32
      %s34 = sshll.u32 [#allocation7], 4
      %s35 = int_to_ptr.vmem [resolvable:$true] %s34
      %40 = dma.hbm_to_vmem [thread:$0]  %s33, 9216, %s35, [#allocation8], 64, 64, 4
    $region13: #{tpu_custom_call.1} parent=1 // pred_fallthru
      _
    // Predicated region
    $region14: #{tpu_custom_call.1} parent=1 // pred_check
      _
    $region15: #{tpu_custom_call.1} parent=1 // pred_check_branch
      %42 = sbr.rel (0) target = $region17
    $region16: #{tpu_custom_call.1} parent=1 // pred_region
      _
    $region17: #{tpu_custom_call.1} parent=1 // pred_fallthru
      _
    // Predicated region
    $region18: #{tpu_custom_call.1} parent=1 // pred_check
      _
    $region19: #{tpu_custom_call.1} parent=1 // pred_check_branch
      %44 = sbr.rel (0) target = $region21
    $region20: #{tpu_custom_call.1} parent=1 // pred_region
      _
    $region21: #{tpu_custom_call.1} parent=1 // pred_fallthru
      _
    // Predicated region
    $region22: #{tpu_custom_call.1} parent=1 // pred_check
      _
    $region23: #{tpu_custom_call.1} parent=1 // pred_check_branch
      %46 = sbr.rel (0) target = $region25
    $region24: #{tpu_custom_call.1} parent=1 // pred_region
      %48 = dma.done [#allocation5], 9216
    $region25: #{tpu_custom_call.1} parent=1 // pred_fallthru
      _
    // Predicated region
    $region26: #{tpu_custom_call.1} parent=1 // pred_check
      _
    $region27: #{tpu_custom_call.1} parent=1 // pred_check_branch
      %50 = sbr.rel (0) target = $region29
    $region28: #{tpu_custom_call.1} parent=1 // pred_region
      %52 = dma.done [#allocation8], 9216
    $region29: #{tpu_custom_call.1} parent=1 // pred_fallthru
      _
    %v54 = vld [vmem:[%s0] sm:$0xff]
    %v55 = vld [vmem:[%s0 + $0x10] sm:$0xff]
    %v56 = vld [vmem:[%s0 + $0x20] sm:$0xff]
    %v57 = vld [vmem:[%s0 + $0x30] sm:$0xff]
    %v58 = vld [vmem:[%s0 + $0x40] sm:$0xff]
    %v59 = vld [vmem:[%s0 + $0x50] sm:$0xff]
    %v60 = vld [vmem:[%s0 + $0x60] sm:$0xff]
    %v61 = vld [vmem:[%s0 + $0x70] sm:$0xff]
    %v62 = vld [vmem:[%s0 + $0xa0] sm:$0xff]
    %v63 = vld [vmem:[%s0 + $0xb0] sm:$0xff]
    %v64 = vld [vmem:[%s0 + $0xc0] sm:$0xff]
    %v65 = vld [vmem:[%s0 + $0xd0] sm:$0xff]
    %v66 = vld [vmem:[%s0 + $0xe0] sm:$0xff]
    %v67 = vld [vmem:[%s0 + $0xf0] sm:$0xff]
    %v68 = vld [vmem:[%s0 + $0x100] sm:$0xff]
    %v69 = vld [vmem:[%s0 + $0x110] sm:$0xff]
    %v70 = vpack.c.bf16 %v54, %v54
    %v71 = vpack.c.bf16 %v55, %v55
    %v72 = vpack.c.bf16 %v56, %v56
    %v73 = vpack.c.bf16 %v57, %v57
    %v74 = vpack.c.bf16 %v58, %v58
    %v75 = vpack.c.bf16 %v59, %v59
    %v76 = vpack.c.bf16 %v60, %v60
    %v77 = vpack.c.bf16 %v61, %v61
    %v78 = vpack.c.bf16 %v62, %v62
    %v79 = vpack.c.bf16 %v63, %v63
    %v80 = vpack.c.bf16 %v64, %v64
    %v81 = vpack.c.bf16 %v65, %v65
    %v82 = vpack.c.bf16 %v66, %v66
    %v83 = vpack.c.bf16 %v67, %v67
    %v84 = vpack.c.bf16 %v68, %v68
    %v85 = vpack.c.bf16 %v69, %v69
    %86 = vst [vmem:[#allocation3] sm:$0xf] %v70
    %87 = vst [vmem:[#allocation3 + $0x24] sm:$0xf] %v71
    %88 = vst [vmem:[#allocation3 + $0x48] sm:$0xf] %v72
    %89 = vst [vmem:[#allocation3 + $0x6c] sm:$0xf] %v73
    %90 = vst [vmem:[#allocation3 + $0x90] sm:$0xf] %v74
    %91 = vst [vmem:[#allocation3 + $0xb4] sm:$0xf] %v75
    %92 = vst [vmem:[#allocation3 + $0xd8] sm:$0xf] %v76
    %93 = vst [vmem:[#allocation3 + $0xfc] sm:$0xf] %v77
    %94 = vst [vmem:[#allocation3 + $0x120] sm:$0xf] %v78
    %95 = vst [vmem:[#allocation3 + $0x144] sm:$0xf] %v79
    %96 = vst [vmem:[#allocation3 + $0x168] sm:$0xf] %v80
    %97 = vst [vmem:[#allocation3 + $0x18c] sm:$0xf] %v81
    %98 = vst [vmem:[#allocation3 + $0x1b0] sm:$0xf] %v82
    %99 = vst [vmem:[#allocation3 + $0x1d4] sm:$0xf] %v83
    %100 = vst [vmem:[#allocation3 + $0x1f8] sm:$0xf] %v84
    %101 = vst [vmem:[#allocation3 + $0x21c] sm:$0xf] %v85
    %v102 = vld [vmem:[%s0 + $0x1] sm:$0xff]
    %v103 = vld [vmem:[%s0 + $0x11] sm:$0xff]
    %v104 = vld [vmem:[%s0 + $0x21] sm:$0xff]
    %v105 = vld [vmem:[%s0 + $0x31] sm:$0xff]
    %v106 = vld [vmem:[%s0 + $0x41] sm:$0xff]
    %v107 = vld [vmem:[%s0 + $0x51] sm:$0xff]
    %v108 = vld [vmem:[%s0 + $0x61] sm:$0xff]
    %v109 = vld [vmem:[%s0 + $0x71] sm:$0xff]
    %v110 = vld [vmem:[%s0 + $0xa1] sm:$0xff]
    %v111 = vld [vmem:[%s0 + $0xb1] sm:$0xff]
    %v112 = vld [vmem:[%s0 + $0xc1] sm:$0xff]
    %v113 = vld [vmem:[%s0 + $0xd1] sm:$0xff]
    %v114 = vld [vmem:[%s0 + $0xe1] sm:$0xff]
    %v115 = vld [vmem:[%s0 + $0xf1] sm:$0xff]
    %v116 = vld [vmem:[%s0 + $0x101] sm:$0xff]
    %v117 = vld [vmem:[%s0 + $0x111] sm:$0xff]
    %v118 = vpack.c.bf16 %v102, %v102
    %v119 = vpack.c.bf16 %v103, %v103
    %v120 = vpack.c.bf16 %v104, %v104
    %v121 = vpack.c.bf16 %v105, %v105
    %v122 = vpack.c.bf16 %v106, %v106
    %v123 = vpack.c.bf16 %v107, %v107
    %v124 = vpack.c.bf16 %v108, %v108
    %v125 = vpack.c.bf16 %v109, %v109
    %v126 = vpack.c.bf16 %v110, %v110
    %v127 = vpack.c.bf16 %v111, %v111
    %v128 = vpack.c.bf16 %v112, %v112
    %v129 = vpack.c.bf16 %v113, %v113
    %v130 = vpack.c.bf16 %v114, %v114
    %v131 = vpack.c.bf16 %v115, %v115
    %v132 = vpack.c.bf16 %v116, %v116
    %v133 = vpack.c.bf16 %v117, %v117
    %134 = vst [vmem:[#allocation3 + $0x4] sm:$0xf] %v118
    %135 = vst [vmem:[#allocation3 + $0x28] sm:$0xf] %v119
    %136 = vst [vmem:[#allocation3 + $0x4c] sm:$0xf] %v120
    %137 = vst [vmem:[#allocation3 + $0x70] sm:$0xf] %v121
    %138 = vst [vmem:[#allocation3 + $0x94] sm:$0xf] %v122
    %139 = vst [vmem:[#allocation3 + $0xb8] sm:$0xf] %v123
    %140 = vst [vmem:[#allocation3 + $0xdc] sm:$0xf] %v124
    %141 = vst [vmem:[#allocation3 + $0x100] sm:$0xf] %v125
    %142 = vst [vmem:[#allocation3 + $0x124] sm:$0xf] %v126
    %143 = vst [vmem:[#allocation3 + $0x148] sm:$0xf] %v127
    %144 = vst [vmem:[#allocation3 + $0x16c] sm:$0xf] %v128
    %145 = vst [vmem:[#allocation3 + $0x190] sm:$0xf] %v129
    %146 = vst [vmem:[#allocation3 + $0x1b4] sm:$0xf] %v130
    %147 = vst [vmem:[#allocation3 + $0x1d8] sm:$0xf] %v131
    %148 = vst [vmem:[#allocation3 + $0x1fc] sm:$0xf] %v132
    %149 = vst [vmem:[#allocation3 + $0x220] sm:$0xf] %v133
    %v150 = vld [vmem:[%s0 + $0x2] sm:$0xff]
    %v151 = vld [vmem:[%s0 + $0x12] sm:$0xff]
    %v152 = vld [vmem:[%s0 + $0x22] sm:$0xff]
    %v153 = vld [vmem:[%s0 + $0x32] sm:$0xff]
    %v154 = vld [vmem:[%s0 + $0x42] sm:$0xff]
    %v155 = vld [vmem:[%s0 + $0x52] sm:$0xff]
    %v156 = vld [vmem:[%s0 + $0x62] sm:$0xff]
    %v157 = vld [vmem:[%s0 + $0x72] sm:$0xff]
    %v158 = vld [vmem:[%s0 + $0xa2] sm:$0xff]
    %v159 = vld [vmem:[%s0 + $0xb2] sm:$0xff]
    %v160 = vld [vmem:[%s0 + $0xc2] sm:$0xff]
    %v161 = vld [vmem:[%s0 + $0xd2] sm:$0xff]
    %v162 = vld [vmem:[%s0 + $0xe2] sm:$0xff]
    %v163 = vld [vmem:[%s0 + $0xf2] sm:$0xff]
    %v164 = vld [vmem:[%s0 + $0x102] sm:$0xff]
    %v165 = vld [vmem:[%s0 + $0x112] sm:$0xff]
    %v166 = vpack.c.bf16 %v150, %v150
    %v167 = vpack.c.bf16 %v151, %v151
    %v168 = vpack.c.bf16 %v152, %v152
    %v169 = vpack.c.bf16 %v153, %v153
    %v170 = vpack.c.bf16 %v154, %v154
    %v171 = vpack.c.bf16 %v155, %v155
    %v172 = vpack.c.bf16 %v156, %v156
    %v173 = vpack.c.bf16 %v157, %v157
    %v174 = vpack.c.bf16 %v158, %v158
    %v175 = vpack.c.bf16 %v159, %v159
    %v176 = vpack.c.bf16 %v160, %v160
    %v177 = vpack.c.bf16 %v161, %v161
    %v178 = vpack.c.bf16 %v162, %v162
    %v179 = vpack.c.bf16 %v163, %v163
    %v180 = vpack.c.bf16 %v164, %v164
    %v181 = vpack.c.bf16 %v165, %v165
    %182 = vst [vmem:[#allocation3 + $0x8] sm:$0xf] %v166
    %183 = vst [vmem:[#allocation3 + $0x2c] sm:$0xf] %v167
    %184 = vst [vmem:[#allocation3 + $0x50] sm:$0xf] %v168
    %185 = vst [vmem:[#allocation3 + $0x74] sm:$0xf] %v169
    %186 = vst [vmem:[#allocation3 + $0x98] sm:$0xf] %v170
    %187 = vst [vmem:[#allocation3 + $0xbc] sm:$0xf] %v171
    %188 = vst [vmem:[#allocation3 + $0xe0] sm:$0xf] %v172
    %189 = vst [vmem:[#allocation3 + $0x104] sm:$0xf] %v173
    %190 = vst [vmem:[#allocation3 + $0x128] sm:$0xf] %v174
    %191 = vst [vmem:[#allocation3 + $0x14c] sm:$0xf] %v175
    %192 = vst [vmem:[#allocation3 + $0x170] sm:$0xf] %v176
    %193 = vst [vmem:[#allocation3 + $0x194] sm:$0xf] %v177
    %194 = vst [vmem:[#allocation3 + $0x1b8] sm:$0xf] %v178
    %195 = vst [vmem:[#allocation3 + $0x1dc] sm:$0xf] %v179
    %196 = vst [vmem:[#allocation3 + $0x200] sm:$0xf] %v180
    %197 = vst [vmem:[#allocation3 + $0x224] sm:$0xf] %v181
    %s198 = scalar_lea.vmem %s0, 16
    %v199 = vld [vmem:[%s198] sm:$0xff]
    %v200 = vld [vmem:[%s198 + $0x10] sm:$0xff]
    %v201 = vld [vmem:[%s198 + $0x20] sm:$0xff]
    %v202 = vld [vmem:[%s198 + $0x30] sm:$0xff]
    %v203 = vld [vmem:[%s198 + $0x40] sm:$0xff]
    %v204 = vld [vmem:[%s198 + $0x50] sm:$0xff]
    %v205 = vld [vmem:[%s198 + $0x60] sm:$0xff]
    %v206 = vld [vmem:[%s198 + $0x70] sm:$0xff]
    %v207 = vld [vmem:[%s198 + $0xa0] sm:$0xff]
    %v208 = vld [vmem:[%s198 + $0xb0] sm:$0xff]
    %v209 = vld [vmem:[%s198 + $0xc0] sm:$0xff]
    %v210 = vld [vmem:[%s198 + $0xd0] sm:$0xff]
    %v211 = vld [vmem:[%s198 + $0xe0] sm:$0xff]
    %v212 = vld [vmem:[%s198 + $0xf0] sm:$0xff]
    %v213 = vld [vmem:[%s198 + $0x100] sm:$0xff]
    %v214 = vld [vmem:[%s198 + $0x110] sm:$0xff]
    %v215 = vpack.c.bf16 %v199, %v199
    %v216 = vpack.c.bf16 %v200, %v200
    %v217 = vpack.c.bf16 %v201, %v201
    %v218 = vpack.c.bf16 %v202, %v202
    %v219 = vpack.c.bf16 %v203, %v203
    %v220 = vpack.c.bf16 %v204, %v204
    %v221 = vpack.c.bf16 %v205, %v205
    %v222 = vpack.c.bf16 %v206, %v206
    %v223 = vpack.c.bf16 %v207, %v207
    %v224 = vpack.c.bf16 %v208, %v208
    %v225 = vpack.c.bf16 %v209, %v209
    %v226 = vpack.c.bf16 %v210, %v210
    %v227 = vpack.c.bf16 %v211, %v211
    %v228 = vpack.c.bf16 %v212, %v212
    %v229 = vpack.c.bf16 %v213, %v213
    %v230 = vpack.c.bf16 %v214, %v214
    %231 = vst [vmem:[#allocation3 + $0xc] sm:$0xf] %v215
    %232 = vst [vmem:[#allocation3 + $0x30] sm:$0xf] %v216
    %233 = vst [vmem:[#allocation3 + $0x54] sm:$0xf] %v217
    %234 = vst [vmem:[#allocation3 + $0x78] sm:$0xf] %v218
    %235 = vst [vmem:[#allocation3 + $0x9c] sm:$0xf] %v219
    %236 = vst [vmem:[#allocation3 + $0xc0] sm:$0xf] %v220
    %237 = vst [vmem:[#allocation3 + $0xe4] sm:$0xf] %v221
    %238 = vst [vmem:[#allocation3 + $0x108] sm:$0xf] %v222
    %239 = vst [vmem:[#allocation3 + $0x12c] sm:$0xf] %v223
    %240 = vst [vmem:[#allocation3 + $0x150] sm:$0xf] %v224
    %241 = vst [vmem:[#allocation3 + $0x174] sm:$0xf] %v225
    %242 = vst [vmem:[#allocation3 + $0x198] sm:$0xf] %v226
    %243 = vst [vmem:[#allocation3 + $0x1bc] sm:$0xf] %v227
    %244 = vst [vmem:[#allocation3 + $0x1e0] sm:$0xf] %v228
    %245 = vst [vmem:[#allocation3 + $0x204] sm:$0xf] %v229
    %246 = vst [vmem:[#allocation3 + $0x228] sm:$0xf] %v230
    %v247 = vld [vmem:[%s198 + $0x1] sm:$0xff]
    %v248 = vld [vmem:[%s198 + $0x11] sm:$0xff]
    %v249 = vld [vmem:[%s198 + $0x21] sm:$0xff]
    %v250 = vld [vmem:[%s198 + $0x31] sm:$0xff]
    %v251 = vld [vmem:[%s198 + $0x41] sm:$0xff]
    %v252 = vld [vmem:[%s198 + $0x51] sm:$0xff]
    %v253 = vld [vmem:[%s198 + $0x61] sm:$0xff]
    %v254 = vld [vmem:[%s198 + $0x71] sm:$0xff]
    %v255 = vld [vmem:[%s198 + $0xa1] sm:$0xff]
    %v256 = vld [vmem:[%s198 + $0xb1] sm:$0xff]
    %v257 = vld [vmem:[%s198 + $0xc1] sm:$0xff]
    %v258 = vld [vmem:[%s198 + $0xd1] sm:$0xff]
    %v259 = vld [vmem:[%s198 + $0xe1] sm:$0xff]
    %v260 = vld [vmem:[%s198 + $0xf1] sm:$0xff]
    %v261 = vld [vmem:[%s198 + $0x101] sm:$0xff]
    %v262 = vld [vmem:[%s198 + $0x111] sm:$0xff]
    %v263 = vpack.c.bf16 %v247, %v247
    %v264 = vpack.c.bf16 %v248, %v248
    %v265 = vpack.c.bf16 %v249, %v249
    %v266 = vpack.c.bf16 %v250, %v250
    %v267 = vpack.c.bf16 %v251, %v251
    %v268 = vpack.c.bf16 %v252, %v252
    %v269 = vpack.c.bf16 %v253, %v253
    %v270 = vpack.c.bf16 %v254, %v254
    %v271 = vpack.c.bf16 %v255, %v255
    %v272 = vpack.c.bf16 %v256, %v256
    %v273 = vpack.c.bf16 %v257, %v257
    %v274 = vpack.c.bf16 %v258, %v258
    %v275 = vpack.c.bf16 %v259, %v259
    %v276 = vpack.c.bf16 %v260, %v260
    %v277 = vpack.c.bf16 %v261, %v261
    %v278 = vpack.c.bf16 %v262, %v262
    %279 = vst [vmem:[#allocation3 + $0x10] sm:$0xf] %v263
    %280 = vst [vmem:[#allocation3 + $0x34] sm:$0xf] %v264
    %281 = vst [vmem:[#allocation3 + $0x58] sm:$0xf] %v265
    %282 = vst [vmem:[#allocation3 + $0x7c] sm:$0xf] %v266
    %283 = vst [vmem:[#allocation3 + $0xa0] sm:$0xf] %v267
    %284 = vst [vmem:[#allocation3 + $0xc4] sm:$0xf] %v268
    %285 = vst [vmem:[#allocation3 + $0xe8] sm:$0xf] %v269
    %286 = vst [vmem:[#allocation3 + $0x10c] sm:$0xf] %v270
    %287 = vst [vmem:[#allocation3 + $0x130] sm:$0xf] %v271
    %288 = vst [vmem:[#allocation3 + $0x154] sm:$0xf] %v272
    %289 = vst [vmem:[#allocation3 + $0x178] sm:$0xf] %v273
    %290 = vst [vmem:[#allocation3 + $0x19c] sm:$0xf] %v274
    %291 = vst [vmem:[#allocation3 + $0x1c0] sm:$0xf] %v275
    %292 = vst [vmem:[#allocation3 + $0x1e4] sm:$0xf] %v276
    %293 = vst [vmem:[#allocation3 + $0x208] sm:$0xf] %v277
    %294 = vst [vmem:[#allocation3 + $0x22c] sm:$0xf] %v278
    %v295 = vld [vmem:[%s198 + $0x2] sm:$0xff]
    %v296 = vld [vmem:[%s198 + $0x12] sm:$0xff]
    %v297 = vld [vmem:[%s198 + $0x22] sm:$0xff]
    %v298 = vld [vmem:[%s198 + $0x32] sm:$0xff]
    %v299 = vld [vmem:[%s198 + $0x42] sm:$0xff]
    %v300 = vld [vmem:[%s198 + $0x52] sm:$0xff]
    %v301 = vld [vmem:[%s198 + $0x62] sm:$0xff]
    %v302 = vld [vmem:[%s198 + $0x72] sm:$0xff]
    %v303 = vld [vmem:[%s198 + $0xa2] sm:$0xff]
    %v304 = vld [vmem:[%s198 + $0xb2] sm:$0xff]
    %v305 = vld [vmem:[%s198 + $0xc2] sm:$0xff]
    %v306 = vld [vmem:[%s198 + $0xd2] sm:$0xff]
    %v307 = vld [vmem:[%s198 + $0xe2] sm:$0xff]
    %v308 = vld [vmem:[%s198 + $0xf2] sm:$0xff]
    %v309 = vld [vmem:[%s198 + $0x102] sm:$0xff]
    %v310 = vld [vmem:[%s198 + $0x112] sm:$0xff]
    %v311 = vpack.c.bf16 %v295, %v295
    %v312 = vpack.c.bf16 %v296, %v296
    %v313 = vpack.c.bf16 %v297, %v297
    %v314 = vpack.c.bf16 %v298, %v298
    %v315 = vpack.c.bf16 %v299, %v299
    %v316 = vpack.c.bf16 %v300, %v300
    %v317 = vpack.c.bf16 %v301, %v301
    %v318 = vpack.c.bf16 %v302, %v302
    %v319 = vpack.c.bf16 %v303, %v303
    %v320 = vpack.c.bf16 %v304, %v304
    %v321 = vpack.c.bf16 %v305, %v305
    %v322 = vpack.c.bf16 %v306, %v306
    %v323 = vpack.c.bf16 %v307, %v307
    %v324 = vpack.c.bf16 %v308, %v308
    %v325 = vpack.c.bf16 %v309, %v309
    %v326 = vpack.c.bf16 %v310, %v310
    %327 = vst [vmem:[#allocation3 + $0x14] sm:$0xf] %v311
    %328 = vst [vmem:[#allocation3 + $0x38] sm:$0xf] %v312
    %329 = vst [vmem:[#allocation3 + $0x5c] sm:$0xf] %v313
    %330 = vst [vmem:[#allocation3 + $0x80] sm:$0xf] %v314
    %331 = vst [vmem:[#allocation3 + $0xa4] sm:$0xf] %v315
    %332 = vst [vmem:[#allocation3 + $0xc8] sm:$0xf] %v316
    %333 = vst [vmem:[#allocation3 + $0xec] sm:$0xf] %v317
    %334 = vst [vmem:[#allocation3 + $0x110] sm:$0xf] %v318
    %335 = vst [vmem:[#allocation3 + $0x134] sm:$0xf] %v319
    %336 = vst [vmem:[#allocation3 + $0x158] sm:$0xf] %v320
    %337 = vst [vmem:[#allocation3 + $0x17c] sm:$0xf] %v321
    %338 = vst [vmem:[#allocation3 + $0x1a0] sm:$0xf] %v322
    %339 = vst [vmem:[#allocation3 + $0x1c4] sm:$0xf] %v323
    %340 = vst [vmem:[#allocation3 + $0x1e8] sm:$0xf] %v324
    %341 = vst [vmem:[#allocation3 + $0x20c] sm:$0xf] %v325
    %342 = vst [vmem:[#allocation3 + $0x230] sm:$0xf] %v326
    %s343 = scalar_lea.vmem %s0, 32
    %v344 = vld [vmem:[%s343] sm:$0xff]
    %v345 = vld [vmem:[%s343 + $0x10] sm:$0xff]
    %v346 = vld [vmem:[%s343 + $0x20] sm:$0xff]
    %v347 = vld [vmem:[%s343 + $0x30] sm:$0xff]
    %v348 = vld [vmem:[%s343 + $0x40] sm:$0xff]
    %v349 = vld [vmem:[%s343 + $0x50] sm:$0xff]
    %v350 = vld [vmem:[%s343 + $0x60] sm:$0xff]
    %v351 = vld [vmem:[%s343 + $0x70] sm:$0xff]
    %v352 = vld [vmem:[%s343 + $0xa0] sm:$0xff]
    %v353 = vld [vmem:[%s343 + $0xb0] sm:$0xff]
    %v354 = vld [vmem:[%s343 + $0xc0] sm:$0xff]
    %v355 = vld [vmem:[%s343 + $0xd0] sm:$0xff]
    %v356 = vld [vmem:[%s343 + $0xe0] sm:$0xff]
    %v357 = vld [vmem:[%s343 + $0xf0] sm:$0xff]
    %v358 = vld [vmem:[%s343 + $0x100] sm:$0xff]
    %v359 = vld [vmem:[%s343 + $0x110] sm:$0xff]
    %v360 = vpack.c.bf16 %v344, %v344
    %v361 = vpack.c.bf16 %v345, %v345
    %v362 = vpack.c.bf16 %v346, %v346
    %v363 = vpack.c.bf16 %v347, %v347
    %v364 = vpack.c.bf16 %v348, %v348
    %v365 = vpack.c.bf16 %v349, %v349
    %v366 = vpack.c.bf16 %v350, %v350
    %v367 = vpack.c.bf16 %v351, %v351
    %v368 = vpack.c.bf16 %v352, %v352
    %v369 = vpack.c.bf16 %v353, %v353
    %v370 = vpack.c.bf16 %v354, %v354
    %v371 = vpack.c.bf16 %v355, %v355
    %v372 = vpack.c.bf16 %v356, %v356
    %v373 = vpack.c.bf16 %v357, %v357
    %v374 = vpack.c.bf16 %v358, %v358
    %v375 = vpack.c.bf16 %v359, %v359
    %376 = vst [vmem:[#allocation3 + $0x18] sm:$0xf] %v360
    %377 = vst [vmem:[#allocation3 + $0x3c] sm:$0xf] %v361
    %378 = vst [vmem:[#allocation3 + $0x60] sm:$0xf] %v362
    %379 = vst [vmem:[#allocation3 + $0x84] sm:$0xf] %v363
    %380 = vst [vmem:[#allocation3 + $0xa8] sm:$0xf] %v364
    %381 = vst [vmem:[#allocation3 + $0xcc] sm:$0xf] %v365
    %382 = vst [vmem:[#allocation3 + $0xf0] sm:$0xf] %v366
    %383 = vst [vmem:[#allocation3 + $0x114] sm:$0xf] %v367
    %384 = vst [vmem:[#allocation3 + $0x138] sm:$0xf] %v368
    %385 = vst [vmem:[#allocation3 + $0x15c] sm:$0xf] %v369
    %386 = vst [vmem:[#allocation3 + $0x180] sm:$0xf] %v370
    %387 = vst [vmem:[#allocation3 + $0x1a4] sm:$0xf] %v371
    %388 = vst [vmem:[#allocation3 + $0x1c8] sm:$0xf] %v372
    %389 = vst [vmem:[#allocation3 + $0x1ec] sm:$0xf] %v373
    %390 = vst [vmem:[#allocation3 + $0x210] sm:$0xf] %v374
    %391 = vst [vmem:[#allocation3 + $0x234] sm:$0xf] %v375
    %v392 = vld [vmem:[%s343 + $0x1] sm:$0xff]
    %v393 = vld [vmem:[%s343 + $0x11] sm:$0xff]
    %v394 = vld [vmem:[%s343 + $0x21] sm:$0xff]
    %v395 = vld [vmem:[%s343 + $0x31] sm:$0xff]
    %v396 = vld [vmem:[%s343 + $0x41] sm:$0xff]
    %v397 = vld [vmem:[%s343 + $0x51] sm:$0xff]
    %v398 = vld [vmem:[%s343 + $0x61] sm:$0xff]
    %v399 = vld [vmem:[%s343 + $0x71] sm:$0xff]
    %v400 = vld [vmem:[%s343 + $0xa1] sm:$0xff]
    %v401 = vld [vmem:[%s343 + $0xb1] sm:$0xff]
    %v402 = vld [vmem:[%s343 + $0xc1] sm:$0xff]
    %v403 = vld [vmem:[%s343 + $0xd1] sm:$0xff]
    %v404 = vld [vmem:[%s343 + $0xe1] sm:$0xff]
    %v405 = vld [vmem:[%s343 + $0xf1] sm:$0xff]
    %v406 = vld [vmem:[%s343 + $0x101] sm:$0xff]
    %v407 = vld [vmem:[%s343 + $0x111] sm:$0xff]
    %v408 = vpack.c.bf16 %v392, %v392
    %v409 = vpack.c.bf16 %v393, %v393
    %v410 = vpack.c.bf16 %v394, %v394
    %v411 = vpack.c.bf16 %v395, %v395
    %v412 = vpack.c.bf16 %v396, %v396
    %v413 = vpack.c.bf16 %v397, %v397
    %v414 = vpack.c.bf16 %v398, %v398
    %v415 = vpack.c.bf16 %v399, %v399
    %v416 = vpack.c.bf16 %v400, %v400
    %v417 = vpack.c.bf16 %v401, %v401
    %v418 = vpack.c.bf16 %v402, %v402
    %v419 = vpack.c.bf16 %v403, %v403
    %v420 = vpack.c.bf16 %v404, %v404
    %v421 = vpack.c.bf16 %v405, %v405
    %v422 = vpack.c.bf16 %v406, %v406
    %v423 = vpack.c.bf16 %v407, %v407
    %424 = vst [vmem:[#allocation3 + $0x1c] sm:$0xf] %v408
    %425 = vst [vmem:[#allocation3 + $0x40] sm:$0xf] %v409
    %426 = vst [vmem:[#allocation3 + $0x64] sm:$0xf] %v410
    %427 = vst [vmem:[#allocation3 + $0x88] sm:$0xf] %v411
    %428 = vst [vmem:[#allocation3 + $0xac] sm:$0xf] %v412
    %429 = vst [vmem:[#allocation3 + $0xd0] sm:$0xf] %v413
    %430 = vst [vmem:[#allocation3 + $0xf4] sm:$0xf] %v414
    %431 = vst [vmem:[#allocation3 + $0x118] sm:$0xf] %v415
    %432 = vst [vmem:[#allocation3 + $0x13c] sm:$0xf] %v416
    %433 = vst [vmem:[#allocation3 + $0x160] sm:$0xf] %v417
    %434 = vst [vmem:[#allocation3 + $0x184] sm:$0xf] %v418
    %435 = vst [vmem:[#allocation3 + $0x1a8] sm:$0xf] %v419
    %436 = vst [vmem:[#allocation3 + $0x1cc] sm:$0xf] %v420
    %437 = vst [vmem:[#allocation3 + $0x1f0] sm:$0xf] %v421
    %438 = vst [vmem:[#allocation3 + $0x214] sm:$0xf] %v422
    %439 = vst [vmem:[#allocation3 + $0x238] sm:$0xf] %v423
    %v440 = vld [vmem:[%s343 + $0x2] sm:$0xff]
    %v441 = vld [vmem:[%s343 + $0x12] sm:$0xff]
    %v442 = vld [vmem:[%s343 + $0x22] sm:$0xff]
    %v443 = vld [vmem:[%s343 + $0x32] sm:$0xff]
    %v444 = vld [vmem:[%s343 + $0x42] sm:$0xff]
    %v445 = vld [vmem:[%s343 + $0x52] sm:$0xff]
    %v446 = vld [vmem:[%s343 + $0x62] sm:$0xff]
    %v447 = vld [vmem:[%s343 + $0x72] sm:$0xff]
    %v448 = vld [vmem:[%s343 + $0xa2] sm:$0xff]
    %v449 = vld [vmem:[%s343 + $0xb2] sm:$0xff]
    %v450 = vld [vmem:[%s343 + $0xc2] sm:$0xff]
    %v451 = vld [vmem:[%s343 + $0xd2] sm:$0xff]
    %v452 = vld [vmem:[%s343 + $0xe2] sm:$0xff]
    %v453 = vld [vmem:[%s343 + $0xf2] sm:$0xff]
    %v454 = vld [vmem:[%s343 + $0x102] sm:$0xff]
    %v455 = vld [vmem:[%s343 + $0x112] sm:$0xff]
    %v456 = vpack.c.bf16 %v440, %v440
    %v457 = vpack.c.bf16 %v441, %v441
    %v458 = vpack.c.bf16 %v442, %v442
    %v459 = vpack.c.bf16 %v443, %v443
    %v460 = vpack.c.bf16 %v444, %v444
    %v461 = vpack.c.bf16 %v445, %v445
    %v462 = vpack.c.bf16 %v446, %v446
    %v463 = vpack.c.bf16 %v447, %v447
    %v464 = vpack.c.bf16 %v448, %v448
    %v465 = vpack.c.bf16 %v449, %v449
    %v466 = vpack.c.bf16 %v450, %v450
    %v467 = vpack.c.bf16 %v451, %v451
    %v468 = vpack.c.bf16 %v452, %v452
    %v469 = vpack.c.bf16 %v453, %v453
    %v470 = vpack.c.bf16 %v454, %v454
    %v471 = vpack.c.bf16 %v455, %v455
    %472 = vst [vmem:[#allocation3 + $0x20] sm:$0xf] %v456
    %473 = vst [vmem:[#allocation3 + $0x44] sm:$0xf] %v457
    %474 = vst [vmem:[#allocation3 + $0x68] sm:$0xf] %v458
    %475 = vst [vmem:[#allocation3 + $0x8c] sm:$0xf] %v459
    %476 = vst [vmem:[#allocation3 + $0xb0] sm:$0xf] %v460
    %477 = vst [vmem:[#allocation3 + $0xd4] sm:$0xf] %v461
    %478 = vst [vmem:[#allocation3 + $0xf8] sm:$0xf] %v462
    %479 = vst [vmem:[#allocation3 + $0x11c] sm:$0xf] %v463
    %480 = vst [vmem:[#allocation3 + $0x140] sm:$0xf] %v464
    %481 = vst [vmem:[#allocation3 + $0x164] sm:$0xf] %v465
    %482 = vst [vmem:[#allocation3 + $0x188] sm:$0xf] %v466
    %483 = vst [vmem:[#allocation3 + $0x1ac] sm:$0xf] %v467
    %484 = vst [vmem:[#allocation3 + $0x1d0] sm:$0xf] %v468
    %485 = vst [vmem:[#allocation3 + $0x1f4] sm:$0xf] %v469
    %486 = vst [vmem:[#allocation3 + $0x218] sm:$0xf] %v470
    %487 = vst [vmem:[#allocation3 + $0x23c] sm:$0xf] %v471
    %v488 = vld [vmem:[#allocation3] sm:$0xff]
    %v489 = vld [vmem:[#allocation3 + $0x8] sm:$0xff]
    %v490 = vld [vmem:[#allocation3 + $0x10] sm:$0xff]
    %v491 = vld [vmem:[#allocation3 + $0x18] sm:$0xff]
    %v492 = vld [vmem:[#allocation3 + $0x20] sm:$0xf]
    %v493 = vld [vmem:[#allocation3 + $0x24] sm:$0xff]
    %v494 = vld [vmem:[#allocation3 + $0x2c] sm:$0xff]
    %v495 = vld [vmem:[#allocation3 + $0x34] sm:$0xff]
    %v496 = vld [vmem:[#allocation3 + $0x3c] sm:$0xff]
    %v497 = vld [vmem:[#allocation3 + $0x44] sm:$0xf]
    %v498 = vld [vmem:[#allocation3 + $0x48] sm:$0xff]
    %v499 = vld [vmem:[#allocation3 + $0x50] sm:$0xff]
    %v500 = vld [vmem:[#allocation3 + $0x58] sm:$0xff]
    %v501 = vld [vmem:[#allocation3 + $0x60] sm:$0xff]
    %v502 = vld [vmem:[#allocation3 + $0x68] sm:$0xf]
    %v503 = vld [vmem:[#allocation3 + $0x6c] sm:$0xff]
    %v504 = vld [vmem:[#allocation3 + $0x74] sm:$0xff]
    %v505 = vld [vmem:[#allocation3 + $0x7c] sm:$0xff]
    %v506 = vld [vmem:[#allocation3 + $0x84] sm:$0xff]
    %v507 = vld [vmem:[#allocation3 + $0x8c] sm:$0xf]
    %v508 = vld [vmem:[#allocation3 + $0x90] sm:$0xff]
    %v509 = vld [vmem:[#allocation3 + $0x98] sm:$0xff]
    %v510 = vld [vmem:[#allocation3 + $0xa0] sm:$0xff]
    %v511 = vld [vmem:[#allocation3 + $0xa8] sm:$0xff]
    %v512 = vld [vmem:[#allocation3 + $0xb0] sm:$0xf]
    %v513 = vld [vmem:[#allocation3 + $0xb4] sm:$0xff]
    %v514 = vld [vmem:[#allocation3 + $0xbc] sm:$0xff]
    %v515 = vld [vmem:[#allocation3 + $0xc4] sm:$0xff]
    %v516 = vld [vmem:[#allocation3 + $0xcc] sm:$0xff]
    %v517 = vld [vmem:[#allocation3 + $0xd4] sm:$0xf]
    %v518 = vld [vmem:[#allocation3 + $0xd8] sm:$0xff]
    %v519 = vld [vmem:[#allocation3 + $0xe0] sm:$0xff]
    %v520 = vld [vmem:[#allocation3 + $0xe8] sm:$0xff]
    %v521 = vld [vmem:[#allocation3 + $0xf0] sm:$0xff]
    %v522 = vld [vmem:[#allocation3 + $0xf8] sm:$0xf]
    %v523 = vld [vmem:[#allocation3 + $0xfc] sm:$0xff]
    %v524 = vld [vmem:[#allocation3 + $0x104] sm:$0xff]
    %v525 = vld [vmem:[#allocation3 + $0x10c] sm:$0xff]
    %v526 = vld [vmem:[#allocation3 + $0x114] sm:$0xff]
    %v527 = vld [vmem:[#allocation3 + $0x11c] sm:$0xf]
    %v528 = vld [vmem:[#allocation3 + $0x120] sm:$0xff]
    %v529 = vld [vmem:[#allocation3 + $0x128] sm:$0xff]
    %v530 = vld [vmem:[#allocation3 + $0x130] sm:$0xff]
    %v531 = vld [vmem:[#allocation3 + $0x138] sm:$0xff]
    %v532 = vld [vmem:[#allocation3 + $0x140] sm:$0xf]
    %v533 = vld [vmem:[#allocation3 + $0x144] sm:$0xff]
    %v534 = vld [vmem:[#allocation3 + $0x14c] sm:$0xff]
    %v535 = vld [vmem:[#allocation3 + $0x154] sm:$0xff]
    %v536 = vld [vmem:[#allocation3 + $0x15c] sm:$0xff]
    %v537 = vld [vmem:[#allocation3 + $0x164] sm:$0xf]
    %v538 = vld [vmem:[#allocation3 + $0x168] sm:$0xff]
    %v539 = vld [vmem:[#allocation3 + $0x170] sm:$0xff]
    %v540 = vld [vmem:[#allocation3 + $0x178] sm:$0xff]
    %v541 = vld [vmem:[#allocation3 + $0x180] sm:$0xff]
    %v542 = vld [vmem:[#allocation3 + $0x188] sm:$0xf]
    %v543 = vld [vmem:[#allocation3 + $0x18c] sm:$0xff]
    %v544 = vld [vmem:[#allocation3 + $0x194] sm:$0xff]
    %v545 = vld [vmem:[#allocation3 + $0x19c] sm:$0xff]
    %v546 = vld [vmem:[#allocation3 + $0x1a4] sm:$0xff]
    %v547 = vld [vmem:[#allocation3 + $0x1ac] sm:$0xf]
    %v548 = vld [vmem:[#allocation3 + $0x1b0] sm:$0xff]
    %v549 = vld [vmem:[#allocation3 + $0x1b8] sm:$0xff]
    %v550 = vld [vmem:[#allocation3 + $0x1c0] sm:$0xff]
    %v551 = vld [vmem:[#allocation3 + $0x1c8] sm:$0xff]
    %v552 = vld [vmem:[#allocation3 + $0x1d0] sm:$0xf]
    %v553 = vld [vmem:[#allocation3 + $0x1d4] sm:$0xff]
    %v554 = vld [vmem:[#allocation3 + $0x1dc] sm:$0xff]
    %v555 = vld [vmem:[#allocation3 + $0x1e4] sm:$0xff]
    %v556 = vld [vmem:[#allocation3 + $0x1ec] sm:$0xff]
    %v557 = vld [vmem:[#allocation3 + $0x1f4] sm:$0xf]
    %v558 = vld [vmem:[#allocation3 + $0x1f8] sm:$0xff]
    %v559 = vld [vmem:[#allocation3 + $0x200] sm:$0xff]
    %v560 = vld [vmem:[#allocation3 + $0x208] sm:$0xff]
    %v561 = vld [vmem:[#allocation3 + $0x210] sm:$0xff]
    %v562 = vld [vmem:[#allocation3 + $0x218] sm:$0xf]
    %v563 = vld [vmem:[#allocation3 + $0x21c] sm:$0xff]
    %v564 = vld [vmem:[#allocation3 + $0x224] sm:$0xff]
    %v565 = vld [vmem:[#allocation3 + $0x22c] sm:$0xff]
    %v566 = vld [vmem:[#allocation3 + $0x234] sm:$0xff]
    %v567 = vld [vmem:[#allocation3 + $0x23c] sm:$0xf]
    %v568 = vld [vmem:[#allocation4] sm:$0xf]
    %v569 = vld [vmem:[#allocation4 + $0x4] sm:$0xf]
    %v570 = vld [vmem:[#allocation4 + $0x8] sm:$0xf]
    %v571 = vld [vmem:[#allocation4 + $0xc] sm:$0xf]
    %v572 = vld [vmem:[#allocation4 + $0x10] sm:$0xf]
    %v573 = vld [vmem:[#allocation4 + $0x14] sm:$0xf]
    %v574 = vld [vmem:[#allocation4 + $0x18] sm:$0xf]
    %v575 = vld [vmem:[#allocation4 + $0x1c] sm:$0xf]
    %v576 = vld [vmem:[#allocation4 + $0x20] sm:$0xf]
    %v577 = vld [vmem:[#allocation4 + $0x24] sm:$0xf]
    %v578 = vld [vmem:[#allocation4 + $0x28] sm:$0xf]
    %v579 = vld [vmem:[#allocation4 + $0x2c] sm:$0xf]
    %v580 = vld [vmem:[#allocation4 + $0x30] sm:$0xf]
    %v581 = vld [vmem:[#allocation4 + $0x34] sm:$0xf]
    %v582 = vld [vmem:[#allocation4 + $0x38] sm:$0xf]
    %v583 = vld [vmem:[#allocation4 + $0x3c] sm:$0xf]
    %v584 = vld [vmem:[#allocation4 + $0x40] sm:$0xf]
    %v585 = vld [vmem:[#allocation4 + $0x44] sm:$0xf]
    %v586 = vld [vmem:[#allocation4 + $0x48] sm:$0xf]
    %v587 = vld [vmem:[#allocation4 + $0x4c] sm:$0xf]
    %v588 = vld [vmem:[#allocation4 + $0x50] sm:$0xf]
    %v589 = vld [vmem:[#allocation4 + $0x54] sm:$0xf]
    %v590 = vld [vmem:[#allocation4 + $0x58] sm:$0xf]
    %v591 = vld [vmem:[#allocation4 + $0x5c] sm:$0xf]
    %v592 = vld [vmem:[#allocation4 + $0x60] sm:$0xf]
    %v593 = vld [vmem:[#allocation4 + $0x64] sm:$0xf]
    %v594 = vld [vmem:[#allocation4 + $0x68] sm:$0xf]
    %v595 = vld [vmem:[#allocation4 + $0x6c] sm:$0xf]
    %v596 = vld [vmem:[#allocation4 + $0x70] sm:$0xf]
    %v597 = vld [vmem:[#allocation4 + $0x74] sm:$0xf]
    %v598 = vld [vmem:[#allocation4 + $0x78] sm:$0xf]
    %v599 = vld [vmem:[#allocation4 + $0x7c] sm:$0xf]
    %v600 = vld [vmem:[#allocation4 + $0x80] sm:$0xf]
    %v601 = vld [vmem:[#allocation4 + $0x84] sm:$0xf]
    %v602 = vld [vmem:[#allocation4 + $0x88] sm:$0xf]
    %v603 = vld [vmem:[#allocation4 + $0x8c] sm:$0xf]
    %v604 = vld [vmem:[#allocation4 + $0x90] sm:$0xf]
    %v605 = vld [vmem:[#allocation4 + $0x94] sm:$0xf]
    %v606 = vld [vmem:[#allocation4 + $0x98] sm:$0xf]
    %v607 = vld [vmem:[#allocation4 + $0x9c] sm:$0xf]
    %v608 = vld [vmem:[#allocation4 + $0xa0] sm:$0xf]
    %v609 = vld [vmem:[#allocation4 + $0xa4] sm:$0xf]
    %v610 = vld [vmem:[#allocation4 + $0xa8] sm:$0xf]
    %v611 = vld [vmem:[#allocation4 + $0xac] sm:$0xf]
    %v612 = vld [vmem:[#allocation4 + $0xb0] sm:$0xf]
    %v613 = vld [vmem:[#allocation4 + $0xb4] sm:$0xf]
    %v614 = vld [vmem:[#allocation4 + $0xb8] sm:$0xf]
    %v615 = vld [vmem:[#allocation4 + $0xbc] sm:$0xf]
    %v616 = vld [vmem:[#allocation4 + $0xc0] sm:$0xf]
    %v617 = vld [vmem:[#allocation4 + $0xc4] sm:$0xf]
    %v618 = vld [vmem:[#allocation4 + $0xc8] sm:$0xf]
    %v619 = vld [vmem:[#allocation4 + $0xcc] sm:$0xf]
    %v620 = vld [vmem:[#allocation4 + $0xd0] sm:$0xf]
    %v621 = vld [vmem:[#allocation4 + $0xd4] sm:$0xf]
    %v622 = vld [vmem:[#allocation4 + $0xd8] sm:$0xf]
    %v623 = vld [vmem:[#allocation4 + $0xdc] sm:$0xf]
    %v624 = vld [vmem:[#allocation4 + $0xe0] sm:$0xf]
    %v625 = vld [vmem:[#allocation4 + $0xe4] sm:$0xf]
    %v626 = vld [vmem:[#allocation4 + $0xe8] sm:$0xf]
    %v627 = vld [vmem:[#allocation4 + $0xec] sm:$0xf]
    %v628 = vld [vmem:[#allocation4 + $0xf0] sm:$0xf]
    %v629 = vld [vmem:[#allocation4 + $0xf4] sm:$0xf]
    %v630 = vld [vmem:[#allocation4 + $0xf8] sm:$0xf]
    %v631 = vld [vmem:[#allocation4 + $0xfc] sm:$0xf]
    %v632 = vld [vmem:[#allocation4 + $0x100] sm:$0xf]
    %v633 = vld [vmem:[#allocation4 + $0x104] sm:$0xf]
    %v634 = vld [vmem:[#allocation4 + $0x108] sm:$0xf]
    %v635 = vld [vmem:[#allocation4 + $0x10c] sm:$0xf]
    %v636 = vld [vmem:[#allocation4 + $0x110] sm:$0xf]
    %v637 = vld [vmem:[#allocation4 + $0x114] sm:$0xf]
    %v638 = vld [vmem:[#allocation4 + $0x118] sm:$0xf]
    %v639 = vld [vmem:[#allocation4 + $0x11c] sm:$0xf]
    %v640 = vld [vmem:[#allocation4 + $0x120] sm:$0xf]
    %v641 = vld [vmem:[#allocation4 + $0x124] sm:$0xf]
    %v642 = vld [vmem:[#allocation4 + $0x128] sm:$0xf]
    %v643 = vld [vmem:[#allocation4 + $0x12c] sm:$0xf]
    %v644 = vld [vmem:[#allocation4 + $0x130] sm:$0xf]
    %v645 = vld [vmem:[#allocation4 + $0x134] sm:$0xf]
    %v646 = vld [vmem:[#allocation4 + $0x138] sm:$0xf]
    %v647 = vld [vmem:[#allocation4 + $0x13c] sm:$0xf]
    %v648 = vld [vmem:[#allocation4 + $0x140] sm:$0xf]
    %v649 = vld [vmem:[#allocation4 + $0x144] sm:$0xf]
    %v650 = vld [vmem:[#allocation4 + $0x148] sm:$0xf]
    %v651 = vld [vmem:[#allocation4 + $0x14c] sm:$0xf]
    %v652 = vld [vmem:[#allocation4 + $0x150] sm:$0xf]
    %v653 = vld [vmem:[#allocation4 + $0x154] sm:$0xf]
    %v654 = vld [vmem:[#allocation4 + $0x158] sm:$0xf]
    %v655 = vld [vmem:[#allocation4 + $0x15c] sm:$0xf]
    %v656 = vld [vmem:[#allocation4 + $0x160] sm:$0xf]
    %v657 = vld [vmem:[#allocation4 + $0x164] sm:$0xf]
    %v658 = vld [vmem:[#allocation4 + $0x168] sm:$0xf]
    %v659 = vld [vmem:[#allocation4 + $0x16c] sm:$0xf]
    %v660 = vld [vmem:[#allocation4 + $0x170] sm:$0xf]
    %v661 = vld [vmem:[#allocation4 + $0x174] sm:$0xf]
    %v662 = vld [vmem:[#allocation4 + $0x178] sm:$0xf]
    %v663 = vld [vmem:[#allocation4 + $0x17c] sm:$0xf]
    %v664 = vld [vmem:[#allocation4 + $0x180] sm:$0xf]
    %v665 = vld [vmem:[#allocation4 + $0x184] sm:$0xf]
    %v666 = vld [vmem:[#allocation4 + $0x188] sm:$0xf]
    %v667 = vld [vmem:[#allocation4 + $0x18c] sm:$0xf]
    %v668 = vld [vmem:[#allocation4 + $0x190] sm:$0xf]
    %v669 = vld [vmem:[#allocation4 + $0x194] sm:$0xf]
    %v670 = vld [vmem:[#allocation4 + $0x198] sm:$0xf]
    %v671 = vld [vmem:[#allocation4 + $0x19c] sm:$0xf]
    %v672 = vld [vmem:[#allocation4 + $0x1a0] sm:$0xf]
    %v673 = vld [vmem:[#allocation4 + $0x1a4] sm:$0xf]
    %v674 = vld [vmem:[#allocation4 + $0x1a8] sm:$0xf]
    %v675 = vld [vmem:[#allocation4 + $0x1ac] sm:$0xf]
    %v676 = vld [vmem:[#allocation4 + $0x1b0] sm:$0xf]
    %v677 = vld [vmem:[#allocation4 + $0x1b4] sm:$0xf]
    %v678 = vld [vmem:[#allocation4 + $0x1b8] sm:$0xf]
    %v679 = vld [vmem:[#allocation4 + $0x1bc] sm:$0xf]
    %v680 = vld [vmem:[#allocation4 + $0x1c0] sm:$0xf]
    %v681 = vld [vmem:[#allocation4 + $0x1c4] sm:$0xf]
    %v682 = vld [vmem:[#allocation4 + $0x1c8] sm:$0xf]
    %v683 = vld [vmem:[#allocation4 + $0x1cc] sm:$0xf]
    %v684 = vld [vmem:[#allocation4 + $0x1d0] sm:$0xf]
    %v685 = vld [vmem:[#allocation4 + $0x1d4] sm:$0xf]
    %v686 = vld [vmem:[#allocation4 + $0x1d8] sm:$0xf]
    %v687 = vld [vmem:[#allocation4 + $0x1dc] sm:$0xf]
    %v688 = vld [vmem:[#allocation4 + $0x1e0] sm:$0xf]
    %v689 = vld [vmem:[#allocation4 + $0x1e4] sm:$0xf]
    %v690 = vld [vmem:[#allocation4 + $0x1e8] sm:$0xf]
    %v691 = vld [vmem:[#allocation4 + $0x1ec] sm:$0xf]
    %v692 = vld [vmem:[#allocation4 + $0x1f0] sm:$0xf]
    %v693 = vld [vmem:[#allocation4 + $0x1f4] sm:$0xf]
    %v694 = vld [vmem:[#allocation4 + $0x1f8] sm:$0xf]
    %v695 = vld [vmem:[#allocation4 + $0x1fc] sm:$0xf]
    %v696 = vld [vmem:[#allocation4 + $0x200] sm:$0xf]
    %v697 = vld [vmem:[#allocation4 + $0x204] sm:$0xf]
    %v698 = vld [vmem:[#allocation4 + $0x208] sm:$0xf]
    %v699 = vld [vmem:[#allocation4 + $0x20c] sm:$0xf]
    %v700 = vld [vmem:[#allocation4 + $0x210] sm:$0xf]
    %v701 = vld [vmem:[#allocation4 + $0x214] sm:$0xf]
    %v702 = vld [vmem:[#allocation4 + $0x218] sm:$0xf]
    %v703 = vld [vmem:[#allocation4 + $0x21c] sm:$0xf]
    %v704 = vld [vmem:[#allocation4 + $0x220] sm:$0xf]
    %v705 = vld [vmem:[#allocation4 + $0x224] sm:$0xf]
    %v706 = vld [vmem:[#allocation4 + $0x228] sm:$0xf]
    %v707 = vld [vmem:[#allocation4 + $0x22c] sm:$0xf]
    %v708 = vld [vmem:[#allocation4 + $0x230] sm:$0xf]
    %v709 = vld [vmem:[#allocation4 + $0x234] sm:$0xf]
    %v710 = vld [vmem:[#allocation4 + $0x238] sm:$0xf]
    %v711 = vld [vmem:[#allocation4 + $0x23c] sm:$0xf]
    %v792 = vunpack.c.l.b16 %v488
    %v793 = vunpack.c.h.b16 %v488
    %v794 = vunpack.c.l.b16 %v489
    %v795 = vunpack.c.h.b16 %v489
    %v796 = vunpack.c.l.b16 %v490
    %v797 = vunpack.c.h.b16 %v490
    %v798 = vunpack.c.l.b16 %v491
    %v799 = vunpack.c.h.b16 %v491
    %v800 = vunpack.c.l.b16 %v492
    %v801 = vunpack.c.l.b16 %v493
    %v802 = vunpack.c.h.b16 %v493
    %v803 = vunpack.c.l.b16 %v494
    %v804 = vunpack.c.h.b16 %v494
    %v805 = vunpack.c.l.b16 %v495
    %v806 = vunpack.c.h.b16 %v495
    %v807 = vunpack.c.l.b16 %v496
    %v808 = vunpack.c.h.b16 %v496
    %v809 = vunpack.c.l.b16 %v497
    %v810 = vunpack.c.l.b16 %v498
    %v811 = vunpack.c.h.b16 %v498
    %v812 = vunpack.c.l.b16 %v499
    %v813 = vunpack.c.h.b16 %v499
    %v814 = vunpack.c.l.b16 %v500
    %v815 = vunpack.c.h.b16 %v500
    %v816 = vunpack.c.l.b16 %v501
    %v817 = vunpack.c.h.b16 %v501
    %v818 = vunpack.c.l.b16 %v502
    %v819 = vunpack.c.l.b16 %v503
    %v820 = vunpack.c.h.b16 %v503
    %v821 = vunpack.c.l.b16 %v504
    %v822 = vunpack.c.h.b16 %v504
    %v823 = vunpack.c.l.b16 %v505
    %v824 = vunpack.c.h.b16 %v505
    %v825 = vunpack.c.l.b16 %v506
    %v826 = vunpack.c.h.b16 %v506
    %v827 = vunpack.c.l.b16 %v507
    %v828 = vunpack.c.l.b16 %v508
    %v829 = vunpack.c.h.b16 %v508
    %v830 = vunpack.c.l.b16 %v509
    %v831 = vunpack.c.h.b16 %v509
    %v832 = vunpack.c.l.b16 %v510
    %v833 = vunpack.c.h.b16 %v510
    %v834 = vunpack.c.l.b16 %v511
    %v835 = vunpack.c.h.b16 %v511
    %v836 = vunpack.c.l.b16 %v512
    %v837 = vunpack.c.l.b16 %v513
    %v838 = vunpack.c.h.b16 %v513
    %v839 = vunpack.c.l.b16 %v514
    %v840 = vunpack.c.h.b16 %v514
    %v841 = vunpack.c.l.b16 %v515
    %v842 = vunpack.c.h.b16 %v515
    %v843 = vunpack.c.l.b16 %v516
    %v844 = vunpack.c.h.b16 %v516
    %v845 = vunpack.c.l.b16 %v517
    %v846 = vunpack.c.l.b16 %v518
    %v847 = vunpack.c.h.b16 %v518
    %v848 = vunpack.c.l.b16 %v519
    %v849 = vunpack.c.h.b16 %v519
    %v850 = vunpack.c.l.b16 %v520
    %v851 = vunpack.c.h.b16 %v520
    %v852 = vunpack.c.l.b16 %v521
    %v853 = vunpack.c.h.b16 %v521
    %v854 = vunpack.c.l.b16 %v522
    %v855 = vunpack.c.l.b16 %v523
    %v856 = vunpack.c.h.b16 %v523
    %v857 = vunpack.c.l.b16 %v524
    %v858 = vunpack.c.h.b16 %v524
    %v859 = vunpack.c.l.b16 %v525
    %v860 = vunpack.c.h.b16 %v525
    %v861 = vunpack.c.l.b16 %v526
    %v862 = vunpack.c.h.b16 %v526
    %v863 = vunpack.c.l.b16 %v527
    %v864 = vunpack.c.l.b16 %v528
    %v865 = vunpack.c.h.b16 %v528
    %v866 = vunpack.c.l.b16 %v529
    %v867 = vunpack.c.h.b16 %v529
    %v868 = vunpack.c.l.b16 %v530
    %v869 = vunpack.c.h.b16 %v530
    %v870 = vunpack.c.l.b16 %v531
    %v871 = vunpack.c.h.b16 %v531
    %v872 = vunpack.c.l.b16 %v532
    %v873 = vunpack.c.l.b16 %v533
    %v874 = vunpack.c.h.b16 %v533
    %v875 = vunpack.c.l.b16 %v534
    %v876 = vunpack.c.h.b16 %v534
    %v877 = vunpack.c.l.b16 %v535
    %v878 = vunpack.c.h.b16 %v535
    %v879 = vunpack.c.l.b16 %v536
    %v880 = vunpack.c.h.b16 %v536
    %v881 = vunpack.c.l.b16 %v537
    %v882 = vunpack.c.l.b16 %v538
    %v883 = vunpack.c.h.b16 %v538
    %v884 = vunpack.c.l.b16 %v539
    %v885 = vunpack.c.h.b16 %v539
    %v886 = vunpack.c.l.b16 %v540
    %v887 = vunpack.c.h.b16 %v540
    %v888 = vunpack.c.l.b16 %v541
    %v889 = vunpack.c.h.b16 %v541
    %v890 = vunpack.c.l.b16 %v542
    %v891 = vunpack.c.l.b16 %v543
    %v892 = vunpack.c.h.b16 %v543
    %v893 = vunpack.c.l.b16 %v544
    %v894 = vunpack.c.h.b16 %v544
    %v895 = vunpack.c.l.b16 %v545
    %v896 = vunpack.c.h.b16 %v545
    %v897 = vunpack.c.l.b16 %v546
    %v898 = vunpack.c.h.b16 %v546
    %v899 = vunpack.c.l.b16 %v547
    %v900 = vunpack.c.l.b16 %v548
    %v901 = vunpack.c.h.b16 %v548
    %v902 = vunpack.c.l.b16 %v549
    %v903 = vunpack.c.h.b16 %v549
    %v904 = vunpack.c.l.b16 %v550
    %v905 = vunpack.c.h.b16 %v550
    %v906 = vunpack.c.l.b16 %v551
    %v907 = vunpack.c.h.b16 %v551
    %v908 = vunpack.c.l.b16 %v552
    %v909 = vunpack.c.l.b16 %v553
    %v910 = vunpack.c.h.b16 %v553
    %v911 = vunpack.c.l.b16 %v554
    %v912 = vunpack.c.h.b16 %v554
    %v913 = vunpack.c.l.b16 %v555
    %v914 = vunpack.c.h.b16 %v555
    %v915 = vunpack.c.l.b16 %v556
    %v916 = vunpack.c.h.b16 %v556
    %v917 = vunpack.c.l.b16 %v557
    %v918 = vunpack.c.l.b16 %v558
    %v919 = vunpack.c.h.b16 %v558
    %v920 = vunpack.c.l.b16 %v559
    %v921 = vunpack.c.h.b16 %v559
    %v922 = vunpack.c.l.b16 %v560
    %v923 = vunpack.c.h.b16 %v560
    %v924 = vunpack.c.l.b16 %v561
    %v925 = vunpack.c.h.b16 %v561
    %v926 = vunpack.c.l.b16 %v562
    %v927 = vunpack.c.l.b16 %v563
    %v928 = vunpack.c.h.b16 %v563
    %v929 = vunpack.c.l.b16 %v564
    %v930 = vunpack.c.h.b16 %v564
    %v931 = vunpack.c.l.b16 %v565
    %v932 = vunpack.c.h.b16 %v565
    %v933 = vunpack.c.l.b16 %v566
    %v934 = vunpack.c.h.b16 %v566
    %v935 = vunpack.c.l.b16 %v567
    %v936 = vpack.c.b16 %v801, %v792
    %v937 = vpack.c.b16 %v802, %v793
    %v938 = vpack.c.b16 %v803, %v794
    %v939 = vpack.c.b16 %v804, %v795
    %v940 = vpack.c.b16 %v805, %v796
    %v941 = vpack.c.b16 %v806, %v797
    %v942 = vpack.c.b16 %v807, %v798
    %v943 = vpack.c.b16 %v808, %v799
    %v944 = vpack.c.b16 %v809, %v800
    %v945 = vpack.c.b16 %v819, %v810
    %v946 = vpack.c.b16 %v820, %v811
    %v947 = vpack.c.b16 %v821, %v812
    %v948 = vpack.c.b16 %v822, %v813
    %v949 = vpack.c.b16 %v823, %v814
    %v950 = vpack.c.b16 %v824, %v815
    %v951 = vpack.c.b16 %v825, %v816
    %v952 = vpack.c.b16 %v826, %v817
    %v953 = vpack.c.b16 %v827, %v818
    %v954 = vpack.c.b16 %v837, %v828
    %v955 = vpack.c.b16 %v838, %v829
    %v956 = vpack.c.b16 %v839, %v830
    %v957 = vpack.c.b16 %v840, %v831
    %v958 = vpack.c.b16 %v841, %v832
    %v959 = vpack.c.b16 %v842, %v833
    %v960 = vpack.c.b16 %v843, %v834
    %v961 = vpack.c.b16 %v844, %v835
    %v962 = vpack.c.b16 %v845, %v836
    %v963 = vpack.c.b16 %v855, %v846
    %v964 = vpack.c.b16 %v856, %v847
    %v965 = vpack.c.b16 %v857, %v848
    %v966 = vpack.c.b16 %v858, %v849
    %v967 = vpack.c.b16 %v859, %v850
    %v968 = vpack.c.b16 %v860, %v851
    %v969 = vpack.c.b16 %v861, %v852
    %v970 = vpack.c.b16 %v862, %v853
    %v971 = vpack.c.b16 %v863, %v854
    %v972 = vpack.c.b16 %v873, %v864
    %v973 = vpack.c.b16 %v874, %v865
    %v974 = vpack.c.b16 %v875, %v866
    %v975 = vpack.c.b16 %v876, %v867
    %v976 = vpack.c.b16 %v877, %v868
    %v977 = vpack.c.b16 %v878, %v869
    %v978 = vpack.c.b16 %v879, %v870
    %v979 = vpack.c.b16 %v880, %v871
    %v980 = vpack.c.b16 %v881, %v872
    %v981 = vpack.c.b16 %v891, %v882
    %v982 = vpack.c.b16 %v892, %v883
    %v983 = vpack.c.b16 %v893, %v884
    %v984 = vpack.c.b16 %v894, %v885
    %v985 = vpack.c.b16 %v895, %v886
    %v986 = vpack.c.b16 %v896, %v887
    %v987 = vpack.c.b16 %v897, %v888
    %v988 = vpack.c.b16 %v898, %v889
    %v989 = vpack.c.b16 %v899, %v890
    %v990 = vpack.c.b16 %v909, %v900
    %v991 = vpack.c.b16 %v910, %v901
    %v992 = vpack.c.b16 %v911, %v902
    %v993 = vpack.c.b16 %v912, %v903
    %v994 = vpack.c.b16 %v913, %v904
    %v995 = vpack.c.b16 %v914, %v905
    %v996 = vpack.c.b16 %v915, %v906
    %v997 = vpack.c.b16 %v916, %v907
    %v998 = vpack.c.b16 %v917, %v908
    %v999 = vpack.c.b16 %v927, %v918
    %v1000 = vpack.c.b16 %v928, %v919
    %v1001 = vpack.c.b16 %v929, %v920
    %v1002 = vpack.c.b16 %v930, %v921
    %v1003 = vpack.c.b16 %v931, %v922
    %v1004 = vpack.c.b16 %v932, %v923
    %v1005 = vpack.c.b16 %v933, %v924
    %v1006 = vpack.c.b16 %v934, %v925
    %v1007 = vpack.c.b16 %v935, %v926
    %v1224 = vunpack.c.l.b16 %v568
    %v1225 = vunpack.c.l.b16 %v569
    %v1226 = vunpack.c.l.b16 %v570
    %v1227 = vunpack.c.l.b16 %v571
    %v1228 = vunpack.c.l.b16 %v572
    %v1229 = vunpack.c.l.b16 %v573
    %v1230 = vunpack.c.l.b16 %v574
    %v1231 = vunpack.c.l.b16 %v575
    %v1232 = vunpack.c.l.b16 %v576
    %v1233 = vunpack.c.l.b16 %v577
    %v1234 = vunpack.c.l.b16 %v578
    %v1235 = vunpack.c.l.b16 %v579
    %v1236 = vunpack.c.l.b16 %v580
    %v1237 = vunpack.c.l.b16 %v581
    %v1238 = vunpack.c.l.b16 %v582
    %v1239 = vunpack.c.l.b16 %v583
    %v1240 = vunpack.c.l.b16 %v584
    %v1241 = vunpack.c.l.b16 %v585
    %v1242 = vunpack.c.l.b16 %v586
    %v1243 = vunpack.c.l.b16 %v587
    %v1244 = vunpack.c.l.b16 %v588
    %v1245 = vunpack.c.l.b16 %v589
    %v1246 = vunpack.c.l.b16 %v590
    %v1247 = vunpack.c.l.b16 %v591
    %v1248 = vunpack.c.l.b16 %v592
    %v1249 = vunpack.c.l.b16 %v593
    %v1250 = vunpack.c.l.b16 %v594
    %v1251 = vunpack.c.l.b16 %v595
    %v1252 = vunpack.c.l.b16 %v596
    %v1253 = vunpack.c.l.b16 %v597
    %v1254 = vunpack.c.l.b16 %v598
    %v1255 = vunpack.c.l.b16 %v599
    %v1256 = vunpack.c.l.b16 %v600
    %v1257 = vunpack.c.l.b16 %v601
    %v1258 = vunpack.c.l.b16 %v602
    %v1259 = vunpack.c.l.b16 %v603
    %v1260 = vunpack.c.l.b16 %v604
    %v1261 = vunpack.c.l.b16 %v605
    %v1262 = vunpack.c.l.b16 %v606
    %v1263 = vunpack.c.l.b16 %v607
    %v1264 = vunpack.c.l.b16 %v608
    %v1265 = vunpack.c.l.b16 %v609
    %v1266 = vunpack.c.l.b16 %v610
    %v1267 = vunpack.c.l.b16 %v611
    %v1268 = vunpack.c.l.b16 %v612
    %v1269 = vunpack.c.l.b16 %v613
    %v1270 = vunpack.c.l.b16 %v614
    %v1271 = vunpack.c.l.b16 %v615
    %v1272 = vunpack.c.l.b16 %v616
    %v1273 = vunpack.c.l.b16 %v617
    %v1274 = vunpack.c.l.b16 %v618
    %v1275 = vunpack.c.l.b16 %v619
    %v1276 = vunpack.c.l.b16 %v620
    %v1277 = vunpack.c.l.b16 %v621
    %v1278 = vunpack.c.l.b16 %v622
    %v1279 = vunpack.c.l.b16 %v623
    %v1280 = vunpack.c.l.b16 %v624
    %v1281 = vunpack.c.l.b16 %v625
    %v1282 = vunpack.c.l.b16 %v626
    %v1283 = vunpack.c.l.b16 %v627
    %v1284 = vunpack.c.l.b16 %v628
    %v1285 = vunpack.c.l.b16 %v629
    %v1286 = vunpack.c.l.b16 %v630
    %v1287 = vunpack.c.l.b16 %v631
    %v1288 = vunpack.c.l.b16 %v632
    %v1289 = vunpack.c.l.b16 %v633
    %v1290 = vunpack.c.l.b16 %v634
    %v1291 = vunpack.c.l.b16 %v635
    %v1292 = vunpack.c.l.b16 %v636
    %v1293 = vunpack.c.l.b16 %v637
    %v1294 = vunpack.c.l.b16 %v638
    %v1295 = vunpack.c.l.b16 %v639
    %v1296 = vunpack.c.l.b16 %v640
    %v1297 = vunpack.c.l.b16 %v641
    %v1298 = vunpack.c.l.b16 %v642
    %v1299 = vunpack.c.l.b16 %v643
    %v1300 = vunpack.c.l.b16 %v644
    %v1301 = vunpack.c.l.b16 %v645
    %v1302 = vunpack.c.l.b16 %v646
    %v1303 = vunpack.c.l.b16 %v647
    %v1304 = vunpack.c.l.b16 %v648
    %v1305 = vunpack.c.l.b16 %v649
    %v1306 = vunpack.c.l.b16 %v650
    %v1307 = vunpack.c.l.b16 %v651
    %v1308 = vunpack.c.l.b16 %v652
    %v1309 = vunpack.c.l.b16 %v653
    %v1310 = vunpack.c.l.b16 %v654
    %v1311 = vunpack.c.l.b16 %v655
    %v1312 = vunpack.c.l.b16 %v656
    %v1313 = vunpack.c.l.b16 %v657
    %v1314 = vunpack.c.l.b16 %v658
    %v1315 = vunpack.c.l.b16 %v659
    %v1316 = vunpack.c.l.b16 %v660
    %v1317 = vunpack.c.l.b16 %v661
    %v1318 = vunpack.c.l.b16 %v662
    %v1319 = vunpack.c.l.b16 %v663
    %v1320 = vunpack.c.l.b16 %v664
    %v1321 = vunpack.c.l.b16 %v665
    %v1322 = vunpack.c.l.b16 %v666
    %v1323 = vunpack.c.l.b16 %v667
    %v1324 = vunpack.c.l.b16 %v668
    %v1325 = vunpack.c.l.b16 %v669
    %v1326 = vunpack.c.l.b16 %v670
    %v1327 = vunpack.c.l.b16 %v671
    %v1328 = vunpack.c.l.b16 %v672
    %v1329 = vunpack.c.l.b16 %v673
    %v1330 = vunpack.c.l.b16 %v674
    %v1331 = vunpack.c.l.b16 %v675
    %v1332 = vunpack.c.l.b16 %v676
    %v1333 = vunpack.c.l.b16 %v677
    %v1334 = vunpack.c.l.b16 %v678
    %v1335 = vunpack.c.l.b16 %v679
    %v1336 = vunpack.c.l.b16 %v680
    %v1337 = vunpack.c.l.b16 %v681
    %v1338 = vunpack.c.l.b16 %v682
    %v1339 = vunpack.c.l.b16 %v683
    %v1340 = vunpack.c.l.b16 %v684
    %v1341 = vunpack.c.l.b16 %v685
    %v1342 = vunpack.c.l.b16 %v686
    %v1343 = vunpack.c.l.b16 %v687
    %v1344 = vunpack.c.l.b16 %v688
    %v1345 = vunpack.c.l.b16 %v689
    %v1346 = vunpack.c.l.b16 %v690
    %v1347 = vunpack.c.l.b16 %v691
    %v1348 = vunpack.c.l.b16 %v692
    %v1349 = vunpack.c.l.b16 %v693
    %v1350 = vunpack.c.l.b16 %v694
    %v1351 = vunpack.c.l.b16 %v695
    %v1352 = vunpack.c.l.b16 %v696
    %v1353 = vunpack.c.l.b16 %v697
    %v1354 = vunpack.c.l.b16 %v698
    %v1355 = vunpack.c.l.b16 %v699
    %v1356 = vunpack.c.l.b16 %v700
    %v1357 = vunpack.c.l.b16 %v701
    %v1358 = vunpack.c.l.b16 %v702
    %v1359 = vunpack.c.l.b16 %v703
    %v1360 = vunpack.c.l.b16 %v704
    %v1361 = vunpack.c.l.b16 %v705
    %v1362 = vunpack.c.l.b16 %v706
    %v1363 = vunpack.c.l.b16 %v707
    %v1364 = vunpack.c.l.b16 %v708
    %v1365 = vunpack.c.l.b16 %v709
    %v1366 = vunpack.c.l.b16 %v710
    %v1367 = vunpack.c.l.b16 %v711
    %v1368 = vpack.c.b16 %v1225, %v1224
    %v1369 = vpack.c.b16 %v1227, %v1226
    %v1370 = vpack.c.b16 %v1229, %v1228
    %v1371 = vpack.c.b16 %v1231, %v1230
    %v1372 = vpack.c.b16 %v1233, %v1232
    %v1373 = vpack.c.b16 %v1235, %v1234
    %v1374 = vpack.c.b16 %v1237, %v1236
    %v1375 = vpack.c.b16 %v1239, %v1238
    %v1376 = vpack.c.b16 %v1241, %v1240
    %v1377 = vpack.c.b16 %v1243, %v1242
    %v1378 = vpack.c.b16 %v1245, %v1244
    %v1379 = vpack.c.b16 %v1247, %v1246
    %v1380 = vpack.c.b16 %v1249, %v1248
    %v1381 = vpack.c.b16 %v1251, %v1250
    %v1382 = vpack.c.b16 %v1253, %v1252
    %v1383 = vpack.c.b16 %v1255, %v1254
    %v1384 = vpack.c.b16 %v1257, %v1256
    %v1385 = vpack.c.b16 %v1259, %v1258
    %v1386 = vpack.c.b16 %v1261, %v1260
    %v1387 = vpack.c.b16 %v1263, %v1262
    %v1388 = vpack.c.b16 %v1265, %v1264
    %v1389 = vpack.c.b16 %v1267, %v1266
    %v1390 = vpack.c.b16 %v1269, %v1268
    %v1391 = vpack.c.b16 %v1271, %v1270
    %v1392 = vpack.c.b16 %v1273, %v1272
    %v1393 = vpack.c.b16 %v1275, %v1274
    %v1394 = vpack.c.b16 %v1277, %v1276
    %v1395 = vpack.c.b16 %v1279, %v1278
    %v1396 = vpack.c.b16 %v1281, %v1280
    %v1397 = vpack.c.b16 %v1283, %v1282
    %v1398 = vpack.c.b16 %v1285, %v1284
    %v1399 = vpack.c.b16 %v1287, %v1286
    %v1400 = vpack.c.b16 %v1289, %v1288
    %v1401 = vpack.c.b16 %v1291, %v1290
    %v1402 = vpack.c.b16 %v1293, %v1292
    %v1403 = vpack.c.b16 %v1295, %v1294
    %v1404 = vpack.c.b16 %v1297, %v1296
    %v1405 = vpack.c.b16 %v1299, %v1298
    %v1406 = vpack.c.b16 %v1301, %v1300
    %v1407 = vpack.c.b16 %v1303, %v1302
    %v1408 = vpack.c.b16 %v1305, %v1304
    %v1409 = vpack.c.b16 %v1307, %v1306
    %v1410 = vpack.c.b16 %v1309, %v1308
    %v1411 = vpack.c.b16 %v1311, %v1310
    %v1412 = vpack.c.b16 %v1313, %v1312
    %v1413 = vpack.c.b16 %v1315, %v1314
    %v1414 = vpack.c.b16 %v1317, %v1316
    %v1415 = vpack.c.b16 %v1319, %v1318
    %v1416 = vpack.c.b16 %v1321, %v1320
    %v1417 = vpack.c.b16 %v1323, %v1322
    %v1418 = vpack.c.b16 %v1325, %v1324
    %v1419 = vpack.c.b16 %v1327, %v1326
    %v1420 = vpack.c.b16 %v1329, %v1328
    %v1421 = vpack.c.b16 %v1331, %v1330
    %v1422 = vpack.c.b16 %v1333, %v1332
    %v1423 = vpack.c.b16 %v1335, %v1334
    %v1424 = vpack.c.b16 %v1337, %v1336
    %v1425 = vpack.c.b16 %v1339, %v1338
    %v1426 = vpack.c.b16 %v1341, %v1340
    %v1427 = vpack.c.b16 %v1343, %v1342
    %v1428 = vpack.c.b16 %v1345, %v1344
    %v1429 = vpack.c.b16 %v1347, %v1346
    %v1430 = vpack.c.b16 %v1349, %v1348
    %v1431 = vpack.c.b16 %v1351, %v1350
    %v1432 = vpack.c.b16 %v1353, %v1352
    %v1433 = vpack.c.b16 %v1355, %v1354
    %v1434 = vpack.c.b16 %v1357, %v1356
    %v1435 = vpack.c.b16 %v1359, %v1358
    %v1436 = vpack.c.b16 %v1361, %v1360
    %v1437 = vpack.c.b16 %v1363, %v1362
    %v1438 = vpack.c.b16 %v1365, %v1364
    %v1439 = vpack.c.b16 %v1367, %v1366
    %1512 = vmatpush.bf16.msra.mxu0 %v1375
    %1513 = vmatpush.bf16.msra.mxu0 %v1374
    %1514 = vmatpush.bf16.msra.mxu0 %v1373
    %1515 = vmatpush.bf16.msra.mxu0 %v1372
    %1516 = vmatpush.bf16.msra.mxu0 %v1371
    %1517 = vmatpush.bf16.msra.mxu0 %v1370
    %1518 = vmatpush.bf16.msra.mxu0 %v1369
    %1519 = vmatpush.bf16.msra.mxu0 %v1368
    %1520 = vmatmul.bf16.gmra.mxu0 %v936
    %v1521 = vpop.f32.mrf.mxu0
    %v1522 = vadd.f32 0.0, %v1521
    %v1523 = vpop.f32.mrf.mxu0
    %v1524 = vadd.f32 0.0, %v1523
    %1525 = vmatmul.bf16.gmra.mxu0 %v945
    %v1526 = vpop.f32.mrf.mxu0
    %v1527 = vadd.f32 0.0, %v1526
    %v1528 = vpop.f32.mrf.mxu0
    %v1529 = vadd.f32 0.0, %v1528
    %1530 = vmatmul.bf16.gmra.mxu0 %v954
    %v1531 = vpop.f32.mrf.mxu0
    %v1532 = vadd.f32 0.0, %v1531
    %v1533 = vpop.f32.mrf.mxu0
    %v1534 = vadd.f32 0.0, %v1533
    %1535 = vmatmul.bf16.gmra.mxu0 %v963
    %v1536 = vpop.f32.mrf.mxu0
    %v1537 = vadd.f32 0.0, %v1536
    %v1538 = vpop.f32.mrf.mxu0
    %v1539 = vadd.f32 0.0, %v1538
    %1540 = vmatmul.bf16.gmra.mxu0 %v972
    %v1541 = vpop.f32.mrf.mxu0
    %v1542 = vadd.f32 0.0, %v1541
    %v1543 = vpop.f32.mrf.mxu0
    %v1544 = vadd.f32 0.0, %v1543
    %1545 = vmatmul.bf16.gmra.mxu0 %v981
    %v1546 = vpop.f32.mrf.mxu0
    %v1547 = vadd.f32 0.0, %v1546
    %v1548 = vpop.f32.mrf.mxu0
    %v1549 = vadd.f32 0.0, %v1548
    %1550 = vmatmul.bf16.gmra.mxu0 %v990
    %v1551 = vpop.f32.mrf.mxu0
    %v1552 = vadd.f32 0.0, %v1551
    %v1553 = vpop.f32.mrf.mxu0
    %v1554 = vadd.f32 0.0, %v1553
    %1555 = vmatmul.bf16.gmra.mxu0 %v999
    %v1556 = vpop.f32.mrf.mxu0
    %v1557 = vadd.f32 0.0, %v1556
    %v1558 = vpop.f32.mrf.mxu0
    %v1559 = vadd.f32 0.0, %v1558
    %1560 = vdwg.mxu0
    %1561 = vmatpush.bf16.msra.mxu0 %v1383
    %1562 = vmatpush.bf16.msra.mxu0 %v1382
    %1563 = vmatpush.bf16.msra.mxu0 %v1381
    %1564 = vmatpush.bf16.msra.mxu0 %v1380
    %1565 = vmatpush.bf16.msra.mxu0 %v1379
    %1566 = vmatpush.bf16.msra.mxu0 %v1378
    %1567 = vmatpush.bf16.msra.mxu0 %v1377
    %1568 = vmatpush.bf16.msra.mxu0 %v1376
    %1569 = vmatmul.bf16.gmra.mxu0 %v937
    %v1570 = vpop.f32.mrf.mxu0
    %v1571 = vadd.f32 %v1522, %v1570
    %v1572 = vpop.f32.mrf.mxu0
    %v1573 = vadd.f32 %v1524, %v1572
    %1574 = vmatmul.bf16.gmra.mxu0 %v946
    %v1575 = vpop.f32.mrf.mxu0
    %v1576 = vadd.f32 %v1527, %v1575
    %v1577 = vpop.f32.mrf.mxu0
    %v1578 = vadd.f32 %v1529, %v1577
    %1579 = vmatmul.bf16.gmra.mxu0 %v955
    %v1580 = vpop.f32.mrf.mxu0
    %v1581 = vadd.f32 %v1532, %v1580
    %v1582 = vpop.f32.mrf.mxu0
    %v1583 = vadd.f32 %v1534, %v1582
    %1584 = vmatmul.bf16.gmra.mxu0 %v964
    %v1585 = vpop.f32.mrf.mxu0
    %v1586 = vadd.f32 %v1537, %v1585
    %v1587 = vpop.f32.mrf.mxu0
    %v1588 = vadd.f32 %v1539, %v1587
    %1589 = vmatmul.bf16.gmra.mxu0 %v973
    %v1590 = vpop.f32.mrf.mxu0
    %v1591 = vadd.f32 %v1542, %v1590
    %v1592 = vpop.f32.mrf.mxu0
    %v1593 = vadd.f32 %v1544, %v1592
    %1594 = vmatmul.bf16.gmra.mxu0 %v982
    %v1595 = vpop.f32.mrf.mxu0
    %v1596 = vadd.f32 %v1547, %v1595
    %v1597 = vpop.f32.mrf.mxu0
    %v1598 = vadd.f32 %v1549, %v1597
    %1599 = vmatmul.bf16.gmra.mxu0 %v991
    %v1600 = vpop.f32.mrf.mxu0
    %v1601 = vadd.f32 %v1552, %v1600
    %v1602 = vpop.f32.mrf.mxu0
    %v1603 = vadd.f32 %v1554, %v1602
    %1604 = vmatmul.bf16.gmra.mxu0 %v1000
    %v1605 = vpop.f32.mrf.mxu0
    %v1606 = vadd.f32 %v1557, %v1605
    %v1607 = vpop.f32.mrf.mxu0
    %v1608 = vadd.f32 %v1559, %v1607
    %1609 = vdwg.mxu0
    %1610 = vmatpush.bf16.msra.mxu0 %v1391
    %1611 = vmatpush.bf16.msra.mxu0 %v1390
    %1612 = vmatpush.bf16.msra.mxu0 %v1389
    %1613 = vmatpush.bf16.msra.mxu0 %v1388
    %1614 = vmatpush.bf16.msra.mxu0 %v1387
    %1615 = vmatpush.bf16.msra.mxu0 %v1386
    %1616 = vmatpush.bf16.msra.mxu0 %v1385
    %1617 = vmatpush.bf16.msra.mxu0 %v1384
    %1618 = vmatmul.bf16.gmra.mxu0 %v938
    %v1619 = vpop.f32.mrf.mxu0
    %v1620 = vadd.f32 %v1571, %v1619
    %v1621 = vpop.f32.mrf.mxu0
    %v1622 = vadd.f32 %v1573, %v1621
    %1623 = vmatmul.bf16.gmra.mxu0 %v947
    %v1624 = vpop.f32.mrf.mxu0
    %v1625 = vadd.f32 %v1576, %v1624
    %v1626 = vpop.f32.mrf.mxu0
    %v1627 = vadd.f32 %v1578, %v1626
    %1628 = vmatmul.bf16.gmra.mxu0 %v956
    %v1629 = vpop.f32.mrf.mxu0
    %v1630 = vadd.f32 %v1581, %v1629
    %v1631 = vpop.f32.mrf.mxu0
    %v1632 = vadd.f32 %v1583, %v1631
    %1633 = vmatmul.bf16.gmra.mxu0 %v965
    %v1634 = vpop.f32.mrf.mxu0
    %v1635 = vadd.f32 %v1586, %v1634
    %v1636 = vpop.f32.mrf.mxu0
    %v1637 = vadd.f32 %v1588, %v1636
    %1638 = vmatmul.bf16.gmra.mxu0 %v974
    %v1639 = vpop.f32.mrf.mxu0
    %v1640 = vadd.f32 %v1591, %v1639
    %v1641 = vpop.f32.mrf.mxu0
    %v1642 = vadd.f32 %v1593, %v1641
    %1643 = vmatmul.bf16.gmra.mxu0 %v983
    %v1644 = vpop.f32.mrf.mxu0
    %v1645 = vadd.f32 %v1596, %v1644
    %v1646 = vpop.f32.mrf.mxu0
    %v1647 = vadd.f32 %v1598, %v1646
    %1648 = vmatmul.bf16.gmra.mxu0 %v992
    %v1649 = vpop.f32.mrf.mxu0
    %v1650 = vadd.f32 %v1601, %v1649
    %v1651 = vpop.f32.mrf.mxu0
    %v1652 = vadd.f32 %v1603, %v1651
    %1653 = vmatmul.bf16.gmra.mxu0 %v1001
    %v1654 = vpop.f32.mrf.mxu0
    %v1655 = vadd.f32 %v1606, %v1654
    %v1656 = vpop.f32.mrf.mxu0
    %v1657 = vadd.f32 %v1608, %v1656
    %1658 = vdwg.mxu0
    %1659 = vmatpush.bf16.msra.mxu0 %v1399
    %1660 = vmatpush.bf16.msra.mxu0 %v1398
    %1661 = vmatpush.bf16.msra.mxu0 %v1397
    %1662 = vmatpush.bf16.msra.mxu0 %v1396
    %1663 = vmatpush.bf16.msra.mxu0 %v1395
    %1664 = vmatpush.bf16.msra.mxu0 %v1394
    %1665 = vmatpush.bf16.msra.mxu0 %v1393
    %1666 = vmatpush.bf16.msra.mxu0 %v1392
    %1667 = vmatmul.bf16.gmra.mxu0 %v939
    %v1668 = vpop.f32.mrf.mxu0
    %v1669 = vadd.f32 %v1620, %v1668
    %v1670 = vpop.f32.mrf.mxu0
    %v1671 = vadd.f32 %v1622, %v1670
    %1672 = vmatmul.bf16.gmra.mxu0 %v948
    %v1673 = vpop.f32.mrf.mxu0
    %v1674 = vadd.f32 %v1625, %v1673
    %v1675 = vpop.f32.mrf.mxu0
    %v1676 = vadd.f32 %v1627, %v1675
    %1677 = vmatmul.bf16.gmra.mxu0 %v957
    %v1678 = vpop.f32.mrf.mxu0
    %v1679 = vadd.f32 %v1630, %v1678
    %v1680 = vpop.f32.mrf.mxu0
    %v1681 = vadd.f32 %v1632, %v1680
    %1682 = vmatmul.bf16.gmra.mxu0 %v966
    %v1683 = vpop.f32.mrf.mxu0
    %v1684 = vadd.f32 %v1635, %v1683
    %v1685 = vpop.f32.mrf.mxu0
    %v1686 = vadd.f32 %v1637, %v1685
    %1687 = vmatmul.bf16.gmra.mxu0 %v975
    %v1688 = vpop.f32.mrf.mxu0
    %v1689 = vadd.f32 %v1640, %v1688
    %v1690 = vpop.f32.mrf.mxu0
    %v1691 = vadd.f32 %v1642, %v1690
    %1692 = vmatmul.bf16.gmra.mxu0 %v984
    %v1693 = vpop.f32.mrf.mxu0
    %v1694 = vadd.f32 %v1645, %v1693
    %v1695 = vpop.f32.mrf.mxu0
    %v1696 = vadd.f32 %v1647, %v1695
    %1697 = vmatmul.bf16.gmra.mxu0 %v993
    %v1698 = vpop.f32.mrf.mxu0
    %v1699 = vadd.f32 %v1650, %v1698
    %v1700 = vpop.f32.mrf.mxu0
    %v1701 = vadd.f32 %v1652, %v1700
    %1702 = vmatmul.bf16.gmra.mxu0 %v1002
    %v1703 = vpop.f32.mrf.mxu0
    %v1704 = vadd.f32 %v1655, %v1703
    %v1705 = vpop.f32.mrf.mxu0
    %v1706 = vadd.f32 %v1657, %v1705
    %1707 = vdwg.mxu0
    %1708 = vmatpush.bf16.msra.mxu0 %v1407
    %1709 = vmatpush.bf16.msra.mxu0 %v1406
    %1710 = vmatpush.bf16.msra.mxu0 %v1405
    %1711 = vmatpush.bf16.msra.mxu0 %v1404
    %1712 = vmatpush.bf16.msra.mxu0 %v1403
    %1713 = vmatpush.bf16.msra.mxu0 %v1402
    %1714 = vmatpush.bf16.msra.mxu0 %v1401
    %1715 = vmatpush.bf16.msra.mxu0 %v1400
    %1716 = vmatmul.bf16.gmra.mxu0 %v940
    %v1717 = vpop.f32.mrf.mxu0
    %v1718 = vadd.f32 %v1669, %v1717
    %v1719 = vpop.f32.mrf.mxu0
    %v1720 = vadd.f32 %v1671, %v1719
    %1721 = vmatmul.bf16.gmra.mxu0 %v949
    %v1722 = vpop.f32.mrf.mxu0
    %v1723 = vadd.f32 %v1674, %v1722
    %v1724 = vpop.f32.mrf.mxu0
    %v1725 = vadd.f32 %v1676, %v1724
    %1726 = vmatmul.bf16.gmra.mxu0 %v958
    %v1727 = vpop.f32.mrf.mxu0
    %v1728 = vadd.f32 %v1679, %v1727
    %v1729 = vpop.f32.mrf.mxu0
    %v1730 = vadd.f32 %v1681, %v1729
    %1731 = vmatmul.bf16.gmra.mxu0 %v967
    %v1732 = vpop.f32.mrf.mxu0
    %v1733 = vadd.f32 %v1684, %v1732
    %v1734 = vpop.f32.mrf.mxu0
    %v1735 = vadd.f32 %v1686, %v1734
    %1736 = vmatmul.bf16.gmra.mxu0 %v976
    %v1737 = vpop.f32.mrf.mxu0
    %v1738 = vadd.f32 %v1689, %v1737
    %v1739 = vpop.f32.mrf.mxu0
    %v1740 = vadd.f32 %v1691, %v1739
    %1741 = vmatmul.bf16.gmra.mxu0 %v985
    %v1742 = vpop.f32.mrf.mxu0
    %v1743 = vadd.f32 %v1694, %v1742
    %v1744 = vpop.f32.mrf.mxu0
    %v1745 = vadd.f32 %v1696, %v1744
    %1746 = vmatmul.bf16.gmra.mxu0 %v994
    %v1747 = vpop.f32.mrf.mxu0
    %v1748 = vadd.f32 %v1699, %v1747
    %v1749 = vpop.f32.mrf.mxu0
    %v1750 = vadd.f32 %v1701, %v1749
    %1751 = vmatmul.bf16.gmra.mxu0 %v1003
    %v1752 = vpop.f32.mrf.mxu0
    %v1753 = vadd.f32 %v1704, %v1752
    %v1754 = vpop.f32.mrf.mxu0
    %v1755 = vadd.f32 %v1706, %v1754
    %1756 = vdwg.mxu0
    %1757 = vmatpush.bf16.msra.mxu0 %v1415
    %1758 = vmatpush.bf16.msra.mxu0 %v1414
    %1759 = vmatpush.bf16.msra.mxu0 %v1413
    %1760 = vmatpush.bf16.msra.mxu0 %v1412
    %1761 = vmatpush.bf16.msra.mxu0 %v1411
    %1762 = vmatpush.bf16.msra.mxu0 %v1410
    %1763 = vmatpush.bf16.msra.mxu0 %v1409
    %1764 = vmatpush.bf16.msra.mxu0 %v1408
    %1765 = vmatmul.bf16.gmra.mxu0 %v941
    %v1766 = vpop.f32.mrf.mxu0
    %v1767 = vadd.f32 %v1718, %v1766
    %v1768 = vpop.f32.mrf.mxu0
    %v1769 = vadd.f32 %v1720, %v1768
    %1770 = vmatmul.bf16.gmra.mxu0 %v950
    %v1771 = vpop.f32.mrf.mxu0
    %v1772 = vadd.f32 %v1723, %v1771
    %v1773 = vpop.f32.mrf.mxu0
    %v1774 = vadd.f32 %v1725, %v1773
    %1775 = vmatmul.bf16.gmra.mxu0 %v959
    %v1776 = vpop.f32.mrf.mxu0
    %v1777 = vadd.f32 %v1728, %v1776
    %v1778 = vpop.f32.mrf.mxu0
    %v1779 = vadd.f32 %v1730, %v1778
    %1780 = vmatmul.bf16.gmra.mxu0 %v968
    %v1781 = vpop.f32.mrf.mxu0
    %v1782 = vadd.f32 %v1733, %v1781
    %v1783 = vpop.f32.mrf.mxu0
    %v1784 = vadd.f32 %v1735, %v1783
    %1785 = vmatmul.bf16.gmra.mxu0 %v977
    %v1786 = vpop.f32.mrf.mxu0
    %v1787 = vadd.f32 %v1738, %v1786
    %v1788 = vpop.f32.mrf.mxu0
    %v1789 = vadd.f32 %v1740, %v1788
    %1790 = vmatmul.bf16.gmra.mxu0 %v986
    %v1791 = vpop.f32.mrf.mxu0
    %v1792 = vadd.f32 %v1743, %v1791
    %v1793 = vpop.f32.mrf.mxu0
    %v1794 = vadd.f32 %v1745, %v1793
    %1795 = vmatmul.bf16.gmra.mxu0 %v995
    %v1796 = vpop.f32.mrf.mxu0
    %v1797 = vadd.f32 %v1748, %v1796
    %v1798 = vpop.f32.mrf.mxu0
    %v1799 = vadd.f32 %v1750, %v1798
    %1800 = vmatmul.bf16.gmra.mxu0 %v1004
    %v1801 = vpop.f32.mrf.mxu0
    %v1802 = vadd.f32 %v1753, %v1801
    %v1803 = vpop.f32.mrf.mxu0
    %v1804 = vadd.f32 %v1755, %v1803
    %1805 = vdwg.mxu0
    %1806 = vmatpush.bf16.msra.mxu0 %v1423
    %1807 = vmatpush.bf16.msra.mxu0 %v1422
    %1808 = vmatpush.bf16.msra.mxu0 %v1421
    %1809 = vmatpush.bf16.msra.mxu0 %v1420
    %1810 = vmatpush.bf16.msra.mxu0 %v1419
    %1811 = vmatpush.bf16.msra.mxu0 %v1418
    %1812 = vmatpush.bf16.msra.mxu0 %v1417
    %1813 = vmatpush.bf16.msra.mxu0 %v1416
    %1814 = vmatmul.bf16.gmra.mxu0 %v942
    %v1815 = vpop.f32.mrf.mxu0
    %v1816 = vadd.f32 %v1767, %v1815
    %v1817 = vpop.f32.mrf.mxu0
    %v1818 = vadd.f32 %v1769, %v1817
    %1819 = vmatmul.bf16.gmra.mxu0 %v951
    %v1820 = vpop.f32.mrf.mxu0
    %v1821 = vadd.f32 %v1772, %v1820
    %v1822 = vpop.f32.mrf.mxu0
    %v1823 = vadd.f32 %v1774, %v1822
    %1824 = vmatmul.bf16.gmra.mxu0 %v960
    %v1825 = vpop.f32.mrf.mxu0
    %v1826 = vadd.f32 %v1777, %v1825
    %v1827 = vpop.f32.mrf.mxu0
    %v1828 = vadd.f32 %v1779, %v1827
    %1829 = vmatmul.bf16.gmra.mxu0 %v969
    %v1830 = vpop.f32.mrf.mxu0
    %v1831 = vadd.f32 %v1782, %v1830
    %v1832 = vpop.f32.mrf.mxu0
    %v1833 = vadd.f32 %v1784, %v1832
    %1834 = vmatmul.bf16.gmra.mxu0 %v978
    %v1835 = vpop.f32.mrf.mxu0
    %v1836 = vadd.f32 %v1787, %v1835
    %v1837 = vpop.f32.mrf.mxu0
    %v1838 = vadd.f32 %v1789, %v1837
    %1839 = vmatmul.bf16.gmra.mxu0 %v987
    %v1840 = vpop.f32.mrf.mxu0
    %v1841 = vadd.f32 %v1792, %v1840
    %v1842 = vpop.f32.mrf.mxu0
    %v1843 = vadd.f32 %v1794, %v1842
    %1844 = vmatmul.bf16.gmra.mxu0 %v996
    %v1845 = vpop.f32.mrf.mxu0
    %v1846 = vadd.f32 %v1797, %v1845
    %v1847 = vpop.f32.mrf.mxu0
    %v1848 = vadd.f32 %v1799, %v1847
    %1849 = vmatmul.bf16.gmra.mxu0 %v1005
    %v1850 = vpop.f32.mrf.mxu0
    %v1851 = vadd.f32 %v1802, %v1850
    %v1852 = vpop.f32.mrf.mxu0
    %v1853 = vadd.f32 %v1804, %v1852
    %1854 = vdwg.mxu0
    %1855 = vmatpush.bf16.msra.mxu0 %v1431
    %1856 = vmatpush.bf16.msra.mxu0 %v1430
    %1857 = vmatpush.bf16.msra.mxu0 %v1429
    %1858 = vmatpush.bf16.msra.mxu0 %v1428
    %1859 = vmatpush.bf16.msra.mxu0 %v1427
    %1860 = vmatpush.bf16.msra.mxu0 %v1426
    %1861 = vmatpush.bf16.msra.mxu0 %v1425
    %1862 = vmatpush.bf16.msra.mxu0 %v1424
    %1863 = vmatmul.bf16.gmra.mxu0 %v943
    %v1864 = vpop.f32.mrf.mxu0
    %v1865 = vadd.f32 %v1816, %v1864
    %v1866 = vpop.f32.mrf.mxu0
    %v1867 = vadd.f32 %v1818, %v1866
    %1868 = vmatmul.bf16.gmra.mxu0 %v952
    %v1869 = vpop.f32.mrf.mxu0
    %v1870 = vadd.f32 %v1821, %v1869
    %v1871 = vpop.f32.mrf.mxu0
    %v1872 = vadd.f32 %v1823, %v1871
    %1873 = vmatmul.bf16.gmra.mxu0 %v961
    %v1874 = vpop.f32.mrf.mxu0
    %v1875 = vadd.f32 %v1826, %v1874
    %v1876 = vpop.f32.mrf.mxu0
    %v1877 = vadd.f32 %v1828, %v1876
    %1878 = vmatmul.bf16.gmra.mxu0 %v970
    %v1879 = vpop.f32.mrf.mxu0
    %v1880 = vadd.f32 %v1831, %v1879
    %v1881 = vpop.f32.mrf.mxu0
    %v1882 = vadd.f32 %v1833, %v1881
    %1883 = vmatmul.bf16.gmra.mxu0 %v979
    %v1884 = vpop.f32.mrf.mxu0
    %v1885 = vadd.f32 %v1836, %v1884
    %v1886 = vpop.f32.mrf.mxu0
    %v1887 = vadd.f32 %v1838, %v1886
    %1888 = vmatmul.bf16.gmra.mxu0 %v988
    %v1889 = vpop.f32.mrf.mxu0
    %v1890 = vadd.f32 %v1841, %v1889
    %v1891 = vpop.f32.mrf.mxu0
    %v1892 = vadd.f32 %v1843, %v1891
    %1893 = vmatmul.bf16.gmra.mxu0 %v997
    %v1894 = vpop.f32.mrf.mxu0
    %v1895 = vadd.f32 %v1846, %v1894
    %v1896 = vpop.f32.mrf.mxu0
    %v1897 = vadd.f32 %v1848, %v1896
    %1898 = vmatmul.bf16.gmra.mxu0 %v1006
    %v1899 = vpop.f32.mrf.mxu0
    %v1900 = vadd.f32 %v1851, %v1899
    %v1901 = vpop.f32.mrf.mxu0
    %v1902 = vadd.f32 %v1853, %v1901
    %1903 = vdwg.mxu0
    %1904 = vmatpush.bf16.msra.mxu0 %v1439
    %1905 = vmatpush.bf16.msra.mxu0 %v1438
    %1906 = vmatpush.bf16.msra.mxu0 %v1437
    %1907 = vmatpush.bf16.msra.mxu0 %v1436
    %1908 = vmatpush.bf16.msra.mxu0 %v1435
    %1909 = vmatpush.bf16.msra.mxu0 %v1434
    %1910 = vmatpush.bf16.msra.mxu0 %v1433
    %1911 = vmatpush.bf16.msra.mxu0 %v1432
    %1912 = vmatmul.bf16.gmra.mxu0 %v944
    %v1913 = vpop.f32.mrf.mxu0
    %v1914 = vadd.f32 %v1865, %v1913
    %v1915 = vpop.f32.mrf.mxu0
    %v1916 = vadd.f32 %v1867, %v1915
    %1917 = vmatmul.bf16.gmra.mxu0 %v953
    %v1918 = vpop.f32.mrf.mxu0
    %v1919 = vadd.f32 %v1870, %v1918
    %v1920 = vpop.f32.mrf.mxu0
    %v1921 = vadd.f32 %v1872, %v1920
    %1922 = vmatmul.bf16.gmra.mxu0 %v962
    %v1923 = vpop.f32.mrf.mxu0
    %v1924 = vadd.f32 %v1875, %v1923
    %v1925 = vpop.f32.mrf.mxu0
    %v1926 = vadd.f32 %v1877, %v1925
    %1927 = vmatmul.bf16.gmra.mxu0 %v971
    %v1928 = vpop.f32.mrf.mxu0
    %v1929 = vadd.f32 %v1880, %v1928
    %v1930 = vpop.f32.mrf.mxu0
    %v1931 = vadd.f32 %v1882, %v1930
    %1932 = vmatmul.bf16.gmra.mxu0 %v980
    %v1933 = vpop.f32.mrf.mxu0
    %v1934 = vadd.f32 %v1885, %v1933
    %v1935 = vpop.f32.mrf.mxu0
    %v1936 = vadd.f32 %v1887, %v1935
    %1937 = vmatmul.bf16.gmra.mxu0 %v989
    %v1938 = vpop.f32.mrf.mxu0
    %v1939 = vadd.f32 %v1890, %v1938
    %v1940 = vpop.f32.mrf.mxu0
    %v1941 = vadd.f32 %v1892, %v1940
    %1942 = vmatmul.bf16.gmra.mxu0 %v998
    %v1943 = vpop.f32.mrf.mxu0
    %v1944 = vadd.f32 %v1895, %v1943
    %v1945 = vpop.f32.mrf.mxu0
    %v1946 = vadd.f32 %v1897, %v1945
    %1947 = vmatmul.bf16.gmra.mxu0 %v1007
    %v1948 = vpop.f32.mrf.mxu0
    %v1949 = vadd.f32 %v1900, %v1948
    %v1950 = vpop.f32.mrf.mxu0
    %v1951 = vadd.f32 %v1902, %v1950
    %1952 = vdwg.mxu0
    %v1953 = vmax.f32 %v1914, 0.0
    %v1954 = vmax.f32 %v1916, 0.0
    %v1955 = vmax.f32 %v1919, 0.0
    %v1956 = vmax.f32 %v1921, 0.0
    %v1957 = vmax.f32 %v1924, 0.0
    %v1958 = vmax.f32 %v1926, 0.0
    %v1959 = vmax.f32 %v1929, 0.0
    %v1960 = vmax.f32 %v1931, 0.0
    %v1961 = vmax.f32 %v1934, 0.0
    %v1962 = vmax.f32 %v1936, 0.0
    %v1963 = vmax.f32 %v1939, 0.0
    %v1964 = vmax.f32 %v1941, 0.0
    %v1965 = vmax.f32 %v1944, 0.0
    %v1966 = vmax.f32 %v1946, 0.0
    %v1967 = vmax.f32 %v1949, 0.0
    %v1968 = vmax.f32 %v1951, 0.0
    %1969 = vst [vmem:[#allocation2] sm:$0xf] 0
    %1970 = vst [vmem:[#allocation2 + $0x4] sm:$0x1] 0
    %1971 = vst [vmem:[#allocation2 + $0x50] sm:$0xf] 0
    %1972 = vst [vmem:[#allocation2 + $0x54] sm:$0x1] 0
    %s1973 = scalar_lea.vmem [#allocation2], 72
    %1974 = vst [vmem:[%s1973] sm:$0xf] 0
    %1975 = vst [vmem:[%s1973 + $0x4] sm:$0x1] 0
    %1976 = vst [vmem:[%s1973 + $0x50] sm:$0xf] 0
    %1977 = vst [vmem:[%s1973 + $0x54] sm:$0x1] 0
    %vm1978 = vcmask 1040384
    %vm1979 = vsmask.f32 256
    %vm1980 = vmand %vm1978, %vm1979
    %v1981 = vld [vmem:[#allocation2] sm:$0x1]
    %v1982 = vsel %vm1980, 0, %v1981
    %1983 = vst [vmem:[#allocation2] sm:$0x1] %v1982
    %v1984 = vld [vmem:[#allocation2 + $0x8] sm:$0x1]
    %v1985 = vsel %vm1980, 0, %v1984
    %1986 = vst [vmem:[#allocation2 + $0x8] sm:$0x1] %v1985
    %v1987 = vld [vmem:[#allocation2 + $0x10] sm:$0x1]
    %v1988 = vsel %vm1980, 0, %v1987
    %1989 = vst [vmem:[#allocation2 + $0x10] sm:$0x1] %v1988
    %v1990 = vld [vmem:[#allocation2 + $0x18] sm:$0x1]
    %v1991 = vsel %vm1980, 0, %v1990
    %1992 = vst [vmem:[#allocation2 + $0x18] sm:$0x1] %v1991
    %v1993 = vld [vmem:[#allocation2 + $0x20] sm:$0x1]
    %v1994 = vsel %vm1980, 0, %v1993
    %1995 = vst [vmem:[#allocation2 + $0x20] sm:$0x1] %v1994
    %v1996 = vld [vmem:[#allocation2 + $0x28] sm:$0x1]
    %v1997 = vsel %vm1980, 0, %v1996
    %1998 = vst [vmem:[#allocation2 + $0x28] sm:$0x1] %v1997
    %v1999 = vld [vmem:[#allocation2 + $0x30] sm:$0x1]
    %v2000 = vsel %vm1980, 0, %v1999
    %2001 = vst [vmem:[#allocation2 + $0x30] sm:$0x1] %v2000
    %v2002 = vld [vmem:[#allocation2 + $0x38] sm:$0x1]
    %v2003 = vsel %vm1980, 0, %v2002
    %2004 = vst [vmem:[#allocation2 + $0x38] sm:$0x1] %v2003
    %v2005 = vld [vmem:[#allocation2 + $0x40] sm:$0x1]
    %v2006 = vsel %vm1980, 0, %v2005
    %2007 = vst [vmem:[#allocation2 + $0x40] sm:$0x1] %v2006
    %v2008 = vld [vmem:[#allocation2 + $0x48] sm:$0x1]
    %v2009 = vsel %vm1980, 0, %v2008
    %2010 = vst [vmem:[#allocation2 + $0x48] sm:$0x1] %v2009
    %v2011 = vld [vmem:[#allocation2 + $0x50] sm:$0x1]
    %v2012 = vsel %vm1980, 0, %v2011
    %2013 = vst [vmem:[#allocation2 + $0x50] sm:$0x1] %v2012
    %v2014 = vld [vmem:[#allocation2 + $0x58] sm:$0x1]
    %v2015 = vsel %vm1980, 0, %v2014
    %2016 = vst [vmem:[#allocation2 + $0x58] sm:$0x1] %v2015
    %v2017 = vld [vmem:[#allocation2 + $0x60] sm:$0x1]
    %v2018 = vsel %vm1980, 0, %v2017
    %2019 = vst [vmem:[#allocation2 + $0x60] sm:$0x1] %v2018
    %v2020 = vld [vmem:[#allocation2 + $0x68] sm:$0x1]
    %v2021 = vsel %vm1980, 0, %v2020
    %2022 = vst [vmem:[#allocation2 + $0x68] sm:$0x1] %v2021
    %v2023 = vld [vmem:[#allocation2 + $0x70] sm:$0x1]
    %v2024 = vsel %vm1980, 0, %v2023
    %2025 = vst [vmem:[#allocation2 + $0x70] sm:$0x1] %v2024
    %v2026 = vld [vmem:[#allocation2 + $0x78] sm:$0x1]
    %v2027 = vsel %vm1980, 0, %v2026
    %2028 = vst [vmem:[#allocation2 + $0x78] sm:$0x1] %v2027
    %v2029 = vld [vmem:[#allocation2 + $0x80] sm:$0x1]
    %v2030 = vsel %vm1980, 0, %v2029
    %2031 = vst [vmem:[#allocation2 + $0x80] sm:$0x1] %v2030
    %v2032 = vld [vmem:[#allocation2 + $0x88] sm:$0x1]
    %v2033 = vsel %vm1980, 0, %v2032
    %2034 = vst [vmem:[#allocation2 + $0x88] sm:$0x1] %v2033
    %v2035 = vld [vmem:[#allocation2 + $0x90] sm:$0x1]
    %v2036 = vsel %vm1980, 0, %v2035
    %2037 = vst [vmem:[#allocation2 + $0x90] sm:$0x1] %v2036
    %v2038 = vld [vmem:[#allocation2 + $0x98] sm:$0x1]
    %v2039 = vsel %vm1980, 0, %v2038
    %2040 = vst [vmem:[#allocation2 + $0x98] sm:$0x1] %v2039
    %vm2041 = vsmask.f32 7938
    %vm2042 = vmand %vm1978, %vm2041
    %v2043 = vld [vmem:[#allocation2 + $0x4] sm:$0x1]
    %v2044 = vsel %vm2042, 0, %v2043
    %2045 = vst [vmem:[#allocation2 + $0x4] sm:$0x1] %v2044
    %v2046 = vld [vmem:[#allocation2 + $0xc] sm:$0x1]
    %v2047 = vsel %vm2042, 0, %v2046
    %2048 = vst [vmem:[#allocation2 + $0xc] sm:$0x1] %v2047
    %v2049 = vld [vmem:[#allocation2 + $0x14] sm:$0x1]
    %v2050 = vsel %vm2042, 0, %v2049
    %2051 = vst [vmem:[#allocation2 + $0x14] sm:$0x1] %v2050
    %v2052 = vld [vmem:[#allocation2 + $0x1c] sm:$0x1]
    %v2053 = vsel %vm2042, 0, %v2052
    %2054 = vst [vmem:[#allocation2 + $0x1c] sm:$0x1] %v2053
    %v2055 = vld [vmem:[#allocation2 + $0x24] sm:$0x1]
    %v2056 = vsel %vm2042, 0, %v2055
    %2057 = vst [vmem:[#allocation2 + $0x24] sm:$0x1] %v2056
    %v2058 = vld [vmem:[#allocation2 + $0x2c] sm:$0x1]
    %v2059 = vsel %vm2042, 0, %v2058
    %2060 = vst [vmem:[#allocation2 + $0x2c] sm:$0x1] %v2059
    %v2061 = vld [vmem:[#allocation2 + $0x34] sm:$0x1]
    %v2062 = vsel %vm2042, 0, %v2061
    %2063 = vst [vmem:[#allocation2 + $0x34] sm:$0x1] %v2062
    %v2064 = vld [vmem:[#allocation2 + $0x3c] sm:$0x1]
    %v2065 = vsel %vm2042, 0, %v2064
    %2066 = vst [vmem:[#allocation2 + $0x3c] sm:$0x1] %v2065
    %v2067 = vld [vmem:[#allocation2 + $0x44] sm:$0x1]
    %v2068 = vsel %vm2042, 0, %v2067
    %2069 = vst [vmem:[#allocation2 + $0x44] sm:$0x1] %v2068
    %v2070 = vld [vmem:[#allocation2 + $0x4c] sm:$0x1]
    %v2071 = vsel %vm2042, 0, %v2070
    %2072 = vst [vmem:[#allocation2 + $0x4c] sm:$0x1] %v2071
    %v2073 = vld [vmem:[#allocation2 + $0x54] sm:$0x1]
    %v2074 = vsel %vm2042, 0, %v2073
    %2075 = vst [vmem:[#allocation2 + $0x54] sm:$0x1] %v2074
    %v2076 = vld [vmem:[#allocation2 + $0x5c] sm:$0x1]
    %v2077 = vsel %vm2042, 0, %v2076
    %2078 = vst [vmem:[#allocation2 + $0x5c] sm:$0x1] %v2077
    %v2079 = vld [vmem:[#allocation2 + $0x64] sm:$0x1]
    %v2080 = vsel %vm2042, 0, %v2079
    %2081 = vst [vmem:[#allocation2 + $0x64] sm:$0x1] %v2080
    %v2082 = vld [vmem:[#allocation2 + $0x6c] sm:$0x1]
    %v2083 = vsel %vm2042, 0, %v2082
    %2084 = vst [vmem:[#allocation2 + $0x6c] sm:$0x1] %v2083
    %v2085 = vld [vmem:[#allocation2 + $0x74] sm:$0x1]
    %v2086 = vsel %vm2042, 0, %v2085
    %2087 = vst [vmem:[#allocation2 + $0x74] sm:$0x1] %v2086
    %v2088 = vld [vmem:[#allocation2 + $0x7c] sm:$0x1]
    %v2089 = vsel %vm2042, 0, %v2088
    %2090 = vst [vmem:[#allocation2 + $0x7c] sm:$0x1] %v2089
    %v2091 = vld [vmem:[#allocation2 + $0x84] sm:$0x1]
    %v2092 = vsel %vm2042, 0, %v2091
    %2093 = vst [vmem:[#allocation2 + $0x84] sm:$0x1] %v2092
    %v2094 = vld [vmem:[#allocation2 + $0x8c] sm:$0x1]
    %v2095 = vsel %vm2042, 0, %v2094
    %2096 = vst [vmem:[#allocation2 + $0x8c] sm:$0x1] %v2095
    %v2097 = vld [vmem:[#allocation2 + $0x94] sm:$0x1]
    %v2098 = vsel %vm2042, 0, %v2097
    %2099 = vst [vmem:[#allocation2 + $0x94] sm:$0x1] %v2098
    %v2100 = vld [vmem:[#allocation2 + $0x9c] sm:$0x1]
    %v2101 = vsel %vm2042, 0, %v2100
    %2102 = vst [vmem:[#allocation2 + $0x9c] sm:$0x1] %v2101
    %v2103 = vpack.c.bf16 %v1953, %v1953
    %v2104 = vpack.c.bf16 %v1954, %v1954
    %v2105 = vpack.c.bf16 %v1955, %v1955
    %v2106 = vpack.c.bf16 %v1956, %v1956
    %v2107 = vpack.c.bf16 %v1957, %v1957
    %v2108 = vpack.c.bf16 %v1958, %v1958
    %v2109 = vpack.c.bf16 %v1959, %v1959
    %v2110 = vpack.c.bf16 %v1960, %v1960
    %v2111 = vpack.c.bf16 %v1961, %v1961
    %v2112 = vpack.c.bf16 %v1962, %v1962
    %v2113 = vpack.c.bf16 %v1963, %v1963
    %v2114 = vpack.c.bf16 %v1964, %v1964
    %v2115 = vpack.c.bf16 %v1965, %v1965
    %v2116 = vpack.c.bf16 %v1966, %v1966
    %v2117 = vpack.c.bf16 %v1967, %v1967
    %v2118 = vpack.c.bf16 %v1968, %v1968
    %v2120 = vshrl.u32 %v2103, 16
    %v2122 = vrot.slane %v2120, 7
    %v2123 = vshll.u32 %v2103, 16
    %v2125 = vor.u32 %v2122, %v2123
    %v2126 = vrot.slane %v2122, 4
    %v2128 = vshrl.u32 %v2104, 16
    %v2130 = vrot.slane %v2128, 7
    %v2131 = vshll.u32 %v2104, 16
    %v2133 = vor.u32 %v2130, %v2131
    %v2134 = vrot.slane %v2130, 4
    %v2136 = vshrl.u32 %v2105, 16
    %v2138 = vrot.slane %v2136, 7
    %v2139 = vshll.u32 %v2105, 16
    %v2141 = vor.u32 %v2138, %v2139
    %v2142 = vrot.slane %v2138, 4
    %v2144 = vshrl.u32 %v2106, 16
    %v2146 = vrot.slane %v2144, 7
    %v2147 = vshll.u32 %v2106, 16
    %v2149 = vor.u32 %v2146, %v2147
    %v2150 = vrot.slane %v2146, 4
    %v2152 = vshrl.u32 %v2107, 16
    %v2154 = vrot.slane %v2152, 7
    %v2155 = vshll.u32 %v2107, 16
    %v2157 = vor.u32 %v2154, %v2155
    %v2158 = vrot.slane %v2154, 4
    %v2160 = vshrl.u32 %v2108, 16
    %v2162 = vrot.slane %v2160, 7
    %v2163 = vshll.u32 %v2108, 16
    %v2165 = vor.u32 %v2162, %v2163
    %v2166 = vrot.slane %v2162, 4
    %v2168 = vshrl.u32 %v2109, 16
    %v2170 = vrot.slane %v2168, 7
    %v2171 = vshll.u32 %v2109, 16
    %v2173 = vor.u32 %v2170, %v2171
    %v2174 = vrot.slane %v2170, 4
    %v2176 = vshrl.u32 %v2110, 16
    %v2178 = vrot.slane %v2176, 7
    %v2179 = vshll.u32 %v2110, 16
    %v2181 = vor.u32 %v2178, %v2179
    %v2182 = vrot.slane %v2178, 4
    %v2184 = vshrl.u32 %v2111, 16
    %v2186 = vrot.slane %v2184, 7
    %v2187 = vshll.u32 %v2111, 16
    %v2189 = vor.u32 %v2186, %v2187
    %v2190 = vrot.slane %v2186, 4
    %v2192 = vshrl.u32 %v2112, 16
    %v2194 = vrot.slane %v2192, 7
    %v2195 = vshll.u32 %v2112, 16
    %v2197 = vor.u32 %v2194, %v2195
    %v2198 = vrot.slane %v2194, 4
    %v2200 = vshrl.u32 %v2113, 16
    %v2202 = vrot.slane %v2200, 7
    %v2203 = vshll.u32 %v2113, 16
    %v2205 = vor.u32 %v2202, %v2203
    %v2206 = vrot.slane %v2202, 4
    %v2208 = vshrl.u32 %v2114, 16
    %v2210 = vrot.slane %v2208, 7
    %v2211 = vshll.u32 %v2114, 16
    %v2213 = vor.u32 %v2210, %v2211
    %v2214 = vrot.slane %v2210, 4
    %v2216 = vshrl.u32 %v2115, 16
    %v2218 = vrot.slane %v2216, 7
    %v2219 = vshll.u32 %v2115, 16
    %v2221 = vor.u32 %v2218, %v2219
    %v2222 = vrot.slane %v2218, 4
    %v2224 = vshrl.u32 %v2116, 16
    %v2226 = vrot.slane %v2224, 7
    %v2227 = vshll.u32 %v2116, 16
    %v2229 = vor.u32 %v2226, %v2227
    %v2230 = vrot.slane %v2226, 4
    %v2232 = vshrl.u32 %v2117, 16
    %v2234 = vrot.slane %v2232, 7
    %v2235 = vshll.u32 %v2117, 16
    %v2237 = vor.u32 %v2234, %v2235
    %v2238 = vrot.slane %v2234, 4
    %v2240 = vshrl.u32 %v2118, 16
    %v2242 = vrot.slane %v2240, 7
    %v2243 = vshll.u32 %v2118, 16
    %v2245 = vor.u32 %v2242, %v2243
    %v2246 = vrot.slane %v2242, 4
    %s2279 = scalar_lea.vmem [#allocation2], 8
    %vm2280 = vcmask 1043456
    %vm2281 = vmand %vm2280, %vm2041
    %v2282 = vld [vmem:[%s2279] sm:$0xf]
    %v2283 = vsel %vm2281, %v2125, %v2282
    %2284 = vst [vmem:[%s2279] sm:$0xf] %v2283
    %v2285 = vld [vmem:[%s2279 + $0x4] sm:$0x1]
    %v2286 = vsel %vm1980, %v2126, %v2285
    %2287 = vst [vmem:[%s2279 + $0x4] sm:$0x1] %v2286
    %v2288 = vld [vmem:[%s2279 + $0x8] sm:$0xf]
    %v2289 = vsel %vm2281, %v2133, %v2288
    %2290 = vst [vmem:[%s2279 + $0x8] sm:$0xf] %v2289
    %v2291 = vld [vmem:[%s2279 + $0xc] sm:$0x1]
    %v2292 = vsel %vm1980, %v2134, %v2291
    %2293 = vst [vmem:[%s2279 + $0xc] sm:$0x1] %v2292
    %v2294 = vld [vmem:[%s2279 + $0x10] sm:$0xf]
    %v2295 = vsel %vm2281, %v2141, %v2294
    %2296 = vst [vmem:[%s2279 + $0x10] sm:$0xf] %v2295
    %v2297 = vld [vmem:[%s2279 + $0x14] sm:$0x1]
    %v2298 = vsel %vm1980, %v2142, %v2297
    %2299 = vst [vmem:[%s2279 + $0x14] sm:$0x1] %v2298
    %v2300 = vld [vmem:[%s2279 + $0x18] sm:$0xf]
    %v2301 = vsel %vm2281, %v2149, %v2300
    %2302 = vst [vmem:[%s2279 + $0x18] sm:$0xf] %v2301
    %v2303 = vld [vmem:[%s2279 + $0x1c] sm:$0x1]
    %v2304 = vsel %vm1980, %v2150, %v2303
    %2305 = vst [vmem:[%s2279 + $0x1c] sm:$0x1] %v2304
    %v2306 = vld [vmem:[%s2279 + $0x20] sm:$0xf]
    %v2307 = vsel %vm2281, %v2157, %v2306
    %2308 = vst [vmem:[%s2279 + $0x20] sm:$0xf] %v2307
    %v2309 = vld [vmem:[%s2279 + $0x24] sm:$0x1]
    %v2310 = vsel %vm1980, %v2158, %v2309
    %2311 = vst [vmem:[%s2279 + $0x24] sm:$0x1] %v2310
    %v2312 = vld [vmem:[%s2279 + $0x28] sm:$0xf]
    %v2313 = vsel %vm2281, %v2165, %v2312
    %2314 = vst [vmem:[%s2279 + $0x28] sm:$0xf] %v2313
    %v2315 = vld [vmem:[%s2279 + $0x2c] sm:$0x1]
    %v2316 = vsel %vm1980, %v2166, %v2315
    %2317 = vst [vmem:[%s2279 + $0x2c] sm:$0x1] %v2316
    %v2318 = vld [vmem:[%s2279 + $0x30] sm:$0xf]
    %v2319 = vsel %vm2281, %v2173, %v2318
    %2320 = vst [vmem:[%s2279 + $0x30] sm:$0xf] %v2319
    %v2321 = vld [vmem:[%s2279 + $0x34] sm:$0x1]
    %v2322 = vsel %vm1980, %v2174, %v2321
    %2323 = vst [vmem:[%s2279 + $0x34] sm:$0x1] %v2322
    %v2324 = vld [vmem:[%s2279 + $0x38] sm:$0xf]
    %v2325 = vsel %vm2281, %v2181, %v2324
    %2326 = vst [vmem:[%s2279 + $0x38] sm:$0xf] %v2325
    %v2327 = vld [vmem:[%s2279 + $0x3c] sm:$0x1]
    %v2328 = vsel %vm1980, %v2182, %v2327
    %2329 = vst [vmem:[%s2279 + $0x3c] sm:$0x1] %v2328
    %v2330 = vld [vmem:[%s2279 + $0x50] sm:$0xf]
    %v2331 = vsel %vm2281, %v2189, %v2330
    %2332 = vst [vmem:[%s2279 + $0x50] sm:$0xf] %v2331
    %v2333 = vld [vmem:[%s2279 + $0x54] sm:$0x1]
    %v2334 = vsel %vm1980, %v2190, %v2333
    %2335 = vst [vmem:[%s2279 + $0x54] sm:$0x1] %v2334
    %v2336 = vld [vmem:[%s2279 + $0x58] sm:$0xf]
    %v2337 = vsel %vm2281, %v2197, %v2336
    %2338 = vst [vmem:[%s2279 + $0x58] sm:$0xf] %v2337
    %v2339 = vld [vmem:[%s2279 + $0x5c] sm:$0x1]
    %v2340 = vsel %vm1980, %v2198, %v2339
    %2341 = vst [vmem:[%s2279 + $0x5c] sm:$0x1] %v2340
    %v2342 = vld [vmem:[%s2279 + $0x60] sm:$0xf]
    %v2343 = vsel %vm2281, %v2205, %v2342
    %2344 = vst [vmem:[%s2279 + $0x60] sm:$0xf] %v2343
    %v2345 = vld [vmem:[%s2279 + $0x64] sm:$0x1]
    %v2346 = vsel %vm1980, %v2206, %v2345
    %2347 = vst [vmem:[%s2279 + $0x64] sm:$0x1] %v2346
    %v2348 = vld [vmem:[%s2279 + $0x68] sm:$0xf]
    %v2349 = vsel %vm2281, %v2213, %v2348
    %2350 = vst [vmem:[%s2279 + $0x68] sm:$0xf] %v2349
    %v2351 = vld [vmem:[%s2279 + $0x6c] sm:$0x1]
    %v2352 = vsel %vm1980, %v2214, %v2351
    %2353 = vst [vmem:[%s2279 + $0x6c] sm:$0x1] %v2352
    %v2354 = vld [vmem:[%s2279 + $0x70] sm:$0xf]
    %v2355 = vsel %vm2281, %v2221, %v2354
    %2356 = vst [vmem:[%s2279 + $0x70] sm:$0xf] %v2355
    %v2357 = vld [vmem:[%s2279 + $0x74] sm:$0x1]
    %v2358 = vsel %vm1980, %v2222, %v2357
    %2359 = vst [vmem:[%s2279 + $0x74] sm:$0x1] %v2358
    %v2360 = vld [vmem:[%s2279 + $0x78] sm:$0xf]
    %v2361 = vsel %vm2281, %v2229, %v2360
    %2362 = vst [vmem:[%s2279 + $0x78] sm:$0xf] %v2361
    %v2363 = vld [vmem:[%s2279 + $0x7c] sm:$0x1]
    %v2364 = vsel %vm1980, %v2230, %v2363
    %2365 = vst [vmem:[%s2279 + $0x7c] sm:$0x1] %v2364
    %v2366 = vld [vmem:[%s2279 + $0x80] sm:$0xf]
    %v2367 = vsel %vm2281, %v2237, %v2366
    %2368 = vst [vmem:[%s2279 + $0x80] sm:$0xf] %v2367
    %v2369 = vld [vmem:[%s2279 + $0x84] sm:$0x1]
    %v2370 = vsel %vm1980, %v2238, %v2369
    %2371 = vst [vmem:[%s2279 + $0x84] sm:$0x1] %v2370
    %v2372 = vld [vmem:[%s2279 + $0x88] sm:$0xf]
    %v2373 = vsel %vm2281, %v2245, %v2372
    %2374 = vst [vmem:[%s2279 + $0x88] sm:$0xf] %v2373
    %v2375 = vld [vmem:[%s2279 + $0x8c] sm:$0x1]
    %v2376 = vsel %vm1980, %v2246, %v2375
    %2377 = vst [vmem:[%s2279 + $0x8c] sm:$0x1] %v2376
    %v2378 = vld [vmem:[#allocation2] sm:$0xf]
    %v2379 = vld [vmem:[#allocation2 + $0x8] sm:$0xf]
    %v2380 = vld [vmem:[#allocation2 + $0x10] sm:$0xf]
    %v2381 = vld [vmem:[#allocation2 + $0x18] sm:$0xf]
    %v2382 = vld [vmem:[#allocation2 + $0x20] sm:$0xf]
    %v2383 = vld [vmem:[#allocation2 + $0x28] sm:$0xf]
    %v2384 = vld [vmem:[#allocation2 + $0x30] sm:$0xf]
    %v2385 = vld [vmem:[#allocation2 + $0x38] sm:$0xf]
    %v2386 = vld [vmem:[#allocation2 + $0x50] sm:$0xf]
    %v2387 = vld [vmem:[#allocation2 + $0x58] sm:$0xf]
    %v2388 = vld [vmem:[#allocation2 + $0x60] sm:$0xf]
    %v2389 = vld [vmem:[#allocation2 + $0x68] sm:$0xf]
    %v2390 = vld [vmem:[#allocation2 + $0x70] sm:$0xf]
    %v2391 = vld [vmem:[#allocation2 + $0x78] sm:$0xf]
    %v2392 = vld [vmem:[#allocation2 + $0x80] sm:$0xf]
    %v2393 = vld [vmem:[#allocation2 + $0x88] sm:$0xf]
    %2394 = vst [vmem:[#allocation3] sm:$0xf] %v2378
    %2395 = vst [vmem:[#allocation3 + $0x24] sm:$0xf] %v2379
    %2396 = vst [vmem:[#allocation3 + $0x48] sm:$0xf] %v2380
    %2397 = vst [vmem:[#allocation3 + $0x6c] sm:$0xf] %v2381
    %2398 = vst [vmem:[#allocation3 + $0x90] sm:$0xf] %v2382
    %2399 = vst [vmem:[#allocation3 + $0xb4] sm:$0xf] %v2383
    %2400 = vst [vmem:[#allocation3 + $0xd8] sm:$0xf] %v2384
    %2401 = vst [vmem:[#allocation3 + $0xfc] sm:$0xf] %v2385
    %2402 = vst [vmem:[#allocation3 + $0x120] sm:$0xf] %v2386
    %2403 = vst [vmem:[#allocation3 + $0x144] sm:$0xf] %v2387
    %2404 = vst [vmem:[#allocation3 + $0x168] sm:$0xf] %v2388
    %2405 = vst [vmem:[#allocation3 + $0x18c] sm:$0xf] %v2389
    %2406 = vst [vmem:[#allocation3 + $0x1b0] sm:$0xf] %v2390
    %2407 = vst [vmem:[#allocation3 + $0x1d4] sm:$0xf] %v2391
    %2408 = vst [vmem:[#allocation3 + $0x1f8] sm:$0xf] %v2392
    %2409 = vst [vmem:[#allocation3 + $0x21c] sm:$0xf] %v2393
    %v2410 = vld [vmem:[#allocation2] sm:$0xf]
    %v2411 = vld [vmem:[#allocation2 + $0x4] sm:$0x1]
    %v2412 = vld [vmem:[#allocation2 + $0x8] sm:$0xf]
    %v2413 = vld [vmem:[#allocation2 + $0xc] sm:$0x1]
    %v2414 = vld [vmem:[#allocation2 + $0x10] sm:$0xf]
    %v2415 = vld [vmem:[#allocation2 + $0x14] sm:$0x1]
    %v2416 = vld [vmem:[#allocation2 + $0x18] sm:$0xf]
    %v2417 = vld [vmem:[#allocation2 + $0x1c] sm:$0x1]
    %v2418 = vld [vmem:[#allocation2 + $0x20] sm:$0xf]
    %v2419 = vld [vmem:[#allocation2 + $0x24] sm:$0x1]
    %v2420 = vld [vmem:[#allocation2 + $0x28] sm:$0xf]
    %v2421 = vld [vmem:[#allocation2 + $0x2c] sm:$0x1]
    %v2422 = vld [vmem:[#allocation2 + $0x30] sm:$0xf]
    %v2423 = vld [vmem:[#allocation2 + $0x34] sm:$0x1]
    %v2424 = vld [vmem:[#allocation2 + $0x38] sm:$0xf]
    %v2425 = vld [vmem:[#allocation2 + $0x3c] sm:$0x1]
    %v2426 = vld [vmem:[#allocation2 + $0x50] sm:$0xf]
    %v2427 = vld [vmem:[#allocation2 + $0x54] sm:$0x1]
    %v2428 = vld [vmem:[#allocation2 + $0x58] sm:$0xf]
    %v2429 = vld [vmem:[#allocation2 + $0x5c] sm:$0x1]
    %v2430 = vld [vmem:[#allocation2 + $0x60] sm:$0xf]
    %v2431 = vld [vmem:[#allocation2 + $0x64] sm:$0x1]
    %v2432 = vld [vmem:[#allocation2 + $0x68] sm:$0xf]
    %v2433 = vld [vmem:[#allocation2 + $0x6c] sm:$0x1]
    %v2434 = vld [vmem:[#allocation2 + $0x70] sm:$0xf]
    %v2435 = vld [vmem:[#allocation2 + $0x74] sm:$0x1]
    %v2436 = vld [vmem:[#allocation2 + $0x78] sm:$0xf]
    %v2437 = vld [vmem:[#allocation2 + $0x7c] sm:$0x1]
    %v2438 = vld [vmem:[#allocation2 + $0x80] sm:$0xf]
    %v2439 = vld [vmem:[#allocation2 + $0x84] sm:$0x1]
    %v2440 = vld [vmem:[#allocation2 + $0x88] sm:$0xf]
    %v2441 = vld [vmem:[#allocation2 + $0x8c] sm:$0x1]
    %vm2442 = vsmask.f32 3328
    %vm2443 = vsmask.f32 7440
    %vm2444 = vmor %vm2442, %vm2443
    %v2446 = vshrl.u32 %v2410, 16
    %v2448 = vrot.slane %v2446, 4
    %v2449 = vshll.u32 %v2410, 16
    %v2451 = vrot.slane %v2449, 5
    %v2452 = vor.u32 %v2448, %v2451
    %v2453 = vrot.slane %v2452, 4
    %v2455 = vshll.u32 %v2411, 16
    %v2457 = vrot.slane %v2455, 5
    %v2458 = vsel %vm2444, %v2453, %v2457
    %v2460 = vshrl.u32 %v2412, 16
    %v2462 = vrot.slane %v2460, 4
    %v2463 = vshll.u32 %v2412, 16
    %v2465 = vrot.slane %v2463, 5
    %v2466 = vor.u32 %v2462, %v2465
    %v2467 = vrot.slane %v2466, 4
    %v2469 = vshll.u32 %v2413, 16
    %v2471 = vrot.slane %v2469, 5
    %v2472 = vsel %vm2444, %v2467, %v2471
    %v2474 = vshrl.u32 %v2414, 16
    %v2476 = vrot.slane %v2474, 4
    %v2477 = vshll.u32 %v2414, 16
    %v2479 = vrot.slane %v2477, 5
    %v2480 = vor.u32 %v2476, %v2479
    %v2481 = vrot.slane %v2480, 4
    %v2483 = vshll.u32 %v2415, 16
    %v2485 = vrot.slane %v2483, 5
    %v2486 = vsel %vm2444, %v2481, %v2485
    %v2488 = vshrl.u32 %v2416, 16
    %v2490 = vrot.slane %v2488, 4
    %v2491 = vshll.u32 %v2416, 16
    %v2493 = vrot.slane %v2491, 5
    %v2494 = vor.u32 %v2490, %v2493
    %v2495 = vrot.slane %v2494, 4
    %v2497 = vshll.u32 %v2417, 16
    %v2499 = vrot.slane %v2497, 5
    %v2500 = vsel %vm2444, %v2495, %v2499
    %v2502 = vshrl.u32 %v2418, 16
    %v2504 = vrot.slane %v2502, 4
    %v2505 = vshll.u32 %v2418, 16
    %v2507 = vrot.slane %v2505, 5
    %v2508 = vor.u32 %v2504, %v2507
    %v2509 = vrot.slane %v2508, 4
    %v2511 = vshll.u32 %v2419, 16
    %v2513 = vrot.slane %v2511, 5
    %v2514 = vsel %vm2444, %v2509, %v2513
    %v2516 = vshrl.u32 %v2420, 16
    %v2518 = vrot.slane %v2516, 4
    %v2519 = vshll.u32 %v2420, 16
    %v2521 = vrot.slane %v2519, 5
    %v2522 = vor.u32 %v2518, %v2521
    %v2523 = vrot.slane %v2522, 4
    %v2525 = vshll.u32 %v2421, 16
    %v2527 = vrot.slane %v2525, 5
    %v2528 = vsel %vm2444, %v2523, %v2527
    %v2530 = vshrl.u32 %v2422, 16
    %v2532 = vrot.slane %v2530, 4
    %v2533 = vshll.u32 %v2422, 16
    %v2535 = vrot.slane %v2533, 5
    %v2536 = vor.u32 %v2532, %v2535
    %v2537 = vrot.slane %v2536, 4
    %v2539 = vshll.u32 %v2423, 16
    %v2541 = vrot.slane %v2539, 5
    %v2542 = vsel %vm2444, %v2537, %v2541
    %v2544 = vshrl.u32 %v2424, 16
    %v2546 = vrot.slane %v2544, 4
    %v2547 = vshll.u32 %v2424, 16
    %v2549 = vrot.slane %v2547, 5
    %v2550 = vor.u32 %v2546, %v2549
    %v2551 = vrot.slane %v2550, 4
    %v2553 = vshll.u32 %v2425, 16
    %v2555 = vrot.slane %v2553, 5
    %v2556 = vsel %vm2444, %v2551, %v2555
    %v2558 = vshrl.u32 %v2426, 16
    %v2560 = vrot.slane %v2558, 4
    %v2561 = vshll.u32 %v2426, 16
    %v2563 = vrot.slane %v2561, 5
    %v2564 = vor.u32 %v2560, %v2563
    %v2565 = vrot.slane %v2564, 4
    %v2567 = vshll.u32 %v2427, 16
    %v2569 = vrot.slane %v2567, 5
    %v2570 = vsel %vm2444, %v2565, %v2569
    %v2572 = vshrl.u32 %v2428, 16
    %v2574 = vrot.slane %v2572, 4
    %v2575 = vshll.u32 %v2428, 16
    %v2577 = vrot.slane %v2575, 5
    %v2578 = vor.u32 %v2574, %v2577
    %v2579 = vrot.slane %v2578, 4
    %v2581 = vshll.u32 %v2429, 16
    %v2583 = vrot.slane %v2581, 5
    %v2584 = vsel %vm2444, %v2579, %v2583
    %v2586 = vshrl.u32 %v2430, 16
    %v2588 = vrot.slane %v2586, 4
    %v2589 = vshll.u32 %v2430, 16
    %v2591 = vrot.slane %v2589, 5
    %v2592 = vor.u32 %v2588, %v2591
    %v2593 = vrot.slane %v2592, 4
    %v2595 = vshll.u32 %v2431, 16
    %v2597 = vrot.slane %v2595, 5
    %v2598 = vsel %vm2444, %v2593, %v2597
    %v2600 = vshrl.u32 %v2432, 16
    %v2602 = vrot.slane %v2600, 4
    %v2603 = vshll.u32 %v2432, 16
    %v2605 = vrot.slane %v2603, 5
    %v2606 = vor.u32 %v2602, %v2605
    %v2607 = vrot.slane %v2606, 4
    %v2609 = vshll.u32 %v2433, 16
    %v2611 = vrot.slane %v2609, 5
    %v2612 = vsel %vm2444, %v2607, %v2611
    %v2614 = vshrl.u32 %v2434, 16
    %v2616 = vrot.slane %v2614, 4
    %v2617 = vshll.u32 %v2434, 16
    %v2619 = vrot.slane %v2617, 5
    %v2620 = vor.u32 %v2616, %v2619
    %v2621 = vrot.slane %v2620, 4
    %v2623 = vshll.u32 %v2435, 16
    %v2625 = vrot.slane %v2623, 5
    %v2626 = vsel %vm2444, %v2621, %v2625
    %v2628 = vshrl.u32 %v2436, 16
    %v2630 = vrot.slane %v2628, 4
    %v2631 = vshll.u32 %v2436, 16
    %v2633 = vrot.slane %v2631, 5
    %v2634 = vor.u32 %v2630, %v2633
    %v2635 = vrot.slane %v2634, 4
    %v2637 = vshll.u32 %v2437, 16
    %v2639 = vrot.slane %v2637, 5
    %v2640 = vsel %vm2444, %v2635, %v2639
    %v2642 = vshrl.u32 %v2438, 16
    %v2644 = vrot.slane %v2642, 4
    %v2645 = vshll.u32 %v2438, 16
    %v2647 = vrot.slane %v2645, 5
    %v2648 = vor.u32 %v2644, %v2647
    %v2649 = vrot.slane %v2648, 4
    %v2651 = vshll.u32 %v2439, 16
    %v2653 = vrot.slane %v2651, 5
    %v2654 = vsel %vm2444, %v2649, %v2653
    %v2656 = vshrl.u32 %v2440, 16
    %v2658 = vrot.slane %v2656, 4
    %v2659 = vshll.u32 %v2440, 16
    %v2661 = vrot.slane %v2659, 5
    %v2662 = vor.u32 %v2658, %v2661
    %v2663 = vrot.slane %v2662, 4
    %v2665 = vshll.u32 %v2441, 16
    %v2667 = vrot.slane %v2665, 5
    %v2668 = vsel %vm2444, %v2663, %v2667
    %2685 = vst [vmem:[#allocation3 + $0x4] sm:$0xf] %v2458
    %2686 = vst [vmem:[#allocation3 + $0x28] sm:$0xf] %v2472
    %2687 = vst [vmem:[#allocation3 + $0x4c] sm:$0xf] %v2486
    %2688 = vst [vmem:[#allocation3 + $0x70] sm:$0xf] %v2500
    %2689 = vst [vmem:[#allocation3 + $0x94] sm:$0xf] %v2514
    %2690 = vst [vmem:[#allocation3 + $0xb8] sm:$0xf] %v2528
    %2691 = vst [vmem:[#allocation3 + $0xdc] sm:$0xf] %v2542
    %2692 = vst [vmem:[#allocation3 + $0x100] sm:$0xf] %v2556
    %2693 = vst [vmem:[#allocation3 + $0x124] sm:$0xf] %v2570
    %2694 = vst [vmem:[#allocation3 + $0x148] sm:$0xf] %v2584
    %2695 = vst [vmem:[#allocation3 + $0x16c] sm:$0xf] %v2598
    %2696 = vst [vmem:[#allocation3 + $0x190] sm:$0xf] %v2612
    %2697 = vst [vmem:[#allocation3 + $0x1b4] sm:$0xf] %v2626
    %2698 = vst [vmem:[#allocation3 + $0x1d8] sm:$0xf] %v2640
    %2699 = vst [vmem:[#allocation3 + $0x1fc] sm:$0xf] %v2654
    %2700 = vst [vmem:[#allocation3 + $0x220] sm:$0xf] %v2668
    %v2701 = vld [vmem:[#allocation2] sm:$0xe]
    %v2702 = vld [vmem:[#allocation2 + $0x4] sm:$0x1]
    %v2703 = vld [vmem:[#allocation2 + $0x8] sm:$0xe]
    %v2704 = vld [vmem:[#allocation2 + $0xc] sm:$0x1]
    %v2705 = vld [vmem:[#allocation2 + $0x10] sm:$0xe]
    %v2706 = vld [vmem:[#allocation2 + $0x14] sm:$0x1]
    %v2707 = vld [vmem:[#allocation2 + $0x18] sm:$0xe]
    %v2708 = vld [vmem:[#allocation2 + $0x1c] sm:$0x1]
    %v2709 = vld [vmem:[#allocation2 + $0x20] sm:$0xe]
    %v2710 = vld [vmem:[#allocation2 + $0x24] sm:$0x1]
    %v2711 = vld [vmem:[#allocation2 + $0x28] sm:$0xe]
    %v2712 = vld [vmem:[#allocation2 + $0x2c] sm:$0x1]
    %v2713 = vld [vmem:[#allocation2 + $0x30] sm:$0xe]
    %v2714 = vld [vmem:[#allocation2 + $0x34] sm:$0x1]
    %v2715 = vld [vmem:[#allocation2 + $0x38] sm:$0xe]
    %v2716 = vld [vmem:[#allocation2 + $0x3c] sm:$0x1]
    %v2717 = vld [vmem:[#allocation2 + $0x50] sm:$0xe]
    %v2718 = vld [vmem:[#allocation2 + $0x54] sm:$0x1]
    %v2719 = vld [vmem:[#allocation2 + $0x58] sm:$0xe]
    %v2720 = vld [vmem:[#allocation2 + $0x5c] sm:$0x1]
    %v2721 = vld [vmem:[#allocation2 + $0x60] sm:$0xe]
    %v2722 = vld [vmem:[#allocation2 + $0x64] sm:$0x1]
    %v2723 = vld [vmem:[#allocation2 + $0x68] sm:$0xe]
    %v2724 = vld [vmem:[#allocation2 + $0x6c] sm:$0x1]
    %v2725 = vld [vmem:[#allocation2 + $0x70] sm:$0xe]
    %v2726 = vld [vmem:[#allocation2 + $0x74] sm:$0x1]
    %v2727 = vld [vmem:[#allocation2 + $0x78] sm:$0xe]
    %v2728 = vld [vmem:[#allocation2 + $0x7c] sm:$0x1]
    %v2729 = vld [vmem:[#allocation2 + $0x80] sm:$0xe]
    %v2730 = vld [vmem:[#allocation2 + $0x84] sm:$0x1]
    %v2731 = vld [vmem:[#allocation2 + $0x88] sm:$0xe]
    %v2732 = vld [vmem:[#allocation2 + $0x8c] sm:$0x1]
    %vm2765 = vcmask 1042432
    %vm2766 = vcmask 1046532
    %vm2767 = vmor %vm2765, %vm2766
    %v2768 = vrot.slane %v2701, 5
    %v2769 = vrot.slane %v2768, 4
    %v2770 = vrot.slane %v2702, 5
    %v2771 = vsel %vm2767, %v2769, %v2770
    %v2772 = vrot.slane %v2703, 5
    %v2773 = vrot.slane %v2772, 4
    %v2774 = vrot.slane %v2704, 5
    %v2775 = vsel %vm2767, %v2773, %v2774
    %v2776 = vrot.slane %v2705, 5
    %v2777 = vrot.slane %v2776, 4
    %v2778 = vrot.slane %v2706, 5
    %v2779 = vsel %vm2767, %v2777, %v2778
    %v2780 = vrot.slane %v2707, 5
    %v2781 = vrot.slane %v2780, 4
    %v2782 = vrot.slane %v2708, 5
    %v2783 = vsel %vm2767, %v2781, %v2782
    %v2784 = vrot.slane %v2709, 5
    %v2785 = vrot.slane %v2784, 4
    %v2786 = vrot.slane %v2710, 5
    %v2787 = vsel %vm2767, %v2785, %v2786
    %v2788 = vrot.slane %v2711, 5
    %v2789 = vrot.slane %v2788, 4
    %v2790 = vrot.slane %v2712, 5
    %v2791 = vsel %vm2767, %v2789, %v2790
    %v2792 = vrot.slane %v2713, 5
    %v2793 = vrot.slane %v2792, 4
    %v2794 = vrot.slane %v2714, 5
    %v2795 = vsel %vm2767, %v2793, %v2794
    %v2796 = vrot.slane %v2715, 5
    %v2797 = vrot.slane %v2796, 4
    %v2798 = vrot.slane %v2716, 5
    %v2799 = vsel %vm2767, %v2797, %v2798
    %v2800 = vrot.slane %v2717, 5
    %v2801 = vrot.slane %v2800, 4
    %v2802 = vrot.slane %v2718, 5
    %v2803 = vsel %vm2767, %v2801, %v2802
    %v2804 = vrot.slane %v2719, 5
    %v2805 = vrot.slane %v2804, 4
    %v2806 = vrot.slane %v2720, 5
    %v2807 = vsel %vm2767, %v2805, %v2806
    %v2808 = vrot.slane %v2721, 5
    %v2809 = vrot.slane %v2808, 4
    %v2810 = vrot.slane %v2722, 5
    %v2811 = vsel %vm2767, %v2809, %v2810
    %v2812 = vrot.slane %v2723, 5
    %v2813 = vrot.slane %v2812, 4
    %v2814 = vrot.slane %v2724, 5
    %v2815 = vsel %vm2767, %v2813, %v2814
    %v2816 = vrot.slane %v2725, 5
    %v2817 = vrot.slane %v2816, 4
    %v2818 = vrot.slane %v2726, 5
    %v2819 = vsel %vm2767, %v2817, %v2818
    %v2820 = vrot.slane %v2727, 5
    %v2821 = vrot.slane %v2820, 4
    %v2822 = vrot.slane %v2728, 5
    %v2823 = vsel %vm2767, %v2821, %v2822
    %v2824 = vrot.slane %v2729, 5
    %v2825 = vrot.slane %v2824, 4
    %v2826 = vrot.slane %v2730, 5
    %v2827 = vsel %vm2767, %v2825, %v2826
    %v2828 = vrot.slane %v2731, 5
    %v2829 = vrot.slane %v2828, 4
    %v2830 = vrot.slane %v2732, 5
    %v2831 = vsel %vm2767, %v2829, %v2830
    %2848 = vst [vmem:[#allocation3 + $0x8] sm:$0xf] %v2771
    %2849 = vst [vmem:[#allocation3 + $0x2c] sm:$0xf] %v2775
    %2850 = vst [vmem:[#allocation3 + $0x50] sm:$0xf] %v2779
    %2851 = vst [vmem:[#allocation3 + $0x74] sm:$0xf] %v2783
    %2852 = vst [vmem:[#allocation3 + $0x98] sm:$0xf] %v2787
    %2853 = vst [vmem:[#allocation3 + $0xbc] sm:$0xf] %v2791
    %2854 = vst [vmem:[#allocation3 + $0xe0] sm:$0xf] %v2795
    %2855 = vst [vmem:[#allocation3 + $0x104] sm:$0xf] %v2799
    %2856 = vst [vmem:[#allocation3 + $0x128] sm:$0xf] %v2803
    %2857 = vst [vmem:[#allocation3 + $0x14c] sm:$0xf] %v2807
    %2858 = vst [vmem:[#allocation3 + $0x170] sm:$0xf] %v2811
    %2859 = vst [vmem:[#allocation3 + $0x194] sm:$0xf] %v2815
    %2860 = vst [vmem:[#allocation3 + $0x1b8] sm:$0xf] %v2819
    %2861 = vst [vmem:[#allocation3 + $0x1dc] sm:$0xf] %v2823
    %2862 = vst [vmem:[#allocation3 + $0x200] sm:$0xf] %v2827
    %2863 = vst [vmem:[#allocation3 + $0x224] sm:$0xf] %v2831
    %v2864 = vld [vmem:[%s2279] sm:$0xf]
    %v2865 = vld [vmem:[%s2279 + $0x8] sm:$0xf]
    %v2866 = vld [vmem:[%s2279 + $0x10] sm:$0xf]
    %v2867 = vld [vmem:[%s2279 + $0x18] sm:$0xf]
    %v2868 = vld [vmem:[%s2279 + $0x20] sm:$0xf]
    %v2869 = vld [vmem:[%s2279 + $0x28] sm:$0xf]
    %v2870 = vld [vmem:[%s2279 + $0x30] sm:$0xf]
    %v2871 = vld [vmem:[%s2279 + $0x38] sm:$0xf]
    %v2872 = vld [vmem:[%s2279 + $0x50] sm:$0xf]
    %v2873 = vld [vmem:[%s2279 + $0x58] sm:$0xf]
    %v2874 = vld [vmem:[%s2279 + $0x60] sm:$0xf]
    %v2875 = vld [vmem:[%s2279 + $0x68] sm:$0xf]
    %v2876 = vld [vmem:[%s2279 + $0x70] sm:$0xf]
    %v2877 = vld [vmem:[%s2279 + $0x78] sm:$0xf]
    %v2878 = vld [vmem:[%s2279 + $0x80] sm:$0xf]
    %v2879 = vld [vmem:[%s2279 + $0x88] sm:$0xf]
    %2880 = vst [vmem:[#allocation3 + $0xc] sm:$0xf] %v2864
    %2881 = vst [vmem:[#allocation3 + $0x30] sm:$0xf] %v2865
    %2882 = vst [vmem:[#allocation3 + $0x54] sm:$0xf] %v2866
    %2883 = vst [vmem:[#allocation3 + $0x78] sm:$0xf] %v2867
    %2884 = vst [vmem:[#allocation3 + $0x9c] sm:$0xf] %v2868
    %2885 = vst [vmem:[#allocation3 + $0xc0] sm:$0xf] %v2869
    %2886 = vst [vmem:[#allocation3 + $0xe4] sm:$0xf] %v2870
    %2887 = vst [vmem:[#allocation3 + $0x108] sm:$0xf] %v2871
    %2888 = vst [vmem:[#allocation3 + $0x12c] sm:$0xf] %v2872
    %2889 = vst [vmem:[#allocation3 + $0x150] sm:$0xf] %v2873
    %2890 = vst [vmem:[#allocation3 + $0x174] sm:$0xf] %v2874
    %2891 = vst [vmem:[#allocation3 + $0x198] sm:$0xf] %v2875
    %2892 = vst [vmem:[#allocation3 + $0x1bc] sm:$0xf] %v2876
    %2893 = vst [vmem:[#allocation3 + $0x1e0] sm:$0xf] %v2877
    %2894 = vst [vmem:[#allocation3 + $0x204] sm:$0xf] %v2878
    %2895 = vst [vmem:[#allocation3 + $0x228] sm:$0xf] %v2879
    %v2896 = vld [vmem:[%s2279] sm:$0xf]
    %v2897 = vld [vmem:[%s2279 + $0x4] sm:$0x1]
    %v2898 = vld [vmem:[%s2279 + $0x8] sm:$0xf]
    %v2899 = vld [vmem:[%s2279 + $0xc] sm:$0x1]
    %v2900 = vld [vmem:[%s2279 + $0x10] sm:$0xf]
    %v2901 = vld [vmem:[%s2279 + $0x14] sm:$0x1]
    %v2902 = vld [vmem:[%s2279 + $0x18] sm:$0xf]
    %v2903 = vld [vmem:[%s2279 + $0x1c] sm:$0x1]
    %v2904 = vld [vmem:[%s2279 + $0x20] sm:$0xf]
    %v2905 = vld [vmem:[%s2279 + $0x24] sm:$0x1]
    %v2906 = vld [vmem:[%s2279 + $0x28] sm:$0xf]
    %v2907 = vld [vmem:[%s2279 + $0x2c] sm:$0x1]
    %v2908 = vld [vmem:[%s2279 + $0x30] sm:$0xf]
    %v2909 = vld [vmem:[%s2279 + $0x34] sm:$0x1]
    %v2910 = vld [vmem:[%s2279 + $0x38] sm:$0xf]
    %v2911 = vld [vmem:[%s2279 + $0x3c] sm:$0x1]
    %v2912 = vld [vmem:[%s2279 + $0x50] sm:$0xf]
    %v2913 = vld [vmem:[%s2279 + $0x54] sm:$0x1]
    %v2914 = vld [vmem:[%s2279 + $0x58] sm:$0xf]
    %v2915 = vld [vmem:[%s2279 + $0x5c] sm:$0x1]
    %v2916 = vld [vmem:[%s2279 + $0x60] sm:$0xf]
    %v2917 = vld [vmem:[%s2279 + $0x64] sm:$0x1]
    %v2918 = vld [vmem:[%s2279 + $0x68] sm:$0xf]
    %v2919 = vld [vmem:[%s2279 + $0x6c] sm:$0x1]
    %v2920 = vld [vmem:[%s2279 + $0x70] sm:$0xf]
    %v2921 = vld [vmem:[%s2279 + $0x74] sm:$0x1]
    %v2922 = vld [vmem:[%s2279 + $0x78] sm:$0xf]
    %v2923 = vld [vmem:[%s2279 + $0x7c] sm:$0x1]
    %v2924 = vld [vmem:[%s2279 + $0x80] sm:$0xf]
    %v2925 = vld [vmem:[%s2279 + $0x84] sm:$0x1]
    %v2926 = vld [vmem:[%s2279 + $0x88] sm:$0xf]
    %v2927 = vld [vmem:[%s2279 + $0x8c] sm:$0x1]
    %v2929 = vshrl.u32 %v2896, 16
    %v2931 = vrot.slane %v2929, 4
    %v2932 = vshll.u32 %v2896, 16
    %v2934 = vrot.slane %v2932, 5
    %v2935 = vor.u32 %v2931, %v2934
    %v2936 = vrot.slane %v2935, 4
    %v2938 = vshll.u32 %v2897, 16
    %v2940 = vrot.slane %v2938, 5
    %v2941 = vsel %vm2444, %v2936, %v2940
    %v2943 = vshrl.u32 %v2898, 16
    %v2945 = vrot.slane %v2943, 4
    %v2946 = vshll.u32 %v2898, 16
    %v2948 = vrot.slane %v2946, 5
    %v2949 = vor.u32 %v2945, %v2948
    %v2950 = vrot.slane %v2949, 4
    %v2952 = vshll.u32 %v2899, 16
    %v2954 = vrot.slane %v2952, 5
    %v2955 = vsel %vm2444, %v2950, %v2954
    %v2957 = vshrl.u32 %v2900, 16
    %v2959 = vrot.slane %v2957, 4
    %v2960 = vshll.u32 %v2900, 16
    %v2962 = vrot.slane %v2960, 5
    %v2963 = vor.u32 %v2959, %v2962
    %v2964 = vrot.slane %v2963, 4
    %v2966 = vshll.u32 %v2901, 16
    %v2968 = vrot.slane %v2966, 5
    %v2969 = vsel %vm2444, %v2964, %v2968
    %v2971 = vshrl.u32 %v2902, 16
    %v2973 = vrot.slane %v2971, 4
    %v2974 = vshll.u32 %v2902, 16
    %v2976 = vrot.slane %v2974, 5
    %v2977 = vor.u32 %v2973, %v2976
    %v2978 = vrot.slane %v2977, 4
    %v2980 = vshll.u32 %v2903, 16
    %v2982 = vrot.slane %v2980, 5
    %v2983 = vsel %vm2444, %v2978, %v2982
    %v2985 = vshrl.u32 %v2904, 16
    %v2987 = vrot.slane %v2985, 4
    %v2988 = vshll.u32 %v2904, 16
    %v2990 = vrot.slane %v2988, 5
    %v2991 = vor.u32 %v2987, %v2990
    %v2992 = vrot.slane %v2991, 4
    %v2994 = vshll.u32 %v2905, 16
    %v2996 = vrot.slane %v2994, 5
    %v2997 = vsel %vm2444, %v2992, %v2996
    %v2999 = vshrl.u32 %v2906, 16
    %v3001 = vrot.slane %v2999, 4
    %v3002 = vshll.u32 %v2906, 16
    %v3004 = vrot.slane %v3002, 5
    %v3005 = vor.u32 %v3001, %v3004
    %v3006 = vrot.slane %v3005, 4
    %v3008 = vshll.u32 %v2907, 16
    %v3010 = vrot.slane %v3008, 5
    %v3011 = vsel %vm2444, %v3006, %v3010
    %v3013 = vshrl.u32 %v2908, 16
    %v3015 = vrot.slane %v3013, 4
    %v3016 = vshll.u32 %v2908, 16
    %v3018 = vrot.slane %v3016, 5
    %v3019 = vor.u32 %v3015, %v3018
    %v3020 = vrot.slane %v3019, 4
    %v3022 = vshll.u32 %v2909, 16
    %v3024 = vrot.slane %v3022, 5
    %v3025 = vsel %vm2444, %v3020, %v3024
    %v3027 = vshrl.u32 %v2910, 16
    %v3029 = vrot.slane %v3027, 4
    %v3030 = vshll.u32 %v2910, 16
    %v3032 = vrot.slane %v3030, 5
    %v3033 = vor.u32 %v3029, %v3032
    %v3034 = vrot.slane %v3033, 4
    %v3036 = vshll.u32 %v2911, 16
    %v3038 = vrot.slane %v3036, 5
    %v3039 = vsel %vm2444, %v3034, %v3038
    %v3041 = vshrl.u32 %v2912, 16
    %v3043 = vrot.slane %v3041, 4
    %v3044 = vshll.u32 %v2912, 16
    %v3046 = vrot.slane %v3044, 5
    %v3047 = vor.u32 %v3043, %v3046
    %v3048 = vrot.slane %v3047, 4
    %v3050 = vshll.u32 %v2913, 16
    %v3052 = vrot.slane %v3050, 5
    %v3053 = vsel %vm2444, %v3048, %v3052
    %v3055 = vshrl.u32 %v2914, 16
    %v3057 = vrot.slane %v3055, 4
    %v3058 = vshll.u32 %v2914, 16
    %v3060 = vrot.slane %v3058, 5
    %v3061 = vor.u32 %v3057, %v3060
    %v3062 = vrot.slane %v3061, 4
    %v3064 = vshll.u32 %v2915, 16
    %v3066 = vrot.slane %v3064, 5
    %v3067 = vsel %vm2444, %v3062, %v3066
    %v3069 = vshrl.u32 %v2916, 16
    %v3071 = vrot.slane %v3069, 4
    %v3072 = vshll.u32 %v2916, 16
    %v3074 = vrot.slane %v3072, 5
    %v3075 = vor.u32 %v3071, %v3074
    %v3076 = vrot.slane %v3075, 4
    %v3078 = vshll.u32 %v2917, 16
    %v3080 = vrot.slane %v3078, 5
    %v3081 = vsel %vm2444, %v3076, %v3080
    %v3083 = vshrl.u32 %v2918, 16
    %v3085 = vrot.slane %v3083, 4
    %v3086 = vshll.u32 %v2918, 16
    %v3088 = vrot.slane %v3086, 5
    %v3089 = vor.u32 %v3085, %v3088
    %v3090 = vrot.slane %v3089, 4
    %v3092 = vshll.u32 %v2919, 16
    %v3094 = vrot.slane %v3092, 5
    %v3095 = vsel %vm2444, %v3090, %v3094
    %v3097 = vshrl.u32 %v2920, 16
    %v3099 = vrot.slane %v3097, 4
    %v3100 = vshll.u32 %v2920, 16
    %v3102 = vrot.slane %v3100, 5
    %v3103 = vor.u32 %v3099, %v3102
    %v3104 = vrot.slane %v3103, 4
    %v3106 = vshll.u32 %v2921, 16
    %v3108 = vrot.slane %v3106, 5
    %v3109 = vsel %vm2444, %v3104, %v3108
    %v3111 = vshrl.u32 %v2922, 16
    %v3113 = vrot.slane %v3111, 4
    %v3114 = vshll.u32 %v2922, 16
    %v3116 = vrot.slane %v3114, 5
    %v3117 = vor.u32 %v3113, %v3116
    %v3118 = vrot.slane %v3117, 4
    %v3120 = vshll.u32 %v2923, 16
    %v3122 = vrot.slane %v3120, 5
    %v3123 = vsel %vm2444, %v3118, %v3122
    %v3125 = vshrl.u32 %v2924, 16
    %v3127 = vrot.slane %v3125, 4
    %v3128 = vshll.u32 %v2924, 16
    %v3130 = vrot.slane %v3128, 5
    %v3131 = vor.u32 %v3127, %v3130
    %v3132 = vrot.slane %v3131, 4
    %v3134 = vshll.u32 %v2925, 16
    %v3136 = vrot.slane %v3134, 5
    %v3137 = vsel %vm2444, %v3132, %v3136
    %v3139 = vshrl.u32 %v2926, 16
    %v3141 = vrot.slane %v3139, 4
    %v3142 = vshll.u32 %v2926, 16
    %v3144 = vrot.slane %v3142, 5
    %v3145 = vor.u32 %v3141, %v3144
    %v3146 = vrot.slane %v3145, 4
    %v3148 = vshll.u32 %v2927, 16
    %v3150 = vrot.slane %v3148, 5
    %v3151 = vsel %vm2444, %v3146, %v3150
    %3168 = vst [vmem:[#allocation3 + $0x10] sm:$0xf] %v2941
    %3169 = vst [vmem:[#allocation3 + $0x34] sm:$0xf] %v2955
    %3170 = vst [vmem:[#allocation3 + $0x58] sm:$0xf] %v2969
    %3171 = vst [vmem:[#allocation3 + $0x7c] sm:$0xf] %v2983
    %3172 = vst [vmem:[#allocation3 + $0xa0] sm:$0xf] %v2997
    %3173 = vst [vmem:[#allocation3 + $0xc4] sm:$0xf] %v3011
    %3174 = vst [vmem:[#allocation3 + $0xe8] sm:$0xf] %v3025
    %3175 = vst [vmem:[#allocation3 + $0x10c] sm:$0xf] %v3039
    %3176 = vst [vmem:[#allocation3 + $0x130] sm:$0xf] %v3053
    %3177 = vst [vmem:[#allocation3 + $0x154] sm:$0xf] %v3067
    %3178 = vst [vmem:[#allocation3 + $0x178] sm:$0xf] %v3081
    %3179 = vst [vmem:[#allocation3 + $0x19c] sm:$0xf] %v3095
    %3180 = vst [vmem:[#allocation3 + $0x1c0] sm:$0xf] %v3109
    %3181 = vst [vmem:[#allocation3 + $0x1e4] sm:$0xf] %v3123
    %3182 = vst [vmem:[#allocation3 + $0x208] sm:$0xf] %v3137
    %3183 = vst [vmem:[#allocation3 + $0x22c] sm:$0xf] %v3151
    %v3184 = vld [vmem:[%s2279] sm:$0xe]
    %v3185 = vld [vmem:[%s2279 + $0x4] sm:$0x1]
    %v3186 = vld [vmem:[%s2279 + $0x8] sm:$0xe]
    %v3187 = vld [vmem:[%s2279 + $0xc] sm:$0x1]
    %v3188 = vld [vmem:[%s2279 + $0x10] sm:$0xe]
    %v3189 = vld [vmem:[%s2279 + $0x14] sm:$0x1]
    %v3190 = vld [vmem:[%s2279 + $0x18] sm:$0xe]
    %v3191 = vld [vmem:[%s2279 + $0x1c] sm:$0x1]
    %v3192 = vld [vmem:[%s2279 + $0x20] sm:$0xe]
    %v3193 = vld [vmem:[%s2279 + $0x24] sm:$0x1]
    %v3194 = vld [vmem:[%s2279 + $0x28] sm:$0xe]
    %v3195 = vld [vmem:[%s2279 + $0x2c] sm:$0x1]
    %v3196 = vld [vmem:[%s2279 + $0x30] sm:$0xe]
    %v3197 = vld [vmem:[%s2279 + $0x34] sm:$0x1]
    %v3198 = vld [vmem:[%s2279 + $0x38] sm:$0xe]
    %v3199 = vld [vmem:[%s2279 + $0x3c] sm:$0x1]
    %v3200 = vld [vmem:[%s2279 + $0x50] sm:$0xe]
    %v3201 = vld [vmem:[%s2279 + $0x54] sm:$0x1]
    %v3202 = vld [vmem:[%s2279 + $0x58] sm:$0xe]
    %v3203 = vld [vmem:[%s2279 + $0x5c] sm:$0x1]
    %v3204 = vld [vmem:[%s2279 + $0x60] sm:$0xe]
    %v3205 = vld [vmem:[%s2279 + $0x64] sm:$0x1]
    %v3206 = vld [vmem:[%s2279 + $0x68] sm:$0xe]
    %v3207 = vld [vmem:[%s2279 + $0x6c] sm:$0x1]
    %v3208 = vld [vmem:[%s2279 + $0x70] sm:$0xe]
    %v3209 = vld [vmem:[%s2279 + $0x74] sm:$0x1]
    %v3210 = vld [vmem:[%s2279 + $0x78] sm:$0xe]
    %v3211 = vld [vmem:[%s2279 + $0x7c] sm:$0x1]
    %v3212 = vld [vmem:[%s2279 + $0x80] sm:$0xe]
    %v3213 = vld [vmem:[%s2279 + $0x84] sm:$0x1]
    %v3214 = vld [vmem:[%s2279 + $0x88] sm:$0xe]
    %v3215 = vld [vmem:[%s2279 + $0x8c] sm:$0x1]
    %v3248 = vrot.slane %v3184, 5
    %v3249 = vrot.slane %v3248, 4
    %v3250 = vrot.slane %v3185, 5
    %v3251 = vsel %vm2767, %v3249, %v3250
    %v3252 = vrot.slane %v3186, 5
    %v3253 = vrot.slane %v3252, 4
    %v3254 = vrot.slane %v3187, 5
    %v3255 = vsel %vm2767, %v3253, %v3254
    %v3256 = vrot.slane %v3188, 5
    %v3257 = vrot.slane %v3256, 4
    %v3258 = vrot.slane %v3189, 5
    %v3259 = vsel %vm2767, %v3257, %v3258
    %v3260 = vrot.slane %v3190, 5
    %v3261 = vrot.slane %v3260, 4
    %v3262 = vrot.slane %v3191, 5
    %v3263 = vsel %vm2767, %v3261, %v3262
    %v3264 = vrot.slane %v3192, 5
    %v3265 = vrot.slane %v3264, 4
    %v3266 = vrot.slane %v3193, 5
    %v3267 = vsel %vm2767, %v3265, %v3266
    %v3268 = vrot.slane %v3194, 5
    %v3269 = vrot.slane %v3268, 4
    %v3270 = vrot.slane %v3195, 5
    %v3271 = vsel %vm2767, %v3269, %v3270
    %v3272 = vrot.slane %v3196, 5
    %v3273 = vrot.slane %v3272, 4
    %v3274 = vrot.slane %v3197, 5
    %v3275 = vsel %vm2767, %v3273, %v3274
    %v3276 = vrot.slane %v3198, 5
    %v3277 = vrot.slane %v3276, 4
    %v3278 = vrot.slane %v3199, 5
    %v3279 = vsel %vm2767, %v3277, %v3278
    %v3280 = vrot.slane %v3200, 5
    %v3281 = vrot.slane %v3280, 4
    %v3282 = vrot.slane %v3201, 5
    %v3283 = vsel %vm2767, %v3281, %v3282
    %v3284 = vrot.slane %v3202, 5
    %v3285 = vrot.slane %v3284, 4
    %v3286 = vrot.slane %v3203, 5
    %v3287 = vsel %vm2767, %v3285, %v3286
    %v3288 = vrot.slane %v3204, 5
    %v3289 = vrot.slane %v3288, 4
    %v3290 = vrot.slane %v3205, 5
    %v3291 = vsel %vm2767, %v3289, %v3290
    %v3292 = vrot.slane %v3206, 5
    %v3293 = vrot.slane %v3292, 4
    %v3294 = vrot.slane %v3207, 5
    %v3295 = vsel %vm2767, %v3293, %v3294
    %v3296 = vrot.slane %v3208, 5
    %v3297 = vrot.slane %v3296, 4
    %v3298 = vrot.slane %v3209, 5
    %v3299 = vsel %vm2767, %v3297, %v3298
    %v3300 = vrot.slane %v3210, 5
    %v3301 = vrot.slane %v3300, 4
    %v3302 = vrot.slane %v3211, 5
    %v3303 = vsel %vm2767, %v3301, %v3302
    %v3304 = vrot.slane %v3212, 5
    %v3305 = vrot.slane %v3304, 4
    %v3306 = vrot.slane %v3213, 5
    %v3307 = vsel %vm2767, %v3305, %v3306
    %v3308 = vrot.slane %v3214, 5
    %v3309 = vrot.slane %v3308, 4
    %v3310 = vrot.slane %v3215, 5
    %v3311 = vsel %vm2767, %v3309, %v3310
    %3328 = vst [vmem:[#allocation3 + $0x14] sm:$0xf] %v3251
    %3329 = vst [vmem:[#allocation3 + $0x38] sm:$0xf] %v3255
    %3330 = vst [vmem:[#allocation3 + $0x5c] sm:$0xf] %v3259
    %3331 = vst [vmem:[#allocation3 + $0x80] sm:$0xf] %v3263
    %3332 = vst [vmem:[#allocation3 + $0xa4] sm:$0xf] %v3267
    %3333 = vst [vmem:[#allocation3 + $0xc8] sm:$0xf] %v3271
    %3334 = vst [vmem:[#allocation3 + $0xec] sm:$0xf] %v3275
    %3335 = vst [vmem:[#allocation3 + $0x110] sm:$0xf] %v3279
    %3336 = vst [vmem:[#allocation3 + $0x134] sm:$0xf] %v3283
    %3337 = vst [vmem:[#allocation3 + $0x158] sm:$0xf] %v3287
    %3338 = vst [vmem:[#allocation3 + $0x17c] sm:$0xf] %v3291
    %3339 = vst [vmem:[#allocation3 + $0x1a0] sm:$0xf] %v3295
    %3340 = vst [vmem:[#allocation3 + $0x1c4] sm:$0xf] %v3299
    %3341 = vst [vmem:[#allocation3 + $0x1e8] sm:$0xf] %v3303
    %3342 = vst [vmem:[#allocation3 + $0x20c] sm:$0xf] %v3307
    %3343 = vst [vmem:[#allocation3 + $0x230] sm:$0xf] %v3311
    %s3344 = scalar_lea.vmem [#allocation2], 16
    %v3345 = vld [vmem:[%s3344] sm:$0xf]
    %v3346 = vld [vmem:[%s3344 + $0x8] sm:$0xf]
    %v3347 = vld [vmem:[%s3344 + $0x10] sm:$0xf]
    %v3348 = vld [vmem:[%s3344 + $0x18] sm:$0xf]
    %v3349 = vld [vmem:[%s3344 + $0x20] sm:$0xf]
    %v3350 = vld [vmem:[%s3344 + $0x28] sm:$0xf]
    %v3351 = vld [vmem:[%s3344 + $0x30] sm:$0xf]
    %v3352 = vld [vmem:[%s3344 + $0x38] sm:$0xf]
    %v3353 = vld [vmem:[%s3344 + $0x50] sm:$0xf]
    %v3354 = vld [vmem:[%s3344 + $0x58] sm:$0xf]
    %v3355 = vld [vmem:[%s3344 + $0x60] sm:$0xf]
    %v3356 = vld [vmem:[%s3344 + $0x68] sm:$0xf]
    %v3357 = vld [vmem:[%s3344 + $0x70] sm:$0xf]
    %v3358 = vld [vmem:[%s3344 + $0x78] sm:$0xf]
    %v3359 = vld [vmem:[%s3344 + $0x80] sm:$0xf]
    %v3360 = vld [vmem:[%s3344 + $0x88] sm:$0xf]
    %3361 = vst [vmem:[#allocation3 + $0x18] sm:$0xf] %v3345
    %3362 = vst [vmem:[#allocation3 + $0x3c] sm:$0xf] %v3346
    %3363 = vst [vmem:[#allocation3 + $0x60] sm:$0xf] %v3347
    %3364 = vst [vmem:[#allocation3 + $0x84] sm:$0xf] %v3348
    %3365 = vst [vmem:[#allocation3 + $0xa8] sm:$0xf] %v3349
    %3366 = vst [vmem:[#allocation3 + $0xcc] sm:$0xf] %v3350
    %3367 = vst [vmem:[#allocation3 + $0xf0] sm:$0xf] %v3351
    %3368 = vst [vmem:[#allocation3 + $0x114] sm:$0xf] %v3352
    %3369 = vst [vmem:[#allocation3 + $0x138] sm:$0xf] %v3353
    %3370 = vst [vmem:[#allocation3 + $0x15c] sm:$0xf] %v3354
    %3371 = vst [vmem:[#allocation3 + $0x180] sm:$0xf] %v3355
    %3372 = vst [vmem:[#allocation3 + $0x1a4] sm:$0xf] %v3356
    %3373 = vst [vmem:[#allocation3 + $0x1c8] sm:$0xf] %v3357
    %3374 = vst [vmem:[#allocation3 + $0x1ec] sm:$0xf] %v3358
    %3375 = vst [vmem:[#allocation3 + $0x210] sm:$0xf] %v3359
    %3376 = vst [vmem:[#allocation3 + $0x234] sm:$0xf] %v3360
    %v3377 = vld [vmem:[%s3344] sm:$0xf]
    %v3378 = vld [vmem:[%s3344 + $0x4] sm:$0x1]
    %v3379 = vld [vmem:[%s3344 + $0x8] sm:$0xf]
    %v3380 = vld [vmem:[%s3344 + $0xc] sm:$0x1]
    %v3381 = vld [vmem:[%s3344 + $0x10] sm:$0xf]
    %v3382 = vld [vmem:[%s3344 + $0x14] sm:$0x1]
    %v3383 = vld [vmem:[%s3344 + $0x18] sm:$0xf]
    %v3384 = vld [vmem:[%s3344 + $0x1c] sm:$0x1]
    %v3385 = vld [vmem:[%s3344 + $0x20] sm:$0xf]
    %v3386 = vld [vmem:[%s3344 + $0x24] sm:$0x1]
    %v3387 = vld [vmem:[%s3344 + $0x28] sm:$0xf]
    %v3388 = vld [vmem:[%s3344 + $0x2c] sm:$0x1]
    %v3389 = vld [vmem:[%s3344 + $0x30] sm:$0xf]
    %v3390 = vld [vmem:[%s3344 + $0x34] sm:$0x1]
    %v3391 = vld [vmem:[%s3344 + $0x38] sm:$0xf]
    %v3392 = vld [vmem:[%s3344 + $0x3c] sm:$0x1]
    %v3393 = vld [vmem:[%s3344 + $0x50] sm:$0xf]
    %v3394 = vld [vmem:[%s3344 + $0x54] sm:$0x1]
    %v3395 = vld [vmem:[%s3344 + $0x58] sm:$0xf]
    %v3396 = vld [vmem:[%s3344 + $0x5c] sm:$0x1]
    %v3397 = vld [vmem:[%s3344 + $0x60] sm:$0xf]
    %v3398 = vld [vmem:[%s3344 + $0x64] sm:$0x1]
    %v3399 = vld [vmem:[%s3344 + $0x68] sm:$0xf]
    %v3400 = vld [vmem:[%s3344 + $0x6c] sm:$0x1]
    %v3401 = vld [vmem:[%s3344 + $0x70] sm:$0xf]
    %v3402 = vld [vmem:[%s3344 + $0x74] sm:$0x1]
    %v3403 = vld [vmem:[%s3344 + $0x78] sm:$0xf]
    %v3404 = vld [vmem:[%s3344 + $0x7c] sm:$0x1]
    %v3405 = vld [vmem:[%s3344 + $0x80] sm:$0xf]
    %v3406 = vld [vmem:[%s3344 + $0x84] sm:$0x1]
    %v3407 = vld [vmem:[%s3344 + $0x88] sm:$0xf]
    %v3408 = vld [vmem:[%s3344 + $0x8c] sm:$0x1]
    %v3410 = vshrl.u32 %v3377, 16
    %v3412 = vrot.slane %v3410, 4
    %v3413 = vshll.u32 %v3377, 16
    %v3415 = vrot.slane %v3413, 5
    %v3416 = vor.u32 %v3412, %v3415
    %v3417 = vrot.slane %v3416, 4
    %v3419 = vshll.u32 %v3378, 16
    %v3421 = vrot.slane %v3419, 5
    %v3422 = vsel %vm2444, %v3417, %v3421
    %v3424 = vshrl.u32 %v3379, 16
    %v3426 = vrot.slane %v3424, 4
    %v3427 = vshll.u32 %v3379, 16
    %v3429 = vrot.slane %v3427, 5
    %v3430 = vor.u32 %v3426, %v3429
    %v3431 = vrot.slane %v3430, 4
    %v3433 = vshll.u32 %v3380, 16
    %v3435 = vrot.slane %v3433, 5
    %v3436 = vsel %vm2444, %v3431, %v3435
    %v3438 = vshrl.u32 %v3381, 16
    %v3440 = vrot.slane %v3438, 4
    %v3441 = vshll.u32 %v3381, 16
    %v3443 = vrot.slane %v3441, 5
    %v3444 = vor.u32 %v3440, %v3443
    %v3445 = vrot.slane %v3444, 4
    %v3447 = vshll.u32 %v3382, 16
    %v3449 = vrot.slane %v3447, 5
    %v3450 = vsel %vm2444, %v3445, %v3449
    %v3452 = vshrl.u32 %v3383, 16
    %v3454 = vrot.slane %v3452, 4
    %v3455 = vshll.u32 %v3383, 16
    %v3457 = vrot.slane %v3455, 5
    %v3458 = vor.u32 %v3454, %v3457
    %v3459 = vrot.slane %v3458, 4
    %v3461 = vshll.u32 %v3384, 16
    %v3463 = vrot.slane %v3461, 5
    %v3464 = vsel %vm2444, %v3459, %v3463
    %v3466 = vshrl.u32 %v3385, 16
    %v3468 = vrot.slane %v3466, 4
    %v3469 = vshll.u32 %v3385, 16
    %v3471 = vrot.slane %v3469, 5
    %v3472 = vor.u32 %v3468, %v3471
    %v3473 = vrot.slane %v3472, 4
    %v3475 = vshll.u32 %v3386, 16
    %v3477 = vrot.slane %v3475, 5
    %v3478 = vsel %vm2444, %v3473, %v3477
    %v3480 = vshrl.u32 %v3387, 16
    %v3482 = vrot.slane %v3480, 4
    %v3483 = vshll.u32 %v3387, 16
    %v3485 = vrot.slane %v3483, 5
    %v3486 = vor.u32 %v3482, %v3485
    %v3487 = vrot.slane %v3486, 4
    %v3489 = vshll.u32 %v3388, 16
    %v3491 = vrot.slane %v3489, 5
    %v3492 = vsel %vm2444, %v3487, %v3491
    %v3494 = vshrl.u32 %v3389, 16
    %v3496 = vrot.slane %v3494, 4
    %v3497 = vshll.u32 %v3389, 16
    %v3499 = vrot.slane %v3497, 5
    %v3500 = vor.u32 %v3496, %v3499
    %v3501 = vrot.slane %v3500, 4
    %v3503 = vshll.u32 %v3390, 16
    %v3505 = vrot.slane %v3503, 5
    %v3506 = vsel %vm2444, %v3501, %v3505
    %v3508 = vshrl.u32 %v3391, 16
    %v3510 = vrot.slane %v3508, 4
    %v3511 = vshll.u32 %v3391, 16
    %v3513 = vrot.slane %v3511, 5
    %v3514 = vor.u32 %v3510, %v3513
    %v3515 = vrot.slane %v3514, 4
    %v3517 = vshll.u32 %v3392, 16
    %v3519 = vrot.slane %v3517, 5
    %v3520 = vsel %vm2444, %v3515, %v3519
    %v3522 = vshrl.u32 %v3393, 16
    %v3524 = vrot.slane %v3522, 4
    %v3525 = vshll.u32 %v3393, 16
    %v3527 = vrot.slane %v3525, 5
    %v3528 = vor.u32 %v3524, %v3527
    %v3529 = vrot.slane %v3528, 4
    %v3531 = vshll.u32 %v3394, 16
    %v3533 = vrot.slane %v3531, 5
    %v3534 = vsel %vm2444, %v3529, %v3533
    %v3536 = vshrl.u32 %v3395, 16
    %v3538 = vrot.slane %v3536, 4
    %v3539 = vshll.u32 %v3395, 16
    %v3541 = vrot.slane %v3539, 5
    %v3542 = vor.u32 %v3538, %v3541
    %v3543 = vrot.slane %v3542, 4
    %v3545 = vshll.u32 %v3396, 16
    %v3547 = vrot.slane %v3545, 5
    %v3548 = vsel %vm2444, %v3543, %v3547
    %v3550 = vshrl.u32 %v3397, 16
    %v3552 = vrot.slane %v3550, 4
    %v3553 = vshll.u32 %v3397, 16
    %v3555 = vrot.slane %v3553, 5
    %v3556 = vor.u32 %v3552, %v3555
    %v3557 = vrot.slane %v3556, 4
    %v3559 = vshll.u32 %v3398, 16
    %v3561 = vrot.slane %v3559, 5
    %v3562 = vsel %vm2444, %v3557, %v3561
    %v3564 = vshrl.u32 %v3399, 16
    %v3566 = vrot.slane %v3564, 4
    %v3567 = vshll.u32 %v3399, 16
    %v3569 = vrot.slane %v3567, 5
    %v3570 = vor.u32 %v3566, %v3569
    %v3571 = vrot.slane %v3570, 4
    %v3573 = vshll.u32 %v3400, 16
    %v3575 = vrot.slane %v3573, 5
    %v3576 = vsel %vm2444, %v3571, %v3575
    %v3578 = vshrl.u32 %v3401, 16
    %v3580 = vrot.slane %v3578, 4
    %v3581 = vshll.u32 %v3401, 16
    %v3583 = vrot.slane %v3581, 5
    %v3584 = vor.u32 %v3580, %v3583
    %v3585 = vrot.slane %v3584, 4
    %v3587 = vshll.u32 %v3402, 16
    %v3589 = vrot.slane %v3587, 5
    %v3590 = vsel %vm2444, %v3585, %v3589
    %v3592 = vshrl.u32 %v3403, 16
    %v3594 = vrot.slane %v3592, 4
    %v3595 = vshll.u32 %v3403, 16
    %v3597 = vrot.slane %v3595, 5
    %v3598 = vor.u32 %v3594, %v3597
    %v3599 = vrot.slane %v3598, 4
    %v3601 = vshll.u32 %v3404, 16
    %v3603 = vrot.slane %v3601, 5
    %v3604 = vsel %vm2444, %v3599, %v3603
    %v3606 = vshrl.u32 %v3405, 16
    %v3608 = vrot.slane %v3606, 4
    %v3609 = vshll.u32 %v3405, 16
    %v3611 = vrot.slane %v3609, 5
    %v3612 = vor.u32 %v3608, %v3611
    %v3613 = vrot.slane %v3612, 4
    %v3615 = vshll.u32 %v3406, 16
    %v3617 = vrot.slane %v3615, 5
    %v3618 = vsel %vm2444, %v3613, %v3617
    %v3620 = vshrl.u32 %v3407, 16
    %v3622 = vrot.slane %v3620, 4
    %v3623 = vshll.u32 %v3407, 16
    %v3625 = vrot.slane %v3623, 5
    %v3626 = vor.u32 %v3622, %v3625
    %v3627 = vrot.slane %v3626, 4
    %v3629 = vshll.u32 %v3408, 16
    %v3631 = vrot.slane %v3629, 5
    %v3632 = vsel %vm2444, %v3627, %v3631
    %3649 = vst [vmem:[#allocation3 + $0x1c] sm:$0xf] %v3422
    %3650 = vst [vmem:[#allocation3 + $0x40] sm:$0xf] %v3436
    %3651 = vst [vmem:[#allocation3 + $0x64] sm:$0xf] %v3450
    %3652 = vst [vmem:[#allocation3 + $0x88] sm:$0xf] %v3464
    %3653 = vst [vmem:[#allocation3 + $0xac] sm:$0xf] %v3478
    %3654 = vst [vmem:[#allocation3 + $0xd0] sm:$0xf] %v3492
    %3655 = vst [vmem:[#allocation3 + $0xf4] sm:$0xf] %v3506
    %3656 = vst [vmem:[#allocation3 + $0x118] sm:$0xf] %v3520
    %3657 = vst [vmem:[#allocation3 + $0x13c] sm:$0xf] %v3534
    %3658 = vst [vmem:[#allocation3 + $0x160] sm:$0xf] %v3548
    %3659 = vst [vmem:[#allocation3 + $0x184] sm:$0xf] %v3562
    %3660 = vst [vmem:[#allocation3 + $0x1a8] sm:$0xf] %v3576
    %3661 = vst [vmem:[#allocation3 + $0x1cc] sm:$0xf] %v3590
    %3662 = vst [vmem:[#allocation3 + $0x1f0] sm:$0xf] %v3604
    %3663 = vst [vmem:[#allocation3 + $0x214] sm:$0xf] %v3618
    %3664 = vst [vmem:[#allocation3 + $0x238] sm:$0xf] %v3632
    %v3665 = vld [vmem:[%s3344] sm:$0xe]
    %v3666 = vld [vmem:[%s3344 + $0x4] sm:$0x1]
    %v3667 = vld [vmem:[%s3344 + $0x8] sm:$0xe]
    %v3668 = vld [vmem:[%s3344 + $0xc] sm:$0x1]
    %v3669 = vld [vmem:[%s3344 + $0x10] sm:$0xe]
    %v3670 = vld [vmem:[%s3344 + $0x14] sm:$0x1]
    %v3671 = vld [vmem:[%s3344 + $0x18] sm:$0xe]
    %v3672 = vld [vmem:[%s3344 + $0x1c] sm:$0x1]
    %v3673 = vld [vmem:[%s3344 + $0x20] sm:$0xe]
    %v3674 = vld [vmem:[%s3344 + $0x24] sm:$0x1]
    %v3675 = vld [vmem:[%s3344 + $0x28] sm:$0xe]
    %v3676 = vld [vmem:[%s3344 + $0x2c] sm:$0x1]
    %v3677 = vld [vmem:[%s3344 + $0x30] sm:$0xe]
    %v3678 = vld [vmem:[%s3344 + $0x34] sm:$0x1]
    %v3679 = vld [vmem:[%s3344 + $0x38] sm:$0xe]
    %v3680 = vld [vmem:[%s3344 + $0x3c] sm:$0x1]
    %v3681 = vld [vmem:[%s3344 + $0x50] sm:$0xe]
    %v3682 = vld [vmem:[%s3344 + $0x54] sm:$0x1]
    %v3683 = vld [vmem:[%s3344 + $0x58] sm:$0xe]
    %v3684 = vld [vmem:[%s3344 + $0x5c] sm:$0x1]
    %v3685 = vld [vmem:[%s3344 + $0x60] sm:$0xe]
    %v3686 = vld [vmem:[%s3344 + $0x64] sm:$0x1]
    %v3687 = vld [vmem:[%s3344 + $0x68] sm:$0xe]
    %v3688 = vld [vmem:[%s3344 + $0x6c] sm:$0x1]
    %v3689 = vld [vmem:[%s3344 + $0x70] sm:$0xe]
    %v3690 = vld [vmem:[%s3344 + $0x74] sm:$0x1]
    %v3691 = vld [vmem:[%s3344 + $0x78] sm:$0xe]
    %v3692 = vld [vmem:[%s3344 + $0x7c] sm:$0x1]
    %v3693 = vld [vmem:[%s3344 + $0x80] sm:$0xe]
    %v3694 = vld [vmem:[%s3344 + $0x84] sm:$0x1]
    %v3695 = vld [vmem:[%s3344 + $0x88] sm:$0xe]
    %v3696 = vld [vmem:[%s3344 + $0x8c] sm:$0x1]
    %v3729 = vrot.slane %v3665, 5
    %v3730 = vrot.slane %v3729, 4
    %v3731 = vrot.slane %v3666, 5
    %v3732 = vsel %vm2767, %v3730, %v3731
    %v3733 = vrot.slane %v3667, 5
    %v3734 = vrot.slane %v3733, 4
    %v3735 = vrot.slane %v3668, 5
    %v3736 = vsel %vm2767, %v3734, %v3735
    %v3737 = vrot.slane %v3669, 5
    %v3738 = vrot.slane %v3737, 4
    %v3739 = vrot.slane %v3670, 5
    %v3740 = vsel %vm2767, %v3738, %v3739
    %v3741 = vrot.slane %v3671, 5
    %v3742 = vrot.slane %v3741, 4
    %v3743 = vrot.slane %v3672, 5
    %v3744 = vsel %vm2767, %v3742, %v3743
    %v3745 = vrot.slane %v3673, 5
    %v3746 = vrot.slane %v3745, 4
    %v3747 = vrot.slane %v3674, 5
    %v3748 = vsel %vm2767, %v3746, %v3747
    %v3749 = vrot.slane %v3675, 5
    %v3750 = vrot.slane %v3749, 4
    %v3751 = vrot.slane %v3676, 5
    %v3752 = vsel %vm2767, %v3750, %v3751
    %v3753 = vrot.slane %v3677, 5
    %v3754 = vrot.slane %v3753, 4
    %v3755 = vrot.slane %v3678, 5
    %v3756 = vsel %vm2767, %v3754, %v3755
    %v3757 = vrot.slane %v3679, 5
    %v3758 = vrot.slane %v3757, 4
    %v3759 = vrot.slane %v3680, 5
    %v3760 = vsel %vm2767, %v3758, %v3759
    %v3761 = vrot.slane %v3681, 5
    %v3762 = vrot.slane %v3761, 4
    %v3763 = vrot.slane %v3682, 5
    %v3764 = vsel %vm2767, %v3762, %v3763
    %v3765 = vrot.slane %v3683, 5
    %v3766 = vrot.slane %v3765, 4
    %v3767 = vrot.slane %v3684, 5
    %v3768 = vsel %vm2767, %v3766, %v3767
    %v3769 = vrot.slane %v3685, 5
    %v3770 = vrot.slane %v3769, 4
    %v3771 = vrot.slane %v3686, 5
    %v3772 = vsel %vm2767, %v3770, %v3771
    %v3773 = vrot.slane %v3687, 5
    %v3774 = vrot.slane %v3773, 4
    %v3775 = vrot.slane %v3688, 5
    %v3776 = vsel %vm2767, %v3774, %v3775
    %v3777 = vrot.slane %v3689, 5
    %v3778 = vrot.slane %v3777, 4
    %v3779 = vrot.slane %v3690, 5
    %v3780 = vsel %vm2767, %v3778, %v3779
    %v3781 = vrot.slane %v3691, 5
    %v3782 = vrot.slane %v3781, 4
    %v3783 = vrot.slane %v3692, 5
    %v3784 = vsel %vm2767, %v3782, %v3783
    %v3785 = vrot.slane %v3693, 5
    %v3786 = vrot.slane %v3785, 4
    %v3787 = vrot.slane %v3694, 5
    %v3788 = vsel %vm2767, %v3786, %v3787
    %v3789 = vrot.slane %v3695, 5
    %v3790 = vrot.slane %v3789, 4
    %v3791 = vrot.slane %v3696, 5
    %v3792 = vsel %vm2767, %v3790, %v3791
    %3809 = vst [vmem:[#allocation3 + $0x20] sm:$0xf] %v3732
    %3810 = vst [vmem:[#allocation3 + $0x44] sm:$0xf] %v3736
    %3811 = vst [vmem:[#allocation3 + $0x68] sm:$0xf] %v3740
    %3812 = vst [vmem:[#allocation3 + $0x8c] sm:$0xf] %v3744
    %3813 = vst [vmem:[#allocation3 + $0xb0] sm:$0xf] %v3748
    %3814 = vst [vmem:[#allocation3 + $0xd4] sm:$0xf] %v3752
    %3815 = vst [vmem:[#allocation3 + $0xf8] sm:$0xf] %v3756
    %3816 = vst [vmem:[#allocation3 + $0x11c] sm:$0xf] %v3760
    %3817 = vst [vmem:[#allocation3 + $0x140] sm:$0xf] %v3764
    %3818 = vst [vmem:[#allocation3 + $0x164] sm:$0xf] %v3768
    %3819 = vst [vmem:[#allocation3 + $0x188] sm:$0xf] %v3772
    %3820 = vst [vmem:[#allocation3 + $0x1ac] sm:$0xf] %v3776
    %3821 = vst [vmem:[#allocation3 + $0x1d0] sm:$0xf] %v3780
    %3822 = vst [vmem:[#allocation3 + $0x1f4] sm:$0xf] %v3784
    %3823 = vst [vmem:[#allocation3 + $0x218] sm:$0xf] %v3788
    %3824 = vst [vmem:[#allocation3 + $0x23c] sm:$0xf] %v3792
    %v3825 = vld [vmem:[#allocation3] sm:$0xff]
    %v3826 = vld [vmem:[#allocation3 + $0x8] sm:$0xff]
    %v3827 = vld [vmem:[#allocation3 + $0x10] sm:$0xff]
    %v3828 = vld [vmem:[#allocation3 + $0x18] sm:$0xff]
    %v3829 = vld [vmem:[#allocation3 + $0x20] sm:$0xf]
    %v3830 = vld [vmem:[#allocation3 + $0x24] sm:$0xff]
    %v3831 = vld [vmem:[#allocation3 + $0x2c] sm:$0xff]
    %v3832 = vld [vmem:[#allocation3 + $0x34] sm:$0xff]
    %v3833 = vld [vmem:[#allocation3 + $0x3c] sm:$0xff]
    %v3834 = vld [vmem:[#allocation3 + $0x44] sm:$0xf]
    %v3835 = vld [vmem:[#allocation3 + $0x48] sm:$0xff]
    %v3836 = vld [vmem:[#allocation3 + $0x50] sm:$0xff]
    %v3837 = vld [vmem:[#allocation3 + $0x58] sm:$0xff]
    %v3838 = vld [vmem:[#allocation3 + $0x60] sm:$0xff]
    %v3839 = vld [vmem:[#allocation3 + $0x68] sm:$0xf]
    %v3840 = vld [vmem:[#allocation3 + $0x6c] sm:$0xff]
    %v3841 = vld [vmem:[#allocation3 + $0x74] sm:$0xff]
    %v3842 = vld [vmem:[#allocation3 + $0x7c] sm:$0xff]
    %v3843 = vld [vmem:[#allocation3 + $0x84] sm:$0xff]
    %v3844 = vld [vmem:[#allocation3 + $0x8c] sm:$0xf]
    %v3845 = vld [vmem:[#allocation3 + $0x90] sm:$0xff]
    %v3846 = vld [vmem:[#allocation3 + $0x98] sm:$0xff]
    %v3847 = vld [vmem:[#allocation3 + $0xa0] sm:$0xff]
    %v3848 = vld [vmem:[#allocation3 + $0xa8] sm:$0xff]
    %v3849 = vld [vmem:[#allocation3 + $0xb0] sm:$0xf]
    %v3850 = vld [vmem:[#allocation3 + $0xb4] sm:$0xff]
    %v3851 = vld [vmem:[#allocation3 + $0xbc] sm:$0xff]
    %v3852 = vld [vmem:[#allocation3 + $0xc4] sm:$0xff]
    %v3853 = vld [vmem:[#allocation3 + $0xcc] sm:$0xff]
    %v3854 = vld [vmem:[#allocation3 + $0xd4] sm:$0xf]
    %v3855 = vld [vmem:[#allocation3 + $0xd8] sm:$0xff]
    %v3856 = vld [vmem:[#allocation3 + $0xe0] sm:$0xff]
    %v3857 = vld [vmem:[#allocation3 + $0xe8] sm:$0xff]
    %v3858 = vld [vmem:[#allocation3 + $0xf0] sm:$0xff]
    %v3859 = vld [vmem:[#allocation3 + $0xf8] sm:$0xf]
    %v3860 = vld [vmem:[#allocation3 + $0xfc] sm:$0xff]
    %v3861 = vld [vmem:[#allocation3 + $0x104] sm:$0xff]
    %v3862 = vld [vmem:[#allocation3 + $0x10c] sm:$0xff]
    %v3863 = vld [vmem:[#allocation3 + $0x114] sm:$0xff]
    %v3864 = vld [vmem:[#allocation3 + $0x11c] sm:$0xf]
    %v3865 = vld [vmem:[#allocation3 + $0x120] sm:$0xff]
    %v3866 = vld [vmem:[#allocation3 + $0x128] sm:$0xff]
    %v3867 = vld [vmem:[#allocation3 + $0x130] sm:$0xff]
    %v3868 = vld [vmem:[#allocation3 + $0x138] sm:$0xff]
    %v3869 = vld [vmem:[#allocation3 + $0x140] sm:$0xf]
    %v3870 = vld [vmem:[#allocation3 + $0x144] sm:$0xff]
    %v3871 = vld [vmem:[#allocation3 + $0x14c] sm:$0xff]
    %v3872 = vld [vmem:[#allocation3 + $0x154] sm:$0xff]
    %v3873 = vld [vmem:[#allocation3 + $0x15c] sm:$0xff]
    %v3874 = vld [vmem:[#allocation3 + $0x164] sm:$0xf]
    %v3875 = vld [vmem:[#allocation3 + $0x168] sm:$0xff]
    %v3876 = vld [vmem:[#allocation3 + $0x170] sm:$0xff]
    %v3877 = vld [vmem:[#allocation3 + $0x178] sm:$0xff]
    %v3878 = vld [vmem:[#allocation3 + $0x180] sm:$0xff]
    %v3879 = vld [vmem:[#allocation3 + $0x188] sm:$0xf]
    %v3880 = vld [vmem:[#allocation3 + $0x18c] sm:$0xff]
    %v3881 = vld [vmem:[#allocation3 + $0x194] sm:$0xff]
    %v3882 = vld [vmem:[#allocation3 + $0x19c] sm:$0xff]
    %v3883 = vld [vmem:[#allocation3 + $0x1a4] sm:$0xff]
    %v3884 = vld [vmem:[#allocation3 + $0x1ac] sm:$0xf]
    %v3885 = vld [vmem:[#allocation3 + $0x1b0] sm:$0xff]
    %v3886 = vld [vmem:[#allocation3 + $0x1b8] sm:$0xff]
    %v3887 = vld [vmem:[#allocation3 + $0x1c0] sm:$0xff]
    %v3888 = vld [vmem:[#allocation3 + $0x1c8] sm:$0xff]
    %v3889 = vld [vmem:[#allocation3 + $0x1d0] sm:$0xf]
    %v3890 = vld [vmem:[#allocation3 + $0x1d4] sm:$0xff]
    %v3891 = vld [vmem:[#allocation3 + $0x1dc] sm:$0xff]
    %v3892 = vld [vmem:[#allocation3 + $0x1e4] sm:$0xff]
    %v3893 = vld [vmem:[#allocation3 + $0x1ec] sm:$0xff]
    %v3894 = vld [vmem:[#allocation3 + $0x1f4] sm:$0xf]
    %v3895 = vld [vmem:[#allocation3 + $0x1f8] sm:$0xff]
    %v3896 = vld [vmem:[#allocation3 + $0x200] sm:$0xff]
    %v3897 = vld [vmem:[#allocation3 + $0x208] sm:$0xff]
    %v3898 = vld [vmem:[#allocation3 + $0x210] sm:$0xff]
    %v3899 = vld [vmem:[#allocation3 + $0x218] sm:$0xf]
    %v3900 = vld [vmem:[#allocation3 + $0x21c] sm:$0xff]
    %v3901 = vld [vmem:[#allocation3 + $0x224] sm:$0xff]
    %v3902 = vld [vmem:[#allocation3 + $0x22c] sm:$0xff]
    %v3903 = vld [vmem:[#allocation3 + $0x234] sm:$0xff]
    %v3904 = vld [vmem:[#allocation3 + $0x23c] sm:$0xf]
    %v3905 = vld [vmem:[#allocation7] sm:$0xf]
    %v3906 = vld [vmem:[#allocation7 + $0x4] sm:$0xf]
    %v3907 = vld [vmem:[#allocation7 + $0x8] sm:$0xf]
    %v3908 = vld [vmem:[#allocation7 + $0xc] sm:$0xf]
    %v3909 = vld [vmem:[#allocation7 + $0x10] sm:$0xf]
    %v3910 = vld [vmem:[#allocation7 + $0x14] sm:$0xf]
    %v3911 = vld [vmem:[#allocation7 + $0x18] sm:$0xf]
    %v3912 = vld [vmem:[#allocation7 + $0x1c] sm:$0xf]
    %v3913 = vld [vmem:[#allocation7 + $0x20] sm:$0xf]
    %v3914 = vld [vmem:[#allocation7 + $0x24] sm:$0xf]
    %v3915 = vld [vmem:[#allocation7 + $0x28] sm:$0xf]
    %v3916 = vld [vmem:[#allocation7 + $0x2c] sm:$0xf]
    %v3917 = vld [vmem:[#allocation7 + $0x30] sm:$0xf]
    %v3918 = vld [vmem:[#allocation7 + $0x34] sm:$0xf]
    %v3919 = vld [vmem:[#allocation7 + $0x38] sm:$0xf]
    %v3920 = vld [vmem:[#allocation7 + $0x3c] sm:$0xf]
    %v3921 = vld [vmem:[#allocation7 + $0x40] sm:$0xf]
    %v3922 = vld [vmem:[#allocation7 + $0x44] sm:$0xf]
    %v3923 = vld [vmem:[#allocation7 + $0x48] sm:$0xf]
    %v3924 = vld [vmem:[#allocation7 + $0x4c] sm:$0xf]
    %v3925 = vld [vmem:[#allocation7 + $0x50] sm:$0xf]
    %v3926 = vld [vmem:[#allocation7 + $0x54] sm:$0xf]
    %v3927 = vld [vmem:[#allocation7 + $0x58] sm:$0xf]
    %v3928 = vld [vmem:[#allocation7 + $0x5c] sm:$0xf]
    %v3929 = vld [vmem:[#allocation7 + $0x60] sm:$0xf]
    %v3930 = vld [vmem:[#allocation7 + $0x64] sm:$0xf]
    %v3931 = vld [vmem:[#allocation7 + $0x68] sm:$0xf]
    %v3932 = vld [vmem:[#allocation7 + $0x6c] sm:$0xf]
    %v3933 = vld [vmem:[#allocation7 + $0x70] sm:$0xf]
    %v3934 = vld [vmem:[#allocation7 + $0x74] sm:$0xf]
    %v3935 = vld [vmem:[#allocation7 + $0x78] sm:$0xf]
    %v3936 = vld [vmem:[#allocation7 + $0x7c] sm:$0xf]
    %v3937 = vld [vmem:[#allocation7 + $0x80] sm:$0xf]
    %v3938 = vld [vmem:[#allocation7 + $0x84] sm:$0xf]
    %v3939 = vld [vmem:[#allocation7 + $0x88] sm:$0xf]
    %v3940 = vld [vmem:[#allocation7 + $0x8c] sm:$0xf]
    %v3941 = vld [vmem:[#allocation7 + $0x90] sm:$0xf]
    %v3942 = vld [vmem:[#allocation7 + $0x94] sm:$0xf]
    %v3943 = vld [vmem:[#allocation7 + $0x98] sm:$0xf]
    %v3944 = vld [vmem:[#allocation7 + $0x9c] sm:$0xf]
    %v3945 = vld [vmem:[#allocation7 + $0xa0] sm:$0xf]
    %v3946 = vld [vmem:[#allocation7 + $0xa4] sm:$0xf]
    %v3947 = vld [vmem:[#allocation7 + $0xa8] sm:$0xf]
    %v3948 = vld [vmem:[#allocation7 + $0xac] sm:$0xf]
    %v3949 = vld [vmem:[#allocation7 + $0xb0] sm:$0xf]
    %v3950 = vld [vmem:[#allocation7 + $0xb4] sm:$0xf]
    %v3951 = vld [vmem:[#allocation7 + $0xb8] sm:$0xf]
    %v3952 = vld [vmem:[#allocation7 + $0xbc] sm:$0xf]
    %v3953 = vld [vmem:[#allocation7 + $0xc0] sm:$0xf]
    %v3954 = vld [vmem:[#allocation7 + $0xc4] sm:$0xf]
    %v3955 = vld [vmem:[#allocation7 + $0xc8] sm:$0xf]
    %v3956 = vld [vmem:[#allocation7 + $0xcc] sm:$0xf]
    %v3957 = vld [vmem:[#allocation7 + $0xd0] sm:$0xf]
    %v3958 = vld [vmem:[#allocation7 + $0xd4] sm:$0xf]
    %v3959 = vld [vmem:[#allocation7 + $0xd8] sm:$0xf]
    %v3960 = vld [vmem:[#allocation7 + $0xdc] sm:$0xf]
    %v3961 = vld [vmem:[#allocation7 + $0xe0] sm:$0xf]
    %v3962 = vld [vmem:[#allocation7 + $0xe4] sm:$0xf]
    %v3963 = vld [vmem:[#allocation7 + $0xe8] sm:$0xf]
    %v3964 = vld [vmem:[#allocation7 + $0xec] sm:$0xf]
    %v3965 = vld [vmem:[#allocation7 + $0xf0] sm:$0xf]
    %v3966 = vld [vmem:[#allocation7 + $0xf4] sm:$0xf]
    %v3967 = vld [vmem:[#allocation7 + $0xf8] sm:$0xf]
    %v3968 = vld [vmem:[#allocation7 + $0xfc] sm:$0xf]
    %v3969 = vld [vmem:[#allocation7 + $0x100] sm:$0xf]
    %v3970 = vld [vmem:[#allocation7 + $0x104] sm:$0xf]
    %v3971 = vld [vmem:[#allocation7 + $0x108] sm:$0xf]
    %v3972 = vld [vmem:[#allocation7 + $0x10c] sm:$0xf]
    %v3973 = vld [vmem:[#allocation7 + $0x110] sm:$0xf]
    %v3974 = vld [vmem:[#allocation7 + $0x114] sm:$0xf]
    %v3975 = vld [vmem:[#allocation7 + $0x118] sm:$0xf]
    %v3976 = vld [vmem:[#allocation7 + $0x11c] sm:$0xf]
    %v3977 = vld [vmem:[#allocation7 + $0x120] sm:$0xf]
    %v3978 = vld [vmem:[#allocation7 + $0x124] sm:$0xf]
    %v3979 = vld [vmem:[#allocation7 + $0x128] sm:$0xf]
    %v3980 = vld [vmem:[#allocation7 + $0x12c] sm:$0xf]
    %v3981 = vld [vmem:[#allocation7 + $0x130] sm:$0xf]
    %v3982 = vld [vmem:[#allocation7 + $0x134] sm:$0xf]
    %v3983 = vld [vmem:[#allocation7 + $0x138] sm:$0xf]
    %v3984 = vld [vmem:[#allocation7 + $0x13c] sm:$0xf]
    %v3985 = vld [vmem:[#allocation7 + $0x140] sm:$0xf]
    %v3986 = vld [vmem:[#allocation7 + $0x144] sm:$0xf]
    %v3987 = vld [vmem:[#allocation7 + $0x148] sm:$0xf]
    %v3988 = vld [vmem:[#allocation7 + $0x14c] sm:$0xf]
    %v3989 = vld [vmem:[#allocation7 + $0x150] sm:$0xf]
    %v3990 = vld [vmem:[#allocation7 + $0x154] sm:$0xf]
    %v3991 = vld [vmem:[#allocation7 + $0x158] sm:$0xf]
    %v3992 = vld [vmem:[#allocation7 + $0x15c] sm:$0xf]
    %v3993 = vld [vmem:[#allocation7 + $0x160] sm:$0xf]
    %v3994 = vld [vmem:[#allocation7 + $0x164] sm:$0xf]
    %v3995 = vld [vmem:[#allocation7 + $0x168] sm:$0xf]
    %v3996 = vld [vmem:[#allocation7 + $0x16c] sm:$0xf]
    %v3997 = vld [vmem:[#allocation7 + $0x170] sm:$0xf]
    %v3998 = vld [vmem:[#allocation7 + $0x174] sm:$0xf]
    %v3999 = vld [vmem:[#allocation7 + $0x178] sm:$0xf]
    %v4000 = vld [vmem:[#allocation7 + $0x17c] sm:$0xf]
    %v4001 = vld [vmem:[#allocation7 + $0x180] sm:$0xf]
    %v4002 = vld [vmem:[#allocation7 + $0x184] sm:$0xf]
    %v4003 = vld [vmem:[#allocation7 + $0x188] sm:$0xf]
    %v4004 = vld [vmem:[#allocation7 + $0x18c] sm:$0xf]
    %v4005 = vld [vmem:[#allocation7 + $0x190] sm:$0xf]
    %v4006 = vld [vmem:[#allocation7 + $0x194] sm:$0xf]
    %v4007 = vld [vmem:[#allocation7 + $0x198] sm:$0xf]
    %v4008 = vld [vmem:[#allocation7 + $0x19c] sm:$0xf]
    %v4009 = vld [vmem:[#allocation7 + $0x1a0] sm:$0xf]
    %v4010 = vld [vmem:[#allocation7 + $0x1a4] sm:$0xf]
    %v4011 = vld [vmem:[#allocation7 + $0x1a8] sm:$0xf]
    %v4012 = vld [vmem:[#allocation7 + $0x1ac] sm:$0xf]
    %v4013 = vld [vmem:[#allocation7 + $0x1b0] sm:$0xf]
    %v4014 = vld [vmem:[#allocation7 + $0x1b4] sm:$0xf]
    %v4015 = vld [vmem:[#allocation7 + $0x1b8] sm:$0xf]
    %v4016 = vld [vmem:[#allocation7 + $0x1bc] sm:$0xf]
    %v4017 = vld [vmem:[#allocation7 + $0x1c0] sm:$0xf]
    %v4018 = vld [vmem:[#allocation7 + $0x1c4] sm:$0xf]
    %v4019 = vld [vmem:[#allocation7 + $0x1c8] sm:$0xf]
    %v4020 = vld [vmem:[#allocation7 + $0x1cc] sm:$0xf]
    %v4021 = vld [vmem:[#allocation7 + $0x1d0] sm:$0xf]
    %v4022 = vld [vmem:[#allocation7 + $0x1d4] sm:$0xf]
    %v4023 = vld [vmem:[#allocation7 + $0x1d8] sm:$0xf]
    %v4024 = vld [vmem:[#allocation7 + $0x1dc] sm:$0xf]
    %v4025 = vld [vmem:[#allocation7 + $0x1e0] sm:$0xf]
    %v4026 = vld [vmem:[#allocation7 + $0x1e4] sm:$0xf]
    %v4027 = vld [vmem:[#allocation7 + $0x1e8] sm:$0xf]
    %v4028 = vld [vmem:[#allocation7 + $0x1ec] sm:$0xf]
    %v4029 = vld [vmem:[#allocation7 + $0x1f0] sm:$0xf]
    %v4030 = vld [vmem:[#allocation7 + $0x1f4] sm:$0xf]
    %v4031 = vld [vmem:[#allocation7 + $0x1f8] sm:$0xf]
    %v4032 = vld [vmem:[#allocation7 + $0x1fc] sm:$0xf]
    %v4033 = vld [vmem:[#allocation7 + $0x200] sm:$0xf]
    %v4034 = vld [vmem:[#allocation7 + $0x204] sm:$0xf]
    %v4035 = vld [vmem:[#allocation7 + $0x208] sm:$0xf]
    %v4036 = vld [vmem:[#allocation7 + $0x20c] sm:$0xf]
    %v4037 = vld [vmem:[#allocation7 + $0x210] sm:$0xf]
    %v4038 = vld [vmem:[#allocation7 + $0x214] sm:$0xf]
    %v4039 = vld [vmem:[#allocation7 + $0x218] sm:$0xf]
    %v4040 = vld [vmem:[#allocation7 + $0x21c] sm:$0xf]
    %v4041 = vld [vmem:[#allocation7 + $0x220] sm:$0xf]
    %v4042 = vld [vmem:[#allocation7 + $0x224] sm:$0xf]
    %v4043 = vld [vmem:[#allocation7 + $0x228] sm:$0xf]
    %v4044 = vld [vmem:[#allocation7 + $0x22c] sm:$0xf]
    %v4045 = vld [vmem:[#allocation7 + $0x230] sm:$0xf]
    %v4046 = vld [vmem:[#allocation7 + $0x234] sm:$0xf]
    %v4047 = vld [vmem:[#allocation7 + $0x238] sm:$0xf]
    %v4048 = vld [vmem:[#allocation7 + $0x23c] sm:$0xf]
    %v4129 = vunpack.c.l.b16 %v3825
    %v4130 = vunpack.c.h.b16 %v3825
    %v4131 = vunpack.c.l.b16 %v3826
    %v4132 = vunpack.c.h.b16 %v3826
    %v4133 = vunpack.c.l.b16 %v3827
    %v4134 = vunpack.c.h.b16 %v3827
    %v4135 = vunpack.c.l.b16 %v3828
    %v4136 = vunpack.c.h.b16 %v3828
    %v4137 = vunpack.c.l.b16 %v3829
    %v4138 = vunpack.c.l.b16 %v3830
    %v4139 = vunpack.c.h.b16 %v3830
    %v4140 = vunpack.c.l.b16 %v3831
    %v4141 = vunpack.c.h.b16 %v3831
    %v4142 = vunpack.c.l.b16 %v3832
    %v4143 = vunpack.c.h.b16 %v3832
    %v4144 = vunpack.c.l.b16 %v3833
    %v4145 = vunpack.c.h.b16 %v3833
    %v4146 = vunpack.c.l.b16 %v3834
    %v4147 = vunpack.c.l.b16 %v3835
    %v4148 = vunpack.c.h.b16 %v3835
    %v4149 = vunpack.c.l.b16 %v3836
    %v4150 = vunpack.c.h.b16 %v3836
    %v4151 = vunpack.c.l.b16 %v3837
    %v4152 = vunpack.c.h.b16 %v3837
    %v4153 = vunpack.c.l.b16 %v3838
    %v4154 = vunpack.c.h.b16 %v3838
    %v4155 = vunpack.c.l.b16 %v3839
    %v4156 = vunpack.c.l.b16 %v3840
    %v4157 = vunpack.c.h.b16 %v3840
    %v4158 = vunpack.c.l.b16 %v3841
    %v4159 = vunpack.c.h.b16 %v3841
    %v4160 = vunpack.c.l.b16 %v3842
    %v4161 = vunpack.c.h.b16 %v3842
    %v4162 = vunpack.c.l.b16 %v3843
    %v4163 = vunpack.c.h.b16 %v3843
    %v4164 = vunpack.c.l.b16 %v3844
    %v4165 = vunpack.c.l.b16 %v3845
    %v4166 = vunpack.c.h.b16 %v3845
    %v4167 = vunpack.c.l.b16 %v3846
    %v4168 = vunpack.c.h.b16 %v3846
    %v4169 = vunpack.c.l.b16 %v3847
    %v4170 = vunpack.c.h.b16 %v3847
    %v4171 = vunpack.c.l.b16 %v3848
    %v4172 = vunpack.c.h.b16 %v3848
    %v4173 = vunpack.c.l.b16 %v3849
    %v4174 = vunpack.c.l.b16 %v3850
    %v4175 = vunpack.c.h.b16 %v3850
    %v4176 = vunpack.c.l.b16 %v3851
    %v4177 = vunpack.c.h.b16 %v3851
    %v4178 = vunpack.c.l.b16 %v3852
    %v4179 = vunpack.c.h.b16 %v3852
    %v4180 = vunpack.c.l.b16 %v3853
    %v4181 = vunpack.c.h.b16 %v3853
    %v4182 = vunpack.c.l.b16 %v3854
    %v4183 = vunpack.c.l.b16 %v3855
    %v4184 = vunpack.c.h.b16 %v3855
    %v4185 = vunpack.c.l.b16 %v3856
    %v4186 = vunpack.c.h.b16 %v3856
    %v4187 = vunpack.c.l.b16 %v3857
    %v4188 = vunpack.c.h.b16 %v3857
    %v4189 = vunpack.c.l.b16 %v3858
    %v4190 = vunpack.c.h.b16 %v3858
    %v4191 = vunpack.c.l.b16 %v3859
    %v4192 = vunpack.c.l.b16 %v3860
    %v4193 = vunpack.c.h.b16 %v3860
    %v4194 = vunpack.c.l.b16 %v3861
    %v4195 = vunpack.c.h.b16 %v3861
    %v4196 = vunpack.c.l.b16 %v3862
    %v4197 = vunpack.c.h.b16 %v3862
    %v4198 = vunpack.c.l.b16 %v3863
    %v4199 = vunpack.c.h.b16 %v3863
    %v4200 = vunpack.c.l.b16 %v3864
    %v4201 = vunpack.c.l.b16 %v3865
    %v4202 = vunpack.c.h.b16 %v3865
    %v4203 = vunpack.c.l.b16 %v3866
    %v4204 = vunpack.c.h.b16 %v3866
    %v4205 = vunpack.c.l.b16 %v3867
    %v4206 = vunpack.c.h.b16 %v3867
    %v4207 = vunpack.c.l.b16 %v3868
    %v4208 = vunpack.c.h.b16 %v3868
    %v4209 = vunpack.c.l.b16 %v3869
    %v4210 = vunpack.c.l.b16 %v3870
    %v4211 = vunpack.c.h.b16 %v3870
    %v4212 = vunpack.c.l.b16 %v3871
    %v4213 = vunpack.c.h.b16 %v3871
    %v4214 = vunpack.c.l.b16 %v3872
    %v4215 = vunpack.c.h.b16 %v3872
    %v4216 = vunpack.c.l.b16 %v3873
    %v4217 = vunpack.c.h.b16 %v3873
    %v4218 = vunpack.c.l.b16 %v3874
    %v4219 = vunpack.c.l.b16 %v3875
    %v4220 = vunpack.c.h.b16 %v3875
    %v4221 = vunpack.c.l.b16 %v3876
    %v4222 = vunpack.c.h.b16 %v3876
    %v4223 = vunpack.c.l.b16 %v3877
    %v4224 = vunpack.c.h.b16 %v3877
    %v4225 = vunpack.c.l.b16 %v3878
    %v4226 = vunpack.c.h.b16 %v3878
    %v4227 = vunpack.c.l.b16 %v3879
    %v4228 = vunpack.c.l.b16 %v3880
    %v4229 = vunpack.c.h.b16 %v3880
    %v4230 = vunpack.c.l.b16 %v3881
    %v4231 = vunpack.c.h.b16 %v3881
    %v4232 = vunpack.c.l.b16 %v3882
    %v4233 = vunpack.c.h.b16 %v3882
    %v4234 = vunpack.c.l.b16 %v3883
    %v4235 = vunpack.c.h.b16 %v3883
    %v4236 = vunpack.c.l.b16 %v3884
    %v4237 = vunpack.c.l.b16 %v3885
    %v4238 = vunpack.c.h.b16 %v3885
    %v4239 = vunpack.c.l.b16 %v3886
    %v4240 = vunpack.c.h.b16 %v3886
    %v4241 = vunpack.c.l.b16 %v3887
    %v4242 = vunpack.c.h.b16 %v3887
    %v4243 = vunpack.c.l.b16 %v3888
    %v4244 = vunpack.c.h.b16 %v3888
    %v4245 = vunpack.c.l.b16 %v3889
    %v4246 = vunpack.c.l.b16 %v3890
    %v4247 = vunpack.c.h.b16 %v3890
    %v4248 = vunpack.c.l.b16 %v3891
    %v4249 = vunpack.c.h.b16 %v3891
    %v4250 = vunpack.c.l.b16 %v3892
    %v4251 = vunpack.c.h.b16 %v3892
    %v4252 = vunpack.c.l.b16 %v3893
    %v4253 = vunpack.c.h.b16 %v3893
    %v4254 = vunpack.c.l.b16 %v3894
    %v4255 = vunpack.c.l.b16 %v3895
    %v4256 = vunpack.c.h.b16 %v3895
    %v4257 = vunpack.c.l.b16 %v3896
    %v4258 = vunpack.c.h.b16 %v3896
    %v4259 = vunpack.c.l.b16 %v3897
    %v4260 = vunpack.c.h.b16 %v3897
    %v4261 = vunpack.c.l.b16 %v3898
    %v4262 = vunpack.c.h.b16 %v3898
    %v4263 = vunpack.c.l.b16 %v3899
    %v4264 = vunpack.c.l.b16 %v3900
    %v4265 = vunpack.c.h.b16 %v3900
    %v4266 = vunpack.c.l.b16 %v3901
    %v4267 = vunpack.c.h.b16 %v3901
    %v4268 = vunpack.c.l.b16 %v3902
    %v4269 = vunpack.c.h.b16 %v3902
    %v4270 = vunpack.c.l.b16 %v3903
    %v4271 = vunpack.c.h.b16 %v3903
    %v4272 = vunpack.c.l.b16 %v3904
    %v4273 = vpack.c.b16 %v4138, %v4129
    %v4274 = vpack.c.b16 %v4139, %v4130
    %v4275 = vpack.c.b16 %v4140, %v4131
    %v4276 = vpack.c.b16 %v4141, %v4132
    %v4277 = vpack.c.b16 %v4142, %v4133
    %v4278 = vpack.c.b16 %v4143, %v4134
    %v4279 = vpack.c.b16 %v4144, %v4135
    %v4280 = vpack.c.b16 %v4145, %v4136
    %v4281 = vpack.c.b16 %v4146, %v4137
    %v4282 = vpack.c.b16 %v4156, %v4147
    %v4283 = vpack.c.b16 %v4157, %v4148
    %v4284 = vpack.c.b16 %v4158, %v4149
    %v4285 = vpack.c.b16 %v4159, %v4150
    %v4286 = vpack.c.b16 %v4160, %v4151
    %v4287 = vpack.c.b16 %v4161, %v4152
    %v4288 = vpack.c.b16 %v4162, %v4153
    %v4289 = vpack.c.b16 %v4163, %v4154
    %v4290 = vpack.c.b16 %v4164, %v4155
    %v4291 = vpack.c.b16 %v4174, %v4165
    %v4292 = vpack.c.b16 %v4175, %v4166
    %v4293 = vpack.c.b16 %v4176, %v4167
    %v4294 = vpack.c.b16 %v4177, %v4168
    %v4295 = vpack.c.b16 %v4178, %v4169
    %v4296 = vpack.c.b16 %v4179, %v4170
    %v4297 = vpack.c.b16 %v4180, %v4171
    %v4298 = vpack.c.b16 %v4181, %v4172
    %v4299 = vpack.c.b16 %v4182, %v4173
    %v4300 = vpack.c.b16 %v4192, %v4183
    %v4301 = vpack.c.b16 %v4193, %v4184
    %v4302 = vpack.c.b16 %v4194, %v4185
    %v4303 = vpack.c.b16 %v4195, %v4186
    %v4304 = vpack.c.b16 %v4196, %v4187
    %v4305 = vpack.c.b16 %v4197, %v4188
    %v4306 = vpack.c.b16 %v4198, %v4189
    %v4307 = vpack.c.b16 %v4199, %v4190
    %v4308 = vpack.c.b16 %v4200, %v4191
    %v4309 = vpack.c.b16 %v4210, %v4201
    %v4310 = vpack.c.b16 %v4211, %v4202
    %v4311 = vpack.c.b16 %v4212, %v4203
    %v4312 = vpack.c.b16 %v4213, %v4204
    %v4313 = vpack.c.b16 %v4214, %v4205
    %v4314 = vpack.c.b16 %v4215, %v4206
    %v4315 = vpack.c.b16 %v4216, %v4207
    %v4316 = vpack.c.b16 %v4217, %v4208
    %v4317 = vpack.c.b16 %v4218, %v4209
    %v4318 = vpack.c.b16 %v4228, %v4219
    %v4319 = vpack.c.b16 %v4229, %v4220
    %v4320 = vpack.c.b16 %v4230, %v4221
    %v4321 = vpack.c.b16 %v4231, %v4222
    %v4322 = vpack.c.b16 %v4232, %v4223
    %v4323 = vpack.c.b16 %v4233, %v4224
    %v4324 = vpack.c.b16 %v4234, %v4225
    %v4325 = vpack.c.b16 %v4235, %v4226
    %v4326 = vpack.c.b16 %v4236, %v4227
    %v4327 = vpack.c.b16 %v4246, %v4237
    %v4328 = vpack.c.b16 %v4247, %v4238
    %v4329 = vpack.c.b16 %v4248, %v4239
    %v4330 = vpack.c.b16 %v4249, %v4240
    %v4331 = vpack.c.b16 %v4250, %v4241
    %v4332 = vpack.c.b16 %v4251, %v4242
    %v4333 = vpack.c.b16 %v4252, %v4243
    %v4334 = vpack.c.b16 %v4253, %v4244
    %v4335 = vpack.c.b16 %v4254, %v4245
    %v4336 = vpack.c.b16 %v4264, %v4255
    %v4337 = vpack.c.b16 %v4265, %v4256
    %v4338 = vpack.c.b16 %v4266, %v4257
    %v4339 = vpack.c.b16 %v4267, %v4258
    %v4340 = vpack.c.b16 %v4268, %v4259
    %v4341 = vpack.c.b16 %v4269, %v4260
    %v4342 = vpack.c.b16 %v4270, %v4261
    %v4343 = vpack.c.b16 %v4271, %v4262
    %v4344 = vpack.c.b16 %v4272, %v4263
    %v4561 = vunpack.c.l.b16 %v3905
    %v4562 = vunpack.c.l.b16 %v3906
    %v4563 = vunpack.c.l.b16 %v3907
    %v4564 = vunpack.c.l.b16 %v3908
    %v4565 = vunpack.c.l.b16 %v3909
    %v4566 = vunpack.c.l.b16 %v3910
    %v4567 = vunpack.c.l.b16 %v3911
    %v4568 = vunpack.c.l.b16 %v3912
    %v4569 = vunpack.c.l.b16 %v3913
    %v4570 = vunpack.c.l.b16 %v3914
    %v4571 = vunpack.c.l.b16 %v3915
    %v4572 = vunpack.c.l.b16 %v3916
    %v4573 = vunpack.c.l.b16 %v3917
    %v4574 = vunpack.c.l.b16 %v3918
    %v4575 = vunpack.c.l.b16 %v3919
    %v4576 = vunpack.c.l.b16 %v3920
    %v4577 = vunpack.c.l.b16 %v3921
    %v4578 = vunpack.c.l.b16 %v3922
    %v4579 = vunpack.c.l.b16 %v3923
    %v4580 = vunpack.c.l.b16 %v3924
    %v4581 = vunpack.c.l.b16 %v3925
    %v4582 = vunpack.c.l.b16 %v3926
    %v4583 = vunpack.c.l.b16 %v3927
    %v4584 = vunpack.c.l.b16 %v3928
    %v4585 = vunpack.c.l.b16 %v3929
    %v4586 = vunpack.c.l.b16 %v3930
    %v4587 = vunpack.c.l.b16 %v3931
    %v4588 = vunpack.c.l.b16 %v3932
    %v4589 = vunpack.c.l.b16 %v3933
    %v4590 = vunpack.c.l.b16 %v3934
    %v4591 = vunpack.c.l.b16 %v3935
    %v4592 = vunpack.c.l.b16 %v3936
    %v4593 = vunpack.c.l.b16 %v3937
    %v4594 = vunpack.c.l.b16 %v3938
    %v4595 = vunpack.c.l.b16 %v3939
    %v4596 = vunpack.c.l.b16 %v3940
    %v4597 = vunpack.c.l.b16 %v3941
    %v4598 = vunpack.c.l.b16 %v3942
    %v4599 = vunpack.c.l.b16 %v3943
    %v4600 = vunpack.c.l.b16 %v3944
    %v4601 = vunpack.c.l.b16 %v3945
    %v4602 = vunpack.c.l.b16 %v3946
    %v4603 = vunpack.c.l.b16 %v3947
    %v4604 = vunpack.c.l.b16 %v3948
    %v4605 = vunpack.c.l.b16 %v3949
    %v4606 = vunpack.c.l.b16 %v3950
    %v4607 = vunpack.c.l.b16 %v3951
    %v4608 = vunpack.c.l.b16 %v3952
    %v4609 = vunpack.c.l.b16 %v3953
    %v4610 = vunpack.c.l.b16 %v3954
    %v4611 = vunpack.c.l.b16 %v3955
    %v4612 = vunpack.c.l.b16 %v3956
    %v4613 = vunpack.c.l.b16 %v3957
    %v4614 = vunpack.c.l.b16 %v3958
    %v4615 = vunpack.c.l.b16 %v3959
    %v4616 = vunpack.c.l.b16 %v3960
    %v4617 = vunpack.c.l.b16 %v3961
    %v4618 = vunpack.c.l.b16 %v3962
    %v4619 = vunpack.c.l.b16 %v3963
    %v4620 = vunpack.c.l.b16 %v3964
    %v4621 = vunpack.c.l.b16 %v3965
    %v4622 = vunpack.c.l.b16 %v3966
    %v4623 = vunpack.c.l.b16 %v3967
    %v4624 = vunpack.c.l.b16 %v3968
    %v4625 = vunpack.c.l.b16 %v3969
    %v4626 = vunpack.c.l.b16 %v3970
    %v4627 = vunpack.c.l.b16 %v3971
    %v4628 = vunpack.c.l.b16 %v3972
    %v4629 = vunpack.c.l.b16 %v3973
    %v4630 = vunpack.c.l.b16 %v3974
    %v4631 = vunpack.c.l.b16 %v3975
    %v4632 = vunpack.c.l.b16 %v3976
    %v4633 = vunpack.c.l.b16 %v3977
    %v4634 = vunpack.c.l.b16 %v3978
    %v4635 = vunpack.c.l.b16 %v3979
    %v4636 = vunpack.c.l.b16 %v3980
    %v4637 = vunpack.c.l.b16 %v3981
    %v4638 = vunpack.c.l.b16 %v3982
    %v4639 = vunpack.c.l.b16 %v3983
    %v4640 = vunpack.c.l.b16 %v3984
    %v4641 = vunpack.c.l.b16 %v3985
    %v4642 = vunpack.c.l.b16 %v3986
    %v4643 = vunpack.c.l.b16 %v3987
    %v4644 = vunpack.c.l.b16 %v3988
    %v4645 = vunpack.c.l.b16 %v3989
    %v4646 = vunpack.c.l.b16 %v3990
    %v4647 = vunpack.c.l.b16 %v3991
    %v4648 = vunpack.c.l.b16 %v3992
    %v4649 = vunpack.c.l.b16 %v3993
    %v4650 = vunpack.c.l.b16 %v3994
    %v4651 = vunpack.c.l.b16 %v3995
    %v4652 = vunpack.c.l.b16 %v3996
    %v4653 = vunpack.c.l.b16 %v3997
    %v4654 = vunpack.c.l.b16 %v3998
    %v4655 = vunpack.c.l.b16 %v3999
    %v4656 = vunpack.c.l.b16 %v4000
    %v4657 = vunpack.c.l.b16 %v4001
    %v4658 = vunpack.c.l.b16 %v4002
    %v4659 = vunpack.c.l.b16 %v4003
    %v4660 = vunpack.c.l.b16 %v4004
    %v4661 = vunpack.c.l.b16 %v4005
    %v4662 = vunpack.c.l.b16 %v4006
    %v4663 = vunpack.c.l.b16 %v4007
    %v4664 = vunpack.c.l.b16 %v4008
    %v4665 = vunpack.c.l.b16 %v4009
    %v4666 = vunpack.c.l.b16 %v4010
    %v4667 = vunpack.c.l.b16 %v4011
    %v4668 = vunpack.c.l.b16 %v4012
    %v4669 = vunpack.c.l.b16 %v4013
    %v4670 = vunpack.c.l.b16 %v4014
    %v4671 = vunpack.c.l.b16 %v4015
    %v4672 = vunpack.c.l.b16 %v4016
    %v4673 = vunpack.c.l.b16 %v4017
    %v4674 = vunpack.c.l.b16 %v4018
    %v4675 = vunpack.c.l.b16 %v4019
    %v4676 = vunpack.c.l.b16 %v4020
    %v4677 = vunpack.c.l.b16 %v4021
    %v4678 = vunpack.c.l.b16 %v4022
    %v4679 = vunpack.c.l.b16 %v4023
    %v4680 = vunpack.c.l.b16 %v4024
    %v4681 = vunpack.c.l.b16 %v4025
    %v4682 = vunpack.c.l.b16 %v4026
    %v4683 = vunpack.c.l.b16 %v4027
    %v4684 = vunpack.c.l.b16 %v4028
    %v4685 = vunpack.c.l.b16 %v4029
    %v4686 = vunpack.c.l.b16 %v4030
    %v4687 = vunpack.c.l.b16 %v4031
    %v4688 = vunpack.c.l.b16 %v4032
    %v4689 = vunpack.c.l.b16 %v4033
    %v4690 = vunpack.c.l.b16 %v4034
    %v4691 = vunpack.c.l.b16 %v4035
    %v4692 = vunpack.c.l.b16 %v4036
    %v4693 = vunpack.c.l.b16 %v4037
    %v4694 = vunpack.c.l.b16 %v4038
    %v4695 = vunpack.c.l.b16 %v4039
    %v4696 = vunpack.c.l.b16 %v4040
    %v4697 = vunpack.c.l.b16 %v4041
    %v4698 = vunpack.c.l.b16 %v4042
    %v4699 = vunpack.c.l.b16 %v4043
    %v4700 = vunpack.c.l.b16 %v4044
    %v4701 = vunpack.c.l.b16 %v4045
    %v4702 = vunpack.c.l.b16 %v4046
    %v4703 = vunpack.c.l.b16 %v4047
    %v4704 = vunpack.c.l.b16 %v4048
    %v4705 = vpack.c.b16 %v4562, %v4561
    %v4706 = vpack.c.b16 %v4564, %v4563
    %v4707 = vpack.c.b16 %v4566, %v4565
    %v4708 = vpack.c.b16 %v4568, %v4567
    %v4709 = vpack.c.b16 %v4570, %v4569
    %v4710 = vpack.c.b16 %v4572, %v4571
    %v4711 = vpack.c.b16 %v4574, %v4573
    %v4712 = vpack.c.b16 %v4576, %v4575
    %v4713 = vpack.c.b16 %v4578, %v4577
    %v4714 = vpack.c.b16 %v4580, %v4579
    %v4715 = vpack.c.b16 %v4582, %v4581
    %v4716 = vpack.c.b16 %v4584, %v4583
    %v4717 = vpack.c.b16 %v4586, %v4585
    %v4718 = vpack.c.b16 %v4588, %v4587
    %v4719 = vpack.c.b16 %v4590, %v4589
    %v4720 = vpack.c.b16 %v4592, %v4591
    %v4721 = vpack.c.b16 %v4594, %v4593
    %v4722 = vpack.c.b16 %v4596, %v4595
    %v4723 = vpack.c.b16 %v4598, %v4597
    %v4724 = vpack.c.b16 %v4600, %v4599
    %v4725 = vpack.c.b16 %v4602, %v4601
    %v4726 = vpack.c.b16 %v4604, %v4603
    %v4727 = vpack.c.b16 %v4606, %v4605
    %v4728 = vpack.c.b16 %v4608, %v4607
    %v4729 = vpack.c.b16 %v4610, %v4609
    %v4730 = vpack.c.b16 %v4612, %v4611
    %v4731 = vpack.c.b16 %v4614, %v4613
    %v4732 = vpack.c.b16 %v4616, %v4615
    %v4733 = vpack.c.b16 %v4618, %v4617
    %v4734 = vpack.c.b16 %v4620, %v4619
    %v4735 = vpack.c.b16 %v4622, %v4621
    %v4736 = vpack.c.b16 %v4624, %v4623
    %v4737 = vpack.c.b16 %v4626, %v4625
    %v4738 = vpack.c.b16 %v4628, %v4627
    %v4739 = vpack.c.b16 %v4630, %v4629
    %v4740 = vpack.c.b16 %v4632, %v4631
    %v4741 = vpack.c.b16 %v4634, %v4633
    %v4742 = vpack.c.b16 %v4636, %v4635
    %v4743 = vpack.c.b16 %v4638, %v4637
    %v4744 = vpack.c.b16 %v4640, %v4639
    %v4745 = vpack.c.b16 %v4642, %v4641
    %v4746 = vpack.c.b16 %v4644, %v4643
    %v4747 = vpack.c.b16 %v4646, %v4645
    %v4748 = vpack.c.b16 %v4648, %v4647
    %v4749 = vpack.c.b16 %v4650, %v4649
    %v4750 = vpack.c.b16 %v4652, %v4651
    %v4751 = vpack.c.b16 %v4654, %v4653
    %v4752 = vpack.c.b16 %v4656, %v4655
    %v4753 = vpack.c.b16 %v4658, %v4657
    %v4754 = vpack.c.b16 %v4660, %v4659
    %v4755 = vpack.c.b16 %v4662, %v4661
    %v4756 = vpack.c.b16 %v4664, %v4663
    %v4757 = vpack.c.b16 %v4666, %v4665
    %v4758 = vpack.c.b16 %v4668, %v4667
    %v4759 = vpack.c.b16 %v4670, %v4669
    %v4760 = vpack.c.b16 %v4672, %v4671
    %v4761 = vpack.c.b16 %v4674, %v4673
    %v4762 = vpack.c.b16 %v4676, %v4675
    %v4763 = vpack.c.b16 %v4678, %v4677
    %v4764 = vpack.c.b16 %v4680, %v4679
    %v4765 = vpack.c.b16 %v4682, %v4681
    %v4766 = vpack.c.b16 %v4684, %v4683
    %v4767 = vpack.c.b16 %v4686, %v4685
    %v4768 = vpack.c.b16 %v4688, %v4687
    %v4769 = vpack.c.b16 %v4690, %v4689
    %v4770 = vpack.c.b16 %v4692, %v4691
    %v4771 = vpack.c.b16 %v4694, %v4693
    %v4772 = vpack.c.b16 %v4696, %v4695
    %v4773 = vpack.c.b16 %v4698, %v4697
    %v4774 = vpack.c.b16 %v4700, %v4699
    %v4775 = vpack.c.b16 %v4702, %v4701
    %v4776 = vpack.c.b16 %v4704, %v4703
    %4849 = vmatpush.bf16.msra.mxu0 %v4712
    %4850 = vmatpush.bf16.msra.mxu0 %v4711
    %4851 = vmatpush.bf16.msra.mxu0 %v4710
    %4852 = vmatpush.bf16.msra.mxu0 %v4709
    %4853 = vmatpush.bf16.msra.mxu0 %v4708
    %4854 = vmatpush.bf16.msra.mxu0 %v4707
    %4855 = vmatpush.bf16.msra.mxu0 %v4706
    %4856 = vmatpush.bf16.msra.mxu0 %v4705
    %4857 = vmatmul.bf16.gmra.mxu0 %v4273
    %v4858 = vpop.f32.mrf.mxu0
    %v4859 = vadd.f32 0.0, %v4858
    %v4860 = vpop.f32.mrf.mxu0
    %v4861 = vadd.f32 0.0, %v4860
    %4862 = vmatmul.bf16.gmra.mxu0 %v4282
    %v4863 = vpop.f32.mrf.mxu0
    %v4864 = vadd.f32 0.0, %v4863
    %v4865 = vpop.f32.mrf.mxu0
    %v4866 = vadd.f32 0.0, %v4865
    %4867 = vmatmul.bf16.gmra.mxu0 %v4291
    %v4868 = vpop.f32.mrf.mxu0
    %v4869 = vadd.f32 0.0, %v4868
    %v4870 = vpop.f32.mrf.mxu0
    %v4871 = vadd.f32 0.0, %v4870
    %4872 = vmatmul.bf16.gmra.mxu0 %v4300
    %v4873 = vpop.f32.mrf.mxu0
    %v4874 = vadd.f32 0.0, %v4873
    %v4875 = vpop.f32.mrf.mxu0
    %v4876 = vadd.f32 0.0, %v4875
    %4877 = vmatmul.bf16.gmra.mxu0 %v4309
    %v4878 = vpop.f32.mrf.mxu0
    %v4879 = vadd.f32 0.0, %v4878
    %v4880 = vpop.f32.mrf.mxu0
    %v4881 = vadd.f32 0.0, %v4880
    %4882 = vmatmul.bf16.gmra.mxu0 %v4318
    %v4883 = vpop.f32.mrf.mxu0
    %v4884 = vadd.f32 0.0, %v4883
    %v4885 = vpop.f32.mrf.mxu0
    %v4886 = vadd.f32 0.0, %v4885
    %4887 = vmatmul.bf16.gmra.mxu0 %v4327
    %v4888 = vpop.f32.mrf.mxu0
    %v4889 = vadd.f32 0.0, %v4888
    %v4890 = vpop.f32.mrf.mxu0
    %v4891 = vadd.f32 0.0, %v4890
    %4892 = vmatmul.bf16.gmra.mxu0 %v4336
    %v4893 = vpop.f32.mrf.mxu0
    %v4894 = vadd.f32 0.0, %v4893
    %v4895 = vpop.f32.mrf.mxu0
    %v4896 = vadd.f32 0.0, %v4895
    %4897 = vdwg.mxu0
    %4898 = vmatpush.bf16.msra.mxu0 %v4720
    %4899 = vmatpush.bf16.msra.mxu0 %v4719
    %4900 = vmatpush.bf16.msra.mxu0 %v4718
    %4901 = vmatpush.bf16.msra.mxu0 %v4717
    %4902 = vmatpush.bf16.msra.mxu0 %v4716
    %4903 = vmatpush.bf16.msra.mxu0 %v4715
    %4904 = vmatpush.bf16.msra.mxu0 %v4714
    %4905 = vmatpush.bf16.msra.mxu0 %v4713
    %4906 = vmatmul.bf16.gmra.mxu0 %v4274
    %v4907 = vpop.f32.mrf.mxu0
    %v4908 = vadd.f32 %v4859, %v4907
    %v4909 = vpop.f32.mrf.mxu0
    %v4910 = vadd.f32 %v4861, %v4909
    %4911 = vmatmul.bf16.gmra.mxu0 %v4283
    %v4912 = vpop.f32.mrf.mxu0
    %v4913 = vadd.f32 %v4864, %v4912
    %v4914 = vpop.f32.mrf.mxu0
    %v4915 = vadd.f32 %v4866, %v4914
    %4916 = vmatmul.bf16.gmra.mxu0 %v4292
    %v4917 = vpop.f32.mrf.mxu0
    %v4918 = vadd.f32 %v4869, %v4917
    %v4919 = vpop.f32.mrf.mxu0
    %v4920 = vadd.f32 %v4871, %v4919
    %4921 = vmatmul.bf16.gmra.mxu0 %v4301
    %v4922 = vpop.f32.mrf.mxu0
    %v4923 = vadd.f32 %v4874, %v4922
    %v4924 = vpop.f32.mrf.mxu0
    %v4925 = vadd.f32 %v4876, %v4924
    %4926 = vmatmul.bf16.gmra.mxu0 %v4310
    %v4927 = vpop.f32.mrf.mxu0
    %v4928 = vadd.f32 %v4879, %v4927
    %v4929 = vpop.f32.mrf.mxu0
    %v4930 = vadd.f32 %v4881, %v4929
    %4931 = vmatmul.bf16.gmra.mxu0 %v4319
    %v4932 = vpop.f32.mrf.mxu0
    %v4933 = vadd.f32 %v4884, %v4932
    %v4934 = vpop.f32.mrf.mxu0
    %v4935 = vadd.f32 %v4886, %v4934
    %4936 = vmatmul.bf16.gmra.mxu0 %v4328
    %v4937 = vpop.f32.mrf.mxu0
    %v4938 = vadd.f32 %v4889, %v4937
    %v4939 = vpop.f32.mrf.mxu0
    %v4940 = vadd.f32 %v4891, %v4939
    %4941 = vmatmul.bf16.gmra.mxu0 %v4337
    %v4942 = vpop.f32.mrf.mxu0
    %v4943 = vadd.f32 %v4894, %v4942
    %v4944 = vpop.f32.mrf.mxu0
    %v4945 = vadd.f32 %v4896, %v4944
    %4946 = vdwg.mxu0
    %4947 = vmatpush.bf16.msra.mxu0 %v4728
    %4948 = vmatpush.bf16.msra.mxu0 %v4727
    %4949 = vmatpush.bf16.msra.mxu0 %v4726
    %4950 = vmatpush.bf16.msra.mxu0 %v4725
    %4951 = vmatpush.bf16.msra.mxu0 %v4724
    %4952 = vmatpush.bf16.msra.mxu0 %v4723
    %4953 = vmatpush.bf16.msra.mxu0 %v4722
    %4954 = vmatpush.bf16.msra.mxu0 %v4721
    %4955 = vmatmul.bf16.gmra.mxu0 %v4275
    %v4956 = vpop.f32.mrf.mxu0
    %v4957 = vadd.f32 %v4908, %v4956
    %v4958 = vpop.f32.mrf.mxu0
    %v4959 = vadd.f32 %v4910, %v4958
    %4960 = vmatmul.bf16.gmra.mxu0 %v4284
    %v4961 = vpop.f32.mrf.mxu0
    %v4962 = vadd.f32 %v4913, %v4961
    %v4963 = vpop.f32.mrf.mxu0
    %v4964 = vadd.f32 %v4915, %v4963
    %4965 = vmatmul.bf16.gmra.mxu0 %v4293
    %v4966 = vpop.f32.mrf.mxu0
    %v4967 = vadd.f32 %v4918, %v4966
    %v4968 = vpop.f32.mrf.mxu0
    %v4969 = vadd.f32 %v4920, %v4968
    %4970 = vmatmul.bf16.gmra.mxu0 %v4302
    %v4971 = vpop.f32.mrf.mxu0
    %v4972 = vadd.f32 %v4923, %v4971
    %v4973 = vpop.f32.mrf.mxu0
    %v4974 = vadd.f32 %v4925, %v4973
    %4975 = vmatmul.bf16.gmra.mxu0 %v4311
    %v4976 = vpop.f32.mrf.mxu0
    %v4977 = vadd.f32 %v4928, %v4976
    %v4978 = vpop.f32.mrf.mxu0
    %v4979 = vadd.f32 %v4930, %v4978
    %4980 = vmatmul.bf16.gmra.mxu0 %v4320
    %v4981 = vpop.f32.mrf.mxu0
    %v4982 = vadd.f32 %v4933, %v4981
    %v4983 = vpop.f32.mrf.mxu0
    %v4984 = vadd.f32 %v4935, %v4983
    %4985 = vmatmul.bf16.gmra.mxu0 %v4329
    %v4986 = vpop.f32.mrf.mxu0
    %v4987 = vadd.f32 %v4938, %v4986
    %v4988 = vpop.f32.mrf.mxu0
    %v4989 = vadd.f32 %v4940, %v4988
    %4990 = vmatmul.bf16.gmra.mxu0 %v4338
    %v4991 = vpop.f32.mrf.mxu0
    %v4992 = vadd.f32 %v4943, %v4991
    %v4993 = vpop.f32.mrf.mxu0
    %v4994 = vadd.f32 %v4945, %v4993
    %4995 = vdwg.mxu0
    %4996 = vmatpush.bf16.msra.mxu0 %v4736
    %4997 = vmatpush.bf16.msra.mxu0 %v4735
    %4998 = vmatpush.bf16.msra.mxu0 %v4734
    %4999 = vmatpush.bf16.msra.mxu0 %v4733
    %5000 = vmatpush.bf16.msra.mxu0 %v4732
    %5001 = vmatpush.bf16.msra.mxu0 %v4731
    %5002 = vmatpush.bf16.msra.mxu0 %v4730
    %5003 = vmatpush.bf16.msra.mxu0 %v4729
    %5004 = vmatmul.bf16.gmra.mxu0 %v4276
    %v5005 = vpop.f32.mrf.mxu0
    %v5006 = vadd.f32 %v4957, %v5005
    %v5007 = vpop.f32.mrf.mxu0
    %v5008 = vadd.f32 %v4959, %v5007
    %5009 = vmatmul.bf16.gmra.mxu0 %v4285
    %v5010 = vpop.f32.mrf.mxu0
    %v5011 = vadd.f32 %v4962, %v5010
    %v5012 = vpop.f32.mrf.mxu0
    %v5013 = vadd.f32 %v4964, %v5012
    %5014 = vmatmul.bf16.gmra.mxu0 %v4294
    %v5015 = vpop.f32.mrf.mxu0
    %v5016 = vadd.f32 %v4967, %v5015
    %v5017 = vpop.f32.mrf.mxu0
    %v5018 = vadd.f32 %v4969, %v5017
    %5019 = vmatmul.bf16.gmra.mxu0 %v4303
    %v5020 = vpop.f32.mrf.mxu0
    %v5021 = vadd.f32 %v4972, %v5020
    %v5022 = vpop.f32.mrf.mxu0
    %v5023 = vadd.f32 %v4974, %v5022
    %5024 = vmatmul.bf16.gmra.mxu0 %v4312
    %v5025 = vpop.f32.mrf.mxu0
    %v5026 = vadd.f32 %v4977, %v5025
    %v5027 = vpop.f32.mrf.mxu0
    %v5028 = vadd.f32 %v4979, %v5027
    %5029 = vmatmul.bf16.gmra.mxu0 %v4321
    %v5030 = vpop.f32.mrf.mxu0
    %v5031 = vadd.f32 %v4982, %v5030
    %v5032 = vpop.f32.mrf.mxu0
    %v5033 = vadd.f32 %v4984, %v5032
    %5034 = vmatmul.bf16.gmra.mxu0 %v4330
    %v5035 = vpop.f32.mrf.mxu0
    %v5036 = vadd.f32 %v4987, %v5035
    %v5037 = vpop.f32.mrf.mxu0
    %v5038 = vadd.f32 %v4989, %v5037
    %5039 = vmatmul.bf16.gmra.mxu0 %v4339
    %v5040 = vpop.f32.mrf.mxu0
    %v5041 = vadd.f32 %v4992, %v5040
    %v5042 = vpop.f32.mrf.mxu0
    %v5043 = vadd.f32 %v4994, %v5042
    %5044 = vdwg.mxu0
    %5045 = vmatpush.bf16.msra.mxu0 %v4744
    %5046 = vmatpush.bf16.msra.mxu0 %v4743
    %5047 = vmatpush.bf16.msra.mxu0 %v4742
    %5048 = vmatpush.bf16.msra.mxu0 %v4741
    %5049 = vmatpush.bf16.msra.mxu0 %v4740
    %5050 = vmatpush.bf16.msra.mxu0 %v4739
    %5051 = vmatpush.bf16.msra.mxu0 %v4738
    %5052 = vmatpush.bf16.msra.mxu0 %v4737
    %5053 = vmatmul.bf16.gmra.mxu0 %v4277
    %v5054 = vpop.f32.mrf.mxu0
    %v5055 = vadd.f32 %v5006, %v5054
    %v5056 = vpop.f32.mrf.mxu0
    %v5057 = vadd.f32 %v5008, %v5056
    %5058 = vmatmul.bf16.gmra.mxu0 %v4286
    %v5059 = vpop.f32.mrf.mxu0
    %v5060 = vadd.f32 %v5011, %v5059
    %v5061 = vpop.f32.mrf.mxu0
    %v5062 = vadd.f32 %v5013, %v5061
    %5063 = vmatmul.bf16.gmra.mxu0 %v4295
    %v5064 = vpop.f32.mrf.mxu0
    %v5065 = vadd.f32 %v5016, %v5064
    %v5066 = vpop.f32.mrf.mxu0
    %v5067 = vadd.f32 %v5018, %v5066
    %5068 = vmatmul.bf16.gmra.mxu0 %v4304
    %v5069 = vpop.f32.mrf.mxu0
    %v5070 = vadd.f32 %v5021, %v5069
    %v5071 = vpop.f32.mrf.mxu0
    %v5072 = vadd.f32 %v5023, %v5071
    %5073 = vmatmul.bf16.gmra.mxu0 %v4313
    %v5074 = vpop.f32.mrf.mxu0
    %v5075 = vadd.f32 %v5026, %v5074
    %v5076 = vpop.f32.mrf.mxu0
    %v5077 = vadd.f32 %v5028, %v5076
    %5078 = vmatmul.bf16.gmra.mxu0 %v4322
    %v5079 = vpop.f32.mrf.mxu0
    %v5080 = vadd.f32 %v5031, %v5079
    %v5081 = vpop.f32.mrf.mxu0
    %v5082 = vadd.f32 %v5033, %v5081
    %5083 = vmatmul.bf16.gmra.mxu0 %v4331
    %v5084 = vpop.f32.mrf.mxu0
    %v5085 = vadd.f32 %v5036, %v5084
    %v5086 = vpop.f32.mrf.mxu0
    %v5087 = vadd.f32 %v5038, %v5086
    %5088 = vmatmul.bf16.gmra.mxu0 %v4340
    %v5089 = vpop.f32.mrf.mxu0
    %v5090 = vadd.f32 %v5041, %v5089
    %v5091 = vpop.f32.mrf.mxu0
    %v5092 = vadd.f32 %v5043, %v5091
    %5093 = vdwg.mxu0
    %5094 = vmatpush.bf16.msra.mxu0 %v4752
    %5095 = vmatpush.bf16.msra.mxu0 %v4751
    %5096 = vmatpush.bf16.msra.mxu0 %v4750
    %5097 = vmatpush.bf16.msra.mxu0 %v4749
    %5098 = vmatpush.bf16.msra.mxu0 %v4748
    %5099 = vmatpush.bf16.msra.mxu0 %v4747
    %5100 = vmatpush.bf16.msra.mxu0 %v4746
    %5101 = vmatpush.bf16.msra.mxu0 %v4745
    %5102 = vmatmul.bf16.gmra.mxu0 %v4278
    %v5103 = vpop.f32.mrf.mxu0
    %v5104 = vadd.f32 %v5055, %v5103
    %v5105 = vpop.f32.mrf.mxu0
    %v5106 = vadd.f32 %v5057, %v5105
    %5107 = vmatmul.bf16.gmra.mxu0 %v4287
    %v5108 = vpop.f32.mrf.mxu0
    %v5109 = vadd.f32 %v5060, %v5108
    %v5110 = vpop.f32.mrf.mxu0
    %v5111 = vadd.f32 %v5062, %v5110
    %5112 = vmatmul.bf16.gmra.mxu0 %v4296
    %v5113 = vpop.f32.mrf.mxu0
    %v5114 = vadd.f32 %v5065, %v5113
    %v5115 = vpop.f32.mrf.mxu0
    %v5116 = vadd.f32 %v5067, %v5115
    %5117 = vmatmul.bf16.gmra.mxu0 %v4305
    %v5118 = vpop.f32.mrf.mxu0
    %v5119 = vadd.f32 %v5070, %v5118
    %v5120 = vpop.f32.mrf.mxu0
    %v5121 = vadd.f32 %v5072, %v5120
    %5122 = vmatmul.bf16.gmra.mxu0 %v4314
    %v5123 = vpop.f32.mrf.mxu0
    %v5124 = vadd.f32 %v5075, %v5123
    %v5125 = vpop.f32.mrf.mxu0
    %v5126 = vadd.f32 %v5077, %v5125
    %5127 = vmatmul.bf16.gmra.mxu0 %v4323
    %v5128 = vpop.f32.mrf.mxu0
    %v5129 = vadd.f32 %v5080, %v5128
    %v5130 = vpop.f32.mrf.mxu0
    %v5131 = vadd.f32 %v5082, %v5130
    %5132 = vmatmul.bf16.gmra.mxu0 %v4332
    %v5133 = vpop.f32.mrf.mxu0
    %v5134 = vadd.f32 %v5085, %v5133
    %v5135 = vpop.f32.mrf.mxu0
    %v5136 = vadd.f32 %v5087, %v5135
    %5137 = vmatmul.bf16.gmra.mxu0 %v4341
    %v5138 = vpop.f32.mrf.mxu0
    %v5139 = vadd.f32 %v5090, %v5138
    %v5140 = vpop.f32.mrf.mxu0
    %v5141 = vadd.f32 %v5092, %v5140
    %5142 = vdwg.mxu0
    %5143 = vmatpush.bf16.msra.mxu0 %v4760
    %5144 = vmatpush.bf16.msra.mxu0 %v4759
    %5145 = vmatpush.bf16.msra.mxu0 %v4758
    %5146 = vmatpush.bf16.msra.mxu0 %v4757
    %5147 = vmatpush.bf16.msra.mxu0 %v4756
    %5148 = vmatpush.bf16.msra.mxu0 %v4755
    %5149 = vmatpush.bf16.msra.mxu0 %v4754
    %5150 = vmatpush.bf16.msra.mxu0 %v4753
    %5151 = vmatmul.bf16.gmra.mxu0 %v4279
    %v5152 = vpop.f32.mrf.mxu0
    %v5153 = vadd.f32 %v5104, %v5152
    %v5154 = vpop.f32.mrf.mxu0
    %v5155 = vadd.f32 %v5106, %v5154
    %5156 = vmatmul.bf16.gmra.mxu0 %v4288
    %v5157 = vpop.f32.mrf.mxu0
    %v5158 = vadd.f32 %v5109, %v5157
    %v5159 = vpop.f32.mrf.mxu0
    %v5160 = vadd.f32 %v5111, %v5159
    %5161 = vmatmul.bf16.gmra.mxu0 %v4297
    %v5162 = vpop.f32.mrf.mxu0
    %v5163 = vadd.f32 %v5114, %v5162
    %v5164 = vpop.f32.mrf.mxu0
    %v5165 = vadd.f32 %v5116, %v5164
    %5166 = vmatmul.bf16.gmra.mxu0 %v4306
    %v5167 = vpop.f32.mrf.mxu0
    %v5168 = vadd.f32 %v5119, %v5167
    %v5169 = vpop.f32.mrf.mxu0
    %v5170 = vadd.f32 %v5121, %v5169
    %5171 = vmatmul.bf16.gmra.mxu0 %v4315
    %v5172 = vpop.f32.mrf.mxu0
    %v5173 = vadd.f32 %v5124, %v5172
    %v5174 = vpop.f32.mrf.mxu0
    %v5175 = vadd.f32 %v5126, %v5174
    %5176 = vmatmul.bf16.gmra.mxu0 %v4324
    %v5177 = vpop.f32.mrf.mxu0
    %v5178 = vadd.f32 %v5129, %v5177
    %v5179 = vpop.f32.mrf.mxu0
    %v5180 = vadd.f32 %v5131, %v5179
    %5181 = vmatmul.bf16.gmra.mxu0 %v4333
    %v5182 = vpop.f32.mrf.mxu0
    %v5183 = vadd.f32 %v5134, %v5182
    %v5184 = vpop.f32.mrf.mxu0
    %v5185 = vadd.f32 %v5136, %v5184
    %5186 = vmatmul.bf16.gmra.mxu0 %v4342
    %v5187 = vpop.f32.mrf.mxu0
    %v5188 = vadd.f32 %v5139, %v5187
    %v5189 = vpop.f32.mrf.mxu0
    %v5190 = vadd.f32 %v5141, %v5189
    %5191 = vdwg.mxu0
    %5192 = vmatpush.bf16.msra.mxu0 %v4768
    %5193 = vmatpush.bf16.msra.mxu0 %v4767
    %5194 = vmatpush.bf16.msra.mxu0 %v4766
    %5195 = vmatpush.bf16.msra.mxu0 %v4765
    %5196 = vmatpush.bf16.msra.mxu0 %v4764
    %5197 = vmatpush.bf16.msra.mxu0 %v4763
    %5198 = vmatpush.bf16.msra.mxu0 %v4762
    %5199 = vmatpush.bf16.msra.mxu0 %v4761
    %5200 = vmatmul.bf16.gmra.mxu0 %v4280
    %v5201 = vpop.f32.mrf.mxu0
    %v5202 = vadd.f32 %v5153, %v5201
    %v5203 = vpop.f32.mrf.mxu0
    %v5204 = vadd.f32 %v5155, %v5203
    %5205 = vmatmul.bf16.gmra.mxu0 %v4289
    %v5206 = vpop.f32.mrf.mxu0
    %v5207 = vadd.f32 %v5158, %v5206
    %v5208 = vpop.f32.mrf.mxu0
    %v5209 = vadd.f32 %v5160, %v5208
    %5210 = vmatmul.bf16.gmra.mxu0 %v4298
    %v5211 = vpop.f32.mrf.mxu0
    %v5212 = vadd.f32 %v5163, %v5211
    %v5213 = vpop.f32.mrf.mxu0
    %v5214 = vadd.f32 %v5165, %v5213
    %5215 = vmatmul.bf16.gmra.mxu0 %v4307
    %v5216 = vpop.f32.mrf.mxu0
    %v5217 = vadd.f32 %v5168, %v5216
    %v5218 = vpop.f32.mrf.mxu0
    %v5219 = vadd.f32 %v5170, %v5218
    %5220 = vmatmul.bf16.gmra.mxu0 %v4316
    %v5221 = vpop.f32.mrf.mxu0
    %v5222 = vadd.f32 %v5173, %v5221
    %v5223 = vpop.f32.mrf.mxu0
    %v5224 = vadd.f32 %v5175, %v5223
    %5225 = vmatmul.bf16.gmra.mxu0 %v4325
    %v5226 = vpop.f32.mrf.mxu0
    %v5227 = vadd.f32 %v5178, %v5226
    %v5228 = vpop.f32.mrf.mxu0
    %v5229 = vadd.f32 %v5180, %v5228
    %5230 = vmatmul.bf16.gmra.mxu0 %v4334
    %v5231 = vpop.f32.mrf.mxu0
    %v5232 = vadd.f32 %v5183, %v5231
    %v5233 = vpop.f32.mrf.mxu0
    %v5234 = vadd.f32 %v5185, %v5233
    %5235 = vmatmul.bf16.gmra.mxu0 %v4343
    %v5236 = vpop.f32.mrf.mxu0
    %v5237 = vadd.f32 %v5188, %v5236
    %v5238 = vpop.f32.mrf.mxu0
    %v5239 = vadd.f32 %v5190, %v5238
    %5240 = vdwg.mxu0
    %5241 = vmatpush.bf16.msra.mxu0 %v4776
    %5242 = vmatpush.bf16.msra.mxu0 %v4775
    %5243 = vmatpush.bf16.msra.mxu0 %v4774
    %5244 = vmatpush.bf16.msra.mxu0 %v4773
    %5245 = vmatpush.bf16.msra.mxu0 %v4772
    %5246 = vmatpush.bf16.msra.mxu0 %v4771
    %5247 = vmatpush.bf16.msra.mxu0 %v4770
    %5248 = vmatpush.bf16.msra.mxu0 %v4769
    %5249 = vmatmul.bf16.gmra.mxu0 %v4281
    %v5250 = vpop.f32.mrf.mxu0
    %v5251 = vadd.f32 %v5202, %v5250
    %v5252 = vpop.f32.mrf.mxu0
    %v5253 = vadd.f32 %v5204, %v5252
    %5254 = vmatmul.bf16.gmra.mxu0 %v4290
    %v5255 = vpop.f32.mrf.mxu0
    %v5256 = vadd.f32 %v5207, %v5255
    %v5257 = vpop.f32.mrf.mxu0
    %v5258 = vadd.f32 %v5209, %v5257
    %5259 = vmatmul.bf16.gmra.mxu0 %v4299
    %v5260 = vpop.f32.mrf.mxu0
    %v5261 = vadd.f32 %v5212, %v5260
    %v5262 = vpop.f32.mrf.mxu0
    %v5263 = vadd.f32 %v5214, %v5262
    %5264 = vmatmul.bf16.gmra.mxu0 %v4308
    %v5265 = vpop.f32.mrf.mxu0
    %v5266 = vadd.f32 %v5217, %v5265
    %v5267 = vpop.f32.mrf.mxu0
    %v5268 = vadd.f32 %v5219, %v5267
    %5269 = vmatmul.bf16.gmra.mxu0 %v4317
    %v5270 = vpop.f32.mrf.mxu0
    %v5271 = vadd.f32 %v5222, %v5270
    %v5272 = vpop.f32.mrf.mxu0
    %v5273 = vadd.f32 %v5224, %v5272
    %5274 = vmatmul.bf16.gmra.mxu0 %v4326
    %v5275 = vpop.f32.mrf.mxu0
    %v5276 = vadd.f32 %v5227, %v5275
    %v5277 = vpop.f32.mrf.mxu0
    %v5278 = vadd.f32 %v5229, %v5277
    %5279 = vmatmul.bf16.gmra.mxu0 %v4335
    %v5280 = vpop.f32.mrf.mxu0
    %v5281 = vadd.f32 %v5232, %v5280
    %v5282 = vpop.f32.mrf.mxu0
    %v5283 = vadd.f32 %v5234, %v5282
    %5284 = vmatmul.bf16.gmra.mxu0 %v4344
    %v5285 = vpop.f32.mrf.mxu0
    %v5286 = vadd.f32 %v5237, %v5285
    %v5287 = vpop.f32.mrf.mxu0
    %v5288 = vadd.f32 %v5239, %v5287
    %5289 = vdwg.mxu0
    %v5290 = vadd.f32 %v5251, %v5253
    %v5291 = vadd.f32 %v5290, %v5256
    %v5292 = vadd.f32 %v5291, %v5258
    %v5293 = vadd.f32 %v5292, %v5261
    %v5294 = vadd.f32 %v5293, %v5263
    %v5295 = vadd.f32 %v5294, %v5266
    %v5296 = vadd.f32 %v5295, %v5268
    %v5297 = vrot.slane %v5296, 4
    %v5298 = vadd.f32 %v5296, %v5297
    %v5299 = vrot.slane %v5298, 2
    %v5300 = vadd.f32 %v5298, %v5299
    %v5301 = vrot.slane %v5300, 1
    %v5302 = vadd.f32 %v5300, %v5301
    %v5303 = vadd.f32 %v5271, %v5273
    %v5304 = vadd.f32 %v5303, %v5276
    %v5305 = vadd.f32 %v5304, %v5278
    %v5306 = vadd.f32 %v5305, %v5281
    %v5307 = vadd.f32 %v5306, %v5283
    %v5308 = vadd.f32 %v5307, %v5286
    %v5309 = vadd.f32 %v5308, %v5288
    %v5310 = vrot.slane %v5309, 4
    %v5311 = vadd.f32 %v5309, %v5310
    %v5312 = vrot.slane %v5311, 2
    %v5313 = vadd.f32 %v5311, %v5312
    %v5314 = vrot.slane %v5313, 1
    %v5315 = vadd.f32 %v5313, %v5314
    %v5316 = vrcp.pop 64.0
    %v5317 = vmul.f32 64.0, %v5316
    %v5318 = vsub.f32 1.0, %v5317
    %v5319 = vmul.f32 %v5316, %v5318
    %v5320 = vadd.f32 %v5316, %v5319
    %vm5321 = vweird.f32 %v5316
    %v5322 = vsel %vm5321, %v5316, %v5320
    %v5323 = vmul.f32 %v5302, %v5322
    %v5324 = vmul.f32 %v5315, %v5322
    %v5325 = vpack.c.bf16 %v5323, %v5323
    %v5326 = vpack.c.bf16 %v5324, %v5324
    %v5327 = vld [vmem:[%s3] sm:$0xf]
    %v5328 = vld [vmem:[%s3 + $0x4] sm:$0xf]
    %v5329 = vld [vmem:[%s3 + $0x8] sm:$0xf]
    %v5330 = vld [vmem:[%s3 + $0xc] sm:$0xf]
    %v5331 = vld [vmem:[%s3 + $0x10] sm:$0xf]
    %v5332 = vld [vmem:[%s3 + $0x14] sm:$0xf]
    %v5333 = vld [vmem:[%s3 + $0x18] sm:$0xf]
    %v5334 = vld [vmem:[%s3 + $0x1c] sm:$0xf]
    %v5335 = vld [vmem:[%s3 + $0x20] sm:$0xf]
    %v5336 = vld [vmem:[%s3 + $0x24] sm:$0xf]
    %v5337 = vld [vmem:[%s3 + $0x28] sm:$0xf]
    %v5338 = vld [vmem:[%s3 + $0x2c] sm:$0xf]
    %v5339 = vld [vmem:[%s3 + $0x30] sm:$0xf]
    %v5340 = vld [vmem:[%s3 + $0x34] sm:$0xf]
    %v5341 = vld [vmem:[%s3 + $0x38] sm:$0xf]
    %v5342 = vld [vmem:[%s3 + $0x3c] sm:$0xf]
    %v5345 = vunpack.c.l.b16 %v5325
    %v5346 = vunpack.c.l.b16 %v5326
    %vm5347 = vcmask 1041409
    %v5348 = vsel %vm5347, %v5346, %v5345
    %v5349 = vpack.c.b16 %v5348, %v5348
    %v5367 = vunpack.c.l.b16 %v5327
    %v5368 = vunpack.c.l.b16 %v5328
    %v5369 = vunpack.c.l.b16 %v5329
    %v5370 = vunpack.c.l.b16 %v5330
    %v5371 = vunpack.c.l.b16 %v5331
    %v5372 = vunpack.c.l.b16 %v5332
    %v5373 = vunpack.c.l.b16 %v5333
    %v5374 = vunpack.c.l.b16 %v5334
    %v5375 = vunpack.c.l.b16 %v5335
    %v5376 = vunpack.c.l.b16 %v5336
    %v5377 = vunpack.c.l.b16 %v5337
    %v5378 = vunpack.c.l.b16 %v5338
    %v5379 = vunpack.c.l.b16 %v5339
    %v5380 = vunpack.c.l.b16 %v5340
    %v5381 = vunpack.c.l.b16 %v5341
    %v5382 = vunpack.c.l.b16 %v5342
    %v5383 = vpack.c.b16 %v5368, %v5367
    %v5384 = vpack.c.b16 %v5370, %v5369
    %v5385 = vpack.c.b16 %v5372, %v5371
    %v5386 = vpack.c.b16 %v5374, %v5373
    %v5387 = vpack.c.b16 %v5376, %v5375
    %v5388 = vpack.c.b16 %v5378, %v5377
    %v5389 = vpack.c.b16 %v5380, %v5379
    %v5390 = vpack.c.b16 %v5382, %v5381
    %5399 = vmatpush.bf16.msra.mxu0 %v5390
    %5400 = vmatpush.bf16.msra.mxu0 %v5389
    %5401 = vmatpush.bf16.msra.mxu0 %v5388
    %5402 = vmatpush.bf16.msra.mxu0 %v5387
    %5403 = vmatpush.bf16.msra.mxu0 %v5386
    %5404 = vmatpush.bf16.msra.mxu0 %v5385
    %5405 = vmatpush.bf16.msra.mxu0 %v5384
    %5406 = vmatpush.bf16.msra.mxu0 %v5383
    %5407 = vmatmul.bf16.gmra.mxu0 %v5349
    %v5408 = vpop.f32.mrf.mxu0
    %v5409 = vadd.f32 0.0, %v5408
    %v5410 = vpop.f32.mrf.mxu0
    %5411 = vdwg.mxu0
    %v5412 = vmax.f32 %v5409, 0.0
    %v5413 = vpack.c.bf16 %v5412, %v5412
    %v5414 = vld [vmem:[%s4] sm:$0xf]
    %v5415 = vld [vmem:[%s4 + $0x4] sm:$0xf]
    %v5416 = vld [vmem:[%s4 + $0x8] sm:$0xf]
    %v5417 = vld [vmem:[%s4 + $0xc] sm:$0xf]
    %v5418 = vld [vmem:[%s4 + $0x10] sm:$0xf]
    %v5419 = vld [vmem:[%s4 + $0x14] sm:$0xf]
    %v5420 = vld [vmem:[%s4 + $0x18] sm:$0xf]
    %v5421 = vld [vmem:[%s4 + $0x1c] sm:$0xf]
    %v5422 = vld [vmem:[%s4 + $0x20] sm:$0xf]
    %v5423 = vld [vmem:[%s4 + $0x24] sm:$0xf]
    %v5424 = vld [vmem:[%s4 + $0x28] sm:$0xf]
    %v5425 = vld [vmem:[%s4 + $0x2c] sm:$0xf]
    %v5426 = vld [vmem:[%s4 + $0x30] sm:$0xf]
    %v5427 = vld [vmem:[%s4 + $0x34] sm:$0xf]
    %v5428 = vld [vmem:[%s4 + $0x38] sm:$0xf]
    %v5429 = vld [vmem:[%s4 + $0x3c] sm:$0xf]
    %v5446 = vunpack.c.l.b16 %v5414
    %v5447 = vunpack.c.l.b16 %v5415
    %v5448 = vunpack.c.l.b16 %v5416
    %v5449 = vunpack.c.l.b16 %v5417
    %v5450 = vunpack.c.l.b16 %v5418
    %v5451 = vunpack.c.l.b16 %v5419
    %v5452 = vunpack.c.l.b16 %v5420
    %v5453 = vunpack.c.l.b16 %v5421
    %v5454 = vunpack.c.l.b16 %v5422
    %v5455 = vunpack.c.l.b16 %v5423
    %v5456 = vunpack.c.l.b16 %v5424
    %v5457 = vunpack.c.l.b16 %v5425
    %v5458 = vunpack.c.l.b16 %v5426
    %v5459 = vunpack.c.l.b16 %v5427
    %v5460 = vunpack.c.l.b16 %v5428
    %v5461 = vunpack.c.l.b16 %v5429
    %v5462 = vpack.c.b16 %v5447, %v5446
    %v5463 = vpack.c.b16 %v5449, %v5448
    %v5464 = vpack.c.b16 %v5451, %v5450
    %v5465 = vpack.c.b16 %v5453, %v5452
    %v5466 = vpack.c.b16 %v5455, %v5454
    %v5467 = vpack.c.b16 %v5457, %v5456
    %v5468 = vpack.c.b16 %v5459, %v5458
    %v5469 = vpack.c.b16 %v5461, %v5460
    %5478 = vmatpush.bf16.msra.mxu0 %v5469
    %5479 = vmatpush.bf16.msra.mxu0 %v5468
    %5480 = vmatpush.bf16.msra.mxu0 %v5467
    %5481 = vmatpush.bf16.msra.mxu0 %v5466
    %5482 = vmatpush.bf16.msra.mxu0 %v5465
    %5483 = vmatpush.bf16.msra.mxu0 %v5464
    %5484 = vmatpush.bf16.msra.mxu0 %v5463
    %5485 = vmatpush.bf16.msra.mxu0 %v5462
    %5486 = vmatmul.bf16.gmra.mxu0 %v5413
    %v5487 = vpop.f32.mrf.mxu0
    %v5488 = vadd.f32 0.0, %v5487
    %v5489 = vpop.f32.mrf.mxu0
    %5490 = vdwg.mxu0
    %v5491 = vsub.f32 0.0, %v5488
    %v5492 = vmul.f32 %v5491, 1.442695
    %v5493 = vpow.pop %v5492
    %v5494 = vadd.f32 %v5493, 1.0
    %v5495 = vrcp.pop %v5494
    %v5496 = vmul.f32 %v5494, %v5495
    %v5497 = vsub.f32 1.0, %v5496
    %v5498 = vmul.f32 %v5495, %v5497
    %v5499 = vadd.f32 %v5495, %v5498
    %vm5500 = vweird.f32 %v5494
    %vm5501 = vweird.f32 %v5495
    %vm5502 = vmor %vm5500, %vm5501
    %v5503 = vsel %vm5502, %v5495, %v5499
    %v5504 = vand.u32 2147483647, %v5494
    %vm5505 = vcmp.eq.f32.partialorder %v5504, 8.507059e+37
    %v5506 = vand.u32 %v5494, 2147483648
    %v5507 = vor.u32 1.1754944e-38, %v5506
    %v5508 = vsel %vm5505, %v5507, %v5503
    %v5509 = vmul.f32 1.0, %v5508
    %v5511 = vrot.slane %v5509, 1
    %v5512 = vperm.slane %v5509, 0
    %v5513 = vperm.slane %v5511, 0
    %v5516 = vmul.f32 %v5251, %v5512
    %v5517 = vmul.f32 %v5253, %v5512
    %v5518 = vmul.f32 %v5256, %v5512
    %v5519 = vmul.f32 %v5258, %v5512
    %v5520 = vmul.f32 %v5261, %v5512
    %v5521 = vmul.f32 %v5263, %v5512
    %v5522 = vmul.f32 %v5266, %v5512
    %v5523 = vmul.f32 %v5268, %v5512
    %v5524 = vmul.f32 %v5271, %v5513
    %v5525 = vmul.f32 %v5273, %v5513
    %v5526 = vmul.f32 %v5276, %v5513
    %v5527 = vmul.f32 %v5278, %v5513
    %v5528 = vmul.f32 %v5281, %v5513
    %v5529 = vmul.f32 %v5283, %v5513
    %v5530 = vmul.f32 %v5286, %v5513
    %v5531 = vmul.f32 %v5288, %v5513
    %v5532 = vld [vmem:[%s198 + $0x1] sm:$0xff]
    %v5533 = vld [vmem:[%s198 + $0x11] sm:$0xff]
    %v5534 = vld [vmem:[%s198 + $0x21] sm:$0xff]
    %v5535 = vld [vmem:[%s198 + $0x31] sm:$0xff]
    %v5536 = vld [vmem:[%s198 + $0x41] sm:$0xff]
    %v5537 = vld [vmem:[%s198 + $0x51] sm:$0xff]
    %v5538 = vld [vmem:[%s198 + $0x61] sm:$0xff]
    %v5539 = vld [vmem:[%s198 + $0x71] sm:$0xff]
    %v5540 = vld [vmem:[%s198 + $0xa1] sm:$0xff]
    %v5541 = vld [vmem:[%s198 + $0xb1] sm:$0xff]
    %v5542 = vld [vmem:[%s198 + $0xc1] sm:$0xff]
    %v5543 = vld [vmem:[%s198 + $0xd1] sm:$0xff]
    %v5544 = vld [vmem:[%s198 + $0xe1] sm:$0xff]
    %v5545 = vld [vmem:[%s198 + $0xf1] sm:$0xff]
    %v5546 = vld [vmem:[%s198 + $0x101] sm:$0xff]
    %v5547 = vld [vmem:[%s198 + $0x111] sm:$0xff]
    %5548 = vrot.lane.b32.xlu0 %v5516, 64
    %v5549 = vpop.permute.xlu0 %5548
    %5550 = vrot.lane.b32.xlu0 %v5517, 64
    %v5551 = vpop.permute.xlu0 %5550
    %5552 = vrot.lane.b32.xlu0 %v5518, 64
    %v5553 = vpop.permute.xlu0 %5552
    %5554 = vrot.lane.b32.xlu0 %v5519, 64
    %v5555 = vpop.permute.xlu0 %5554
    %5556 = vrot.lane.b32.xlu0 %v5520, 64
    %v5557 = vpop.permute.xlu0 %5556
    %5558 = vrot.lane.b32.xlu0 %v5521, 64
    %v5559 = vpop.permute.xlu0 %5558
    %5560 = vrot.lane.b32.xlu0 %v5522, 64
    %v5561 = vpop.permute.xlu0 %5560
    %5562 = vrot.lane.b32.xlu0 %v5523, 64
    %v5563 = vpop.permute.xlu0 %5562
    %5564 = vrot.lane.b32.xlu0 %v5524, 64
    %v5565 = vpop.permute.xlu0 %5564
    %5566 = vrot.lane.b32.xlu0 %v5525, 64
    %v5567 = vpop.permute.xlu0 %5566
    %5568 = vrot.lane.b32.xlu0 %v5526, 64
    %v5569 = vpop.permute.xlu0 %5568
    %5570 = vrot.lane.b32.xlu0 %v5527, 64
    %v5571 = vpop.permute.xlu0 %5570
    %5572 = vrot.lane.b32.xlu0 %v5528, 64
    %v5573 = vpop.permute.xlu0 %5572
    %5574 = vrot.lane.b32.xlu0 %v5529, 64
    %v5575 = vpop.permute.xlu0 %5574
    %5576 = vrot.lane.b32.xlu0 %v5530, 64
    %v5577 = vpop.permute.xlu0 %5576
    %5578 = vrot.lane.b32.xlu0 %v5531, 64
    %v5579 = vpop.permute.xlu0 %5578
    %v5580 = vmul.f32 %v5516, %v5532
    %v5581 = vmul.f32 %v5517, %v5533
    %v5582 = vmul.f32 %v5518, %v5534
    %v5583 = vmul.f32 %v5519, %v5535
    %v5584 = vmul.f32 %v5520, %v5536
    %v5585 = vmul.f32 %v5521, %v5537
    %v5586 = vmul.f32 %v5522, %v5538
    %v5587 = vmul.f32 %v5523, %v5539
    %v5588 = vmul.f32 %v5524, %v5540
    %v5589 = vmul.f32 %v5525, %v5541
    %v5590 = vmul.f32 %v5526, %v5542
    %v5591 = vmul.f32 %v5527, %v5543
    %v5592 = vmul.f32 %v5528, %v5544
    %v5593 = vmul.f32 %v5529, %v5545
    %v5594 = vmul.f32 %v5530, %v5546
    %v5595 = vmul.f32 %v5531, %v5547
    %v5596 = vadd.f32 %v5580, %v5549
    %v5597 = vadd.f32 %v5581, %v5551
    %v5598 = vadd.f32 %v5582, %v5553
    %v5599 = vadd.f32 %v5583, %v5555
    %v5600 = vadd.f32 %v5584, %v5557
    %v5601 = vadd.f32 %v5585, %v5559
    %v5602 = vadd.f32 %v5586, %v5561
    %v5603 = vadd.f32 %v5587, %v5563
    %v5604 = vadd.f32 %v5588, %v5565
    %v5605 = vadd.f32 %v5589, %v5567
    %v5606 = vadd.f32 %v5590, %v5569
    %v5607 = vadd.f32 %v5591, %v5571
    %v5608 = vadd.f32 %v5592, %v5573
    %v5609 = vadd.f32 %v5593, %v5575
    %v5610 = vadd.f32 %v5594, %v5577
    %v5611 = vadd.f32 %v5595, %v5579
    %5612 = vst [vmem:[#allocation9] sm:$0xff] %v5596
    %5613 = vst [vmem:[#allocation9 + $0x8] sm:$0xff] %v5597
    %5614 = vst [vmem:[#allocation9 + $0x10] sm:$0xff] %v5598
    %5615 = vst [vmem:[#allocation9 + $0x18] sm:$0xff] %v5599
    %5616 = vst [vmem:[#allocation9 + $0x20] sm:$0xff] %v5600
    %5617 = vst [vmem:[#allocation9 + $0x28] sm:$0xff] %v5601
    %5618 = vst [vmem:[#allocation9 + $0x30] sm:$0xff] %v5602
    %5619 = vst [vmem:[#allocation9 + $0x38] sm:$0xff] %v5603
    %5620 = vst [vmem:[#allocation9 + $0x40] sm:$0xff] %v5604
    %5621 = vst [vmem:[#allocation9 + $0x48] sm:$0xff] %v5605
    %5622 = vst [vmem:[#allocation9 + $0x50] sm:$0xff] %v5606
    %5623 = vst [vmem:[#allocation9 + $0x58] sm:$0xff] %v5607
    %5624 = vst [vmem:[#allocation9 + $0x60] sm:$0xff] %v5608
    %5625 = vst [vmem:[#allocation9 + $0x68] sm:$0xff] %v5609
    %5626 = vst [vmem:[#allocation9 + $0x70] sm:$0xff] %v5610
    %5627 = vst [vmem:[#allocation9 + $0x78] sm:$0xff] %v5611
    // Predicated region
    $region30: #{tpu_custom_call.1} parent=1 // pred_check
      _
    $region31: #{tpu_custom_call.1} parent=1 // pred_check_branch
      %5629 = sbr.rel (0) target = $region33
    $region32: #{tpu_custom_call.1} parent=1 // pred_region
      %5631 = vsyncadd [#allocation6], 0
      %s5632 = sshll.u32 [#allocation9], 4
      %s5633 = int_to_ptr.vmem [resolvable:$true] %s5632
      %s5634 = sshll.u32 %s5, 4
      %s5635 = int_to_ptr.hbm [resolvable:$true] %s5634
      %5640 = dma.vmem_to_hbm [thread:$0]  %s5633, 2048, %s5635, [#allocation6], 128, 128, 8
    $region33: #{tpu_custom_call.1} parent=1 // pred_fallthru
      _
    // Predicated region
    $region34: #{tpu_custom_call.1} parent=1 // pred_check
      _
    $region35: #{tpu_custom_call.1} parent=1 // pred_check_branch
      %5642 = sbr.rel (0) target = $region37
    $region36: #{tpu_custom_call.1} parent=1 // pred_region
      %5644 = dma.done [#allocation6], 2048
    $region37: #{tpu_custom_call.1} parent=1 // pred_fallthru
      _
    %5645 = vsyncpa [#allocation5], 1
    %5646 = vsyncpa [#allocation8], 1
    %5647 = vsyncpa [#allocation6], 1

</llo_original>
